<compile_context>
chip_gen: v7x
topology: tpu7x:2x2x1
jax: 0.10.0
libtpu: 0.0.40
codegen_flags: <defaults>
</compile_context>

<pallas_src>
import math
import functools

import jax
import jax.numpy as jnp
from jax import lax
from jax.experimental import pallas as pl
from jax.experimental.pallas import tpu as pltpu


_MAX_BT = 8               # cap on batch elements per grid step (bounds unrolling)
_SCORE_BUDGET = 8 << 20   # f32 score/prob temporaries allowed per kv step


def _mha_kernel(q_ref, k_ref, v_ref, mask_ref,
                wqt_ref, wkt_ref, wvt_ref, wp_ref, bp_ref,
                o_ref,
                qfm_scr, m_scr, l_scr, acc_scr,
                *, num_heads, head_dim, bt, nq, tkv):
    """One grid step: one Bt-batch block x one Nkv tile (online softmax)."""
    H, hd = num_heads, head_dim
    D = H * hd
    j = pl.program_id(1)
    nt = (((1,), (1,)), ((), ()))   # contract dim 1 of both operands (A @ B^T)

    # ---- once per batch block (first kv step): Q projection + state init ----
    @pl.when(j == 0)
    def _init():
        xq = q_ref[...].reshape(bt * nq, D)                        # (Bt*Nq, D) bf16
        # Feature-major projection -> (D, Bt*Nq); the attention scale is folded
        # into Wq^T by the wrapper.  Head split = contiguous sublane reshape.
        qt = lax.dot_general(wqt_ref[...], xq, nt,
                             preferred_element_type=jnp.float32)
        qfm_scr[...] = qt.reshape(H, hd, bt * nq).astype(jnp.bfloat16)
        m_scr[...] = jnp.full_like(m_scr, -jnp.inf)
        l_scr[...] = jnp.zeros_like(l_scr)
        acc_scr[...] = jnp.zeros_like(acc_scr)

    # ---- every kv step: project this K/V tile (feature-major, flattened) ----
    xk = k_ref[...].reshape(bt * tkv, D)
    xv = v_ref[...].reshape(bt * tkv, D)
    kt = lax.dot_general(wkt_ref[...], xk, nt,
                         preferred_element_type=jnp.float32)       # (D, Bt*Tkv)
    vt = lax.dot_general(wvt_ref[...], xv, nt,
                         preferred_element_type=jnp.float32)       # (D, Bt*Tkv)
    kt3 = kt.reshape(H, hd, bt * tkv).astype(jnp.bfloat16)
    vt3 = vt.reshape(H, hd, bt * tkv).astype(jnp.bfloat16)
    q3 = qfm_scr[...]                                              # (H, hd, Bt*Nq)

    # ---- online-softmax update, per batch element (small unrolled loop) -----
    # Head parallelism stays inside batched dot_generals; only the batch split
    # is a compile-time (<= _MAX_BT) Python loop with static lane slices.
    for b in range(bt):
        qs = slice(b * nq, (b + 1) * nq)
        ks = slice(b * tkv, (b + 1) * tkv)
        q_b = q3[:, :, qs]             # (H, hd, Nq)
        k_b = kt3[:, :, ks]            # (H, hd, Tkv)
        v_b = vt3[:, :, ks]            # (H, hd, Tkv)

        # Scores for all heads at once: S[h] = Qh^T Kh (contract head_dim).
        s = lax.dot_general(q_b, k_b, (((1,), (1,)), ((0,), (0,))),
                            preferred_element_type=jnp.float32)    # (H, Nq, Tkv)
        s = s + mask_ref[b, 0].astype(jnp.float32)[None, :, :]

        m_prev = m_scr[:, qs]                                      # (H, Nq)
        m_new = jnp.maximum(m_prev, jnp.max(s, axis=-1))
        # NOTE: a fully-masked row (all -inf) produces NaN, matching the
        # reference softmax-of-all--inf behaviour.
        alpha = jnp.exp(m_prev - m_new)
        p = jnp.exp(s - m_new[:, :, None])                         # (H, Nq, Tkv) f32
        l_scr[:, qs] = alpha * l_scr[:, qs] + jnp.sum(p, axis=-1)
        m_scr[:, qs] = m_new

        # Context kept feature-major: acc[h] (hd, Nq) += Vh_fm @ Ph^T, so the
        # finalize step merges (H, hd) -> D with a plain reshape (no transpose).
        pv = lax.dot_general(v_b, p.astype(jnp.bfloat16),
                             (((2,), (2,)), ((0,), (0,))),
                             preferred_element_type=jnp.float32)   # (H, hd, Nq)
        acc_scr[:, :, qs] = alpha[:, None, :] * acc_scr[:, :, qs] + pv

    # ---- last kv step: normalize + single full-D output projection ----------
    @pl.when(j == pl.num_programs(1) - 1)
    def _finalize():
        inv_l = pl.reciprocal(l_scr[...], approx=True)             # (H, Bt*Nq)
        ctx_fm = (acc_scr[...] * inv_l[:, None, :]).reshape(D, bt * nq)
        # One (Bt*Nq, D) x (D, D) matmul with K = D, instead of per-head
        # K = head_dim matmuls plus a head-sum reduction.
        out = lax.dot_general(ctx_fm.astype(jnp.bfloat16), wp_ref[...],
                              (((0,), (0,)), ((), ())),
                              preferred_element_type=jnp.float32)  # (Bt*Nq, D)
        out = out + bp_ref[...]
        o_ref[...] = out.reshape(bt, nq, D).astype(o_ref.dtype)


def _choose_batch_block(batch, nq):
    """Batch elements per grid step: enough rows for dense projection matmuls,
    while keeping >= 2 parallel grid steps for v7x's two TensorCores when
    that does not cost useful row density."""
    divs = [d for d in range(1, min(batch, _MAX_BT) + 1) if batch % d == 0]
    dense = [d for d in divs if d * nq >= 256]
    bt = min(dense) if dense else max(divs)
    if bt == batch and batch > 1:
        smaller = [d for d in divs if d < bt]
        if smaller and (max(smaller) * nq >= 128 or bt * nq < 128):
            bt = max(smaller)
    return bt


def _choose_kv_block(nkv, *, nq, num_heads, bt):
    """Largest kv tile whose f32 score/prob temporaries stay under budget."""
    def temp_bytes(t):
        return 2 * num_heads * bt * nq * t * 4
    if temp_bytes(nkv) <= _SCORE_BUDGET:
        return nkv
    for t in (2048, 1024, 512, 256, 128):
        if nkv % t == 0 and temp_bytes(t) <= _SCORE_BUDGET:
            return t
    # TODO(synk): pad/mask ragged Nkv so it can still be tiled; until then a
    # ragged long Nkv falls back to a single (large) kv block.
    return 128 if nkv % 128 == 0 else nkv


def _vmem_limit_bytes(*, bt, nq, tkv, dim, num_heads, head_dim, out_itemsize,
                      single_buffer_weights):
    """Scoped-VMEM request derived from actual block/scratch/temp sizes,
    capped by this chip's physical VMEM (v7x: 64 MiB, v5e/v6e: 128 MiB)."""
    bf16, f32 = 2, 4
    w_buf = 1 if single_buffer_weights else 2
    pipelined = 2 * (bt * nq * dim * bf16              # q
                     + 2 * bt * tkv * dim * bf16       # k, v
                     + bt * nq * tkv * bf16            # mask
                     + bt * nq * dim * out_itemsize)   # out
    weights = w_buf * (4 * dim * dim * bf16 + dim * f32)
    scratch = (num_heads * head_dim * bt * nq * (bf16 + f32)
               + 2 * num_heads * bt * nq * f32)
    temps = (2 * num_heads * bt * nq * tkv * f32       # scores + probs
             + 2 * dim * bt * tkv * f32                # K/V feature-major proj
             + 2 * dim * bt * nq * f32)                # Q proj / output temps
    limit = max(int((pipelined + weights + scratch + temps) * 1.5) + (8 << 20),
                32 << 20)
    limit = min(limit, 100 << 20)
    try:
        limit = min(limit,
                    int(pltpu.get_tpu_info().vmem_capacity_bytes) * 3 // 4)
    except Exception:
        pass
    return limit


def multi_head_attention(q, k, v, mask, params, *, num_heads):
    """q: (B, Nq, D), k/v: (B, Nkv, D), mask: (B, 1, Nq, Nkv) additive float.

    params = (wq, wk, wv, wp, bp); wq/wk/wv/wp stored as (in_dim, out_dim),
    bp as (1, D).  Dropout p=0 (eval) and qk_norm=False, as in the module
    defaults.
    """
    B, Nq, D = q.shape
    _, Nkv, _ = k.shape
    assert k.shape == v.shape and k.shape[0] == B and k.shape[2] == D
    assert mask.shape == (B, 1, Nq, Nkv)
    assert D % num_heads == 0
    head_dim = D // num_heads
    assert head_dim % 8 == 0, "head_dim must be a multiple of 8"
    scale = head_dim ** (-0.5)

    wq, wk, wv, wp, bp = params
    out_dtype = q.dtype

    # One-time weight re-layout outside the kernel (plain JAX, negligible):
    # Wq/Wk/Wv transposed to feature-major (out, in), scale folded into Wq,
    # Wp kept (in, out) for the single full-D output projection; all bf16.
    # TODO(synk): when q is k is v (self-attention), fuse Wq/Wk/Wv into one
    # (D, 3D) projection so the MXU stays weight-stationary longer.
    wqt = (wq * scale).T.astype(jnp.bfloat16)                      # (D, D)
    wkt = wk.T.astype(jnp.bfloat16)                                # (D, D)
    wvt = wv.T.astype(jnp.bfloat16)                                # (D, D)
    wpb = wp.astype(jnp.bfloat16)                                  # (D, D) in,out
    bpf = bp.reshape(1, D).astype(jnp.float32)                     # (1, D)

    qb = q.astype(jnp.bfloat16)
    kb = k.astype(jnp.bfloat16)
    vb = v.astype(jnp.bfloat16)
    maskb = mask.astype(jnp.bfloat16)   # additive mask shipped at half width

    bt = _choose_batch_block(B, Nq)
    tkv = _choose_kv_block(Nkv, nq=Nq, num_heads=num_heads, bt=bt)
    assert B % bt == 0 and Nkv % tkv == 0
    grid = (B // bt, Nkv // tkv)
    # TODO(synk): also tile Nq (second parallel axis + per-tile Q projection)
    # for very long query sequences on v7x.

    kernel = functools.partial(_mha_kernel, num_heads=num_heads,
                               head_dim=head_dim, bt=bt, nq=Nq, tkv=tkv)

    def run(single_buffer_weights):
        def const_spec(shape):
            idx = lambda b, j: (0,) * len(shape)
            if single_buffer_weights:
                # Grid-invariant weights only need one VMEM buffer each.
                return pl.BlockSpec(shape, idx, pipeline_mode=pl.Buffered(1))
            return pl.BlockSpec(shape, idx)

        grid_spec = pltpu.PrefetchScalarGridSpec(
            num_scalar_prefetch=0,
            grid=grid,
            in_specs=[
                pl.BlockSpec((bt, Nq, D),      lambda b, j: (b, 0, 0)),     # q
                pl.BlockSpec((bt, tkv, D),     lambda b, j: (b, j, 0)),     # k
                pl.BlockSpec((bt, tkv, D),     lambda b, j: (b, j, 0)),     # v
                pl.BlockSpec((bt, 1, Nq, tkv), lambda b, j: (b, 0, 0, j)),  # mask
                const_spec((D, D)),                                          # Wq^T (scaled)
                const_spec((D, D)),                                          # Wk^T
                const_spec((D, D)),                                          # Wv^T
                const_spec((D, D)),                                          # Wp (in,out)
                const_spec((1, D)),                                          # proj bias
            ],
            out_specs=pl.BlockSpec((bt, Nq, D), lambda b, j: (b, 0, 0)),
            scratch_shapes=[
                pltpu.VMEM((num_heads, head_dim, bt * Nq), jnp.bfloat16),   # Q fm
                pltpu.VMEM((num_heads, bt * Nq), jnp.float32),              # m
                pltpu.VMEM((num_heads, bt * Nq), jnp.float32),              # l
                pltpu.VMEM((num_heads, head_dim, bt * Nq), jnp.float32),    # acc fm
            ])

        return pl.pallas_call(
            kernel,
            out_shape=jax.ShapeDtypeStruct((B, Nq, D), out_dtype),
            grid_spec=grid_spec,
            compiler_params=pltpu.CompilerParams(
                dimension_semantics=("parallel", "arbitrary"),
                vmem_limit_bytes=_vmem_limit_bytes(
                    bt=bt, nq=Nq, tkv=tkv, dim=D, num_heads=num_heads,
                    head_dim=head_dim,
                    out_itemsize=jnp.dtype(out_dtype).itemsize,
                    single_buffer_weights=single_buffer_weights)),
        )(qb, kb, vb, maskb, wqt, wkt, wvt, wpb, bpf)

    try:
        return run(single_buffer_weights=True)
    except Exception:
        # pipeline_mode / Buffered(1) unsupported by this JAX/Mosaic build:
        # fall back to the default double-buffered input pipeline.
        return run(single_buffer_weights=False)


def _reference(q, k, v, mask, params, *, num_heads):
    """Pure-JAX f32 reference mirroring the PyTorch forward (eval mode)."""
    wq, wk, wv, wp, bp = params
    B, Nq, D = q.shape
    _, Nkv, _ = k.shape
    hd = D // num_heads
    scale = hd ** (-0.5)

    def split_heads(x, n):
        return x.reshape(B, n, num_heads, hd).transpose(0, 2, 1, 3)  # (B,H,N,hd)

    Q = split_heads(q @ wq, Nq)
    K = split_heads(k @ wk, Nkv)
    V = split_heads(v @ wv, Nkv)

    s = jnp.einsum("bhqd,bhkd->bhqk", Q, K) * scale + mask            # (B,H,Nq,Nkv)
    p = jax.nn.softmax(s, axis=-1)
    ctx = jnp.einsum("bhqk,bhkd->bhqd", p, V)
    x = ctx.transpose(0, 2, 1, 3).reshape(B, Nq, D)
    return x @ wp + bp


if __name__ == "__main__":
    # Small shapes consistent with the module (dim multiple of 128 for
    # lane-dense stores; head_dim = 16).
    B, Nq, Nkv = 2, 8, 16
    dim, num_heads = 128, 8

    key = jax.random.PRNGKey(0)
    kq, kk, kv, km, kwq, kwk, kwv, kwp, kbp = jax.random.split(key, 9)

    q = jax.random.normal(kq, (B, Nq, dim), dtype=jnp.float32)
    k = jax.random.normal(kk, (B, Nkv, dim), dtype=jnp.float32)
    v = jax.random.normal(kv, (B, Nkv, dim), dtype=jnp.float32)
    # Additive float attention mask, broadcast over heads.
    mask = jax.random.normal(km, (B, 1, Nq, Nkv), dtype=jnp.float32) * 0.1

    # Deterministic synthetic parameters (PyTorch Linear would be (out,in);
    # stored here pre-transposed as (in,out)).
    init = 1.0 / math.sqrt(dim)
    wq = jax.random.uniform(kwq, (dim, dim), jnp.float32, -init, init)
    wk = jax.random.uniform(kwk, (dim, dim), jnp.float32, -init, init)
    wv = jax.random.uniform(kwv, (dim, dim), jnp.float32, -init, init)
    wp = jax.random.uniform(kwp, (dim, dim), jnp.float32, -init, init)
    bp = jax.random.uniform(kbp, (1, dim), jnp.float32, -init, init)
    params = (wq, wk, wv, wp, bp)

    out = multi_head_attention(q, k, v, mask, params, num_heads=num_heads)
    out = jax.block_until_ready(out)

    ref = _reference(q, k, v, mask, params, num_heads=num_heads)
    assert out.shape == (B, Nq, dim)
    # bf16 matmuls + approx reciprocal -> loosened tolerance vs. f32 reference.
    assert jnp.allclose(out, ref, atol=3e-2, rtol=3e-2), "mismatch vs reference"

    print("KERNEL_OK")
</pallas_src>

<mosaic_0001>
module attributes {stable_mosaic.version = 11 : i64} {
  func.func @_mha_kernel(%arg0: i32, %arg1: i32, %arg2: memref<1x8x128xbf16, #tpu.memory_space<vmem>>, %arg3: memref<1x16x128xbf16, #tpu.memory_space<vmem>>, %arg4: memref<1x16x128xbf16, #tpu.memory_space<vmem>>, %arg5: memref<1x1x8x16xbf16, #tpu.memory_space<vmem>>, %arg6: memref<128x128xbf16, #tpu.memory_space<vmem>>, %arg7: memref<128x128xbf16, #tpu.memory_space<vmem>>, %arg8: memref<128x128xbf16, #tpu.memory_space<vmem>>, %arg9: memref<128x128xbf16, #tpu.memory_space<vmem>>, %arg10: memref<1x128xf32, #tpu.memory_space<vmem>>, %arg11: memref<1x8x128xf32, #tpu.memory_space<vmem>>, %arg12: memref<8x16x8xbf16, #tpu.memory_space<vmem>>, %arg13: memref<8x8xf32, #tpu.memory_space<vmem>>, %arg14: memref<8x8xf32, #tpu.memory_space<vmem>>, %arg15: memref<8x16x8xf32, #tpu.memory_space<vmem>>) attributes {dimension_semantics = [#tpu.dimension_semantics<parallel>, #tpu.dimension_semantics<arbitrary>], iteration_bounds = array<i64: 2, 1>, scalar_prefetch = 0 : i64, scratch_operands = 4 : i64, tpu.core_type = #tpu.core_type<tc>, window_params = [{transform_indices = @transform_0, window_bounds = array<i64: 1, 8, 128>}, {transform_indices = @transform_1, window_bounds = array<i64: 1, 16, 128>}, {transform_indices = @transform_2, window_bounds = array<i64: 1, 16, 128>}, {transform_indices = @transform_3, window_bounds = array<i64: 1, 1, 8, 16>}, {pipeline_mode = #tpu.pipeline_mode<synchronous>, transform_indices = @transform_4, window_bounds = array<i64: 128, 128>}, {pipeline_mode = #tpu.pipeline_mode<synchronous>, transform_indices = @transform_5, window_bounds = array<i64: 128, 128>}, {pipeline_mode = #tpu.pipeline_mode<synchronous>, transform_indices = @transform_6, window_bounds = array<i64: 128, 128>}, {pipeline_mode = #tpu.pipeline_mode<synchronous>, transform_indices = @transform_7, window_bounds = array<i64: 128, 128>}, {pipeline_mode = #tpu.pipeline_mode<synchronous>, transform_indices = @transform_8, window_bounds = array<i64: 1, 128>}, {transform_indices = @transform_9, window_bounds = array<i64: 1, 8, 128>}]} {
    %c0_i32 = arith.constant 0 : i32
    %0 = arith.cmpi eq, %arg1, %c0_i32 : i32
    %1 = arith.extui %0 : i1 to i32
    %c0_i32_0 = arith.constant 0 : i32
    %2 = arith.cmpi ne, %1, %c0_i32_0 : i32
    scf.if %2 {
      %c0_38 = arith.constant 0 : index
      %c0_39 = arith.constant 0 : index
      %c0_40 = arith.constant 0 : index
      %49 = vector.load %arg2[%c0_38, %c0_39, %c0_40] : memref<1x8x128xbf16, #tpu.memory_space<vmem>>, vector<1x8x128xbf16>
      %50 = vector.shape_cast %49 : vector<1x8x128xbf16> to vector<8x128xbf16>
      %c0_41 = arith.constant 0 : index
      %c0_42 = arith.constant 0 : index
      %51 = vector.load %arg6[%c0_41, %c0_42] : memref<128x128xbf16, #tpu.memory_space<vmem>>, vector<128x128xbf16>
      %cst_43 = arith.constant dense<0.000000e+00> : vector<128x8xf32>
      %52 = tpu.matmul %51, %50, %cst_43 {dimension_numbers = #tpu.dot_dimension_numbers<[1], [1], [0], [0], [0, 0, 1, 0], [], []>} : vector<128x128xbf16>, vector<8x128xbf16>, vector<128x8xf32> -> vector<128x8xf32>
      %53 = vector.shape_cast %52 : vector<128x8xf32> to vector<8x16x8xf32>
      %54 = arith.truncf %53 : vector<8x16x8xf32> to vector<8x16x8xbf16>
      %c0_44 = arith.constant 0 : index
      %c0_45 = arith.constant 0 : index
      %c0_46 = arith.constant 0 : index
      %55 = vector.load %arg12[%c0_44, %c0_45, %c0_46] : memref<8x16x8xbf16, #tpu.memory_space<vmem>>, vector<8x16x8xbf16>
      tpu.vector_store %arg12[%c0_44, %c0_45, %c0_46], %54 {strides = array<i32>} : memref<8x16x8xbf16, #tpu.memory_space<vmem>>, vector<8x16x8xbf16>,
      %cst_47 = arith.constant 0xFF800000 : f32
      %56 = vector.broadcast %cst_47 : f32 to vector<8x8xf32>
      %c0_48 = arith.constant 0 : index
      %c0_49 = arith.constant 0 : index
      %57 = vector.load %arg13[%c0_48, %c0_49] : memref<8x8xf32, #tpu.memory_space<vmem>>, vector<8x8xf32>
      tpu.vector_store %arg13[%c0_48, %c0_49], %56 {strides = array<i32>} : memref<8x8xf32, #tpu.memory_space<vmem>>, vector<8x8xf32>,
      %cst_50 = arith.constant 0.000000e+00 : f32
      %58 = vector.broadcast %cst_50 : f32 to vector<8x8xf32>
      %c0_51 = arith.constant 0 : index
      %c0_52 = arith.constant 0 : index
      %59 = vector.load %arg14[%c0_51, %c0_52] : memref<8x8xf32, #tpu.memory_space<vmem>>, vector<8x8xf32>
      tpu.vector_store %arg14[%c0_51, %c0_52], %58 {strides = array<i32>} : memref<8x8xf32, #tpu.memory_space<vmem>>, vector<8x8xf32>,
      %cst_53 = arith.constant 0.000000e+00 : f32
      %60 = vector.broadcast %cst_53 : f32 to vector<8x16x8xf32>
      %c0_54 = arith.constant 0 : index
      %c0_55 = arith.constant 0 : index
      %c0_56 = arith.constant 0 : index
      %61 = vector.load %arg15[%c0_54, %c0_55, %c0_56] : memref<8x16x8xf32, #tpu.memory_space<vmem>>, vector<8x16x8xf32>
      tpu.vector_store %arg15[%c0_54, %c0_55, %c0_56], %60 {strides = array<i32>} : memref<8x16x8xf32, #tpu.memory_space<vmem>>, vector<8x16x8xf32>,
    } else {
    }
    %c0 = arith.constant 0 : index
    %c0_1 = arith.constant 0 : index
    %c0_2 = arith.constant 0 : index
    %3 = vector.load %arg3[%c0, %c0_1, %c0_2] : memref<1x16x128xbf16, #tpu.memory_space<vmem>>, vector<1x16x128xbf16>
    %4 = vector.shape_cast %3 : vector<1x16x128xbf16> to vector<16x128xbf16>
    %c0_3 = arith.constant 0 : index
    %c0_4 = arith.constant 0 : index
    %c0_5 = arith.constant 0 : index
    %5 = vector.load %arg4[%c0_3, %c0_4, %c0_5] : memref<1x16x128xbf16, #tpu.memory_space<vmem>>, vector<1x16x128xbf16>
    %6 = vector.shape_cast %5 : vector<1x16x128xbf16> to vector<16x128xbf16>
    %c0_6 = arith.constant 0 : index
    %c0_7 = arith.constant 0 : index
    %7 = vector.load %arg7[%c0_6, %c0_7] : memref<128x128xbf16, #tpu.memory_space<vmem>>, vector<128x128xbf16>
    %cst = arith.constant dense<0.000000e+00> : vector<128x16xf32>
    %8 = tpu.matmul %7, %4, %cst {dimension_numbers = #tpu.dot_dimension_numbers<[1], [1], [0], [0], [0, 0, 1, 0], [], []>} : vector<128x128xbf16>, vector<16x128xbf16>, vector<128x16xf32> -> vector<128x16xf32>
    %c0_8 = arith.constant 0 : index
    %c0_9 = arith.constant 0 : index
    %9 = vector.load %arg8[%c0_8, %c0_9] : memref<128x128xbf16, #tpu.memory_space<vmem>>, vector<128x128xbf16>
    %cst_10 = arith.constant dense<0.000000e+00> : vector<128x16xf32>
    %10 = tpu.matmul %9, %6, %cst_10 {dimension_numbers = #tpu.dot_dimension_numbers<[1], [1], [0], [0], [0, 0, 1, 0], [], []>} : vector<128x128xbf16>, vector<16x128xbf16>, vector<128x16xf32> -> vector<128x16xf32>
    %11 = vector.shape_cast %8 : vector<128x16xf32> to vector<8x16x16xf32>
    %12 = arith.truncf %11 : vector<8x16x16xf32> to vector<8x16x16xbf16>
    %13 = vector.shape_cast %10 : vector<128x16xf32> to vector<8x16x16xf32>
    %14 = arith.truncf %13 : vector<8x16x16xf32> to vector<8x16x16xbf16>
    %c0_11 = arith.constant 0 : index
    %c0_12 = arith.constant 0 : index
    %c0_13 = arith.constant 0 : index
    %15 = vector.load %arg12[%c0_11, %c0_12, %c0_13] : memref<8x16x8xbf16, #tpu.memory_space<vmem>>, vector<8x16x8xbf16>
    %cst_14 = arith.constant dense<0.000000e+00> : vector<8x8x16xf32>
    %16 = tpu.matmul %15, %12, %cst_14 {dimension_numbers = #tpu.dot_dimension_numbers<[1], [1], [2], [2], [0, 0, 0, 2, 1, 2], [0], [0]>} : vector<8x16x8xbf16>, vector<8x16x16xbf16>, vector<8x8x16xf32> -> vector<8x8x16xf32>
    %c0_15 = arith.constant 0 : index
    %c0_16 = arith.constant 0 : index
    %c0_17 = arith.constant 0 : index
    %c0_18 = arith.constant 0 : index
    %17 = vector.load %arg5[%c0_15, %c0_16, %c0_17, %c0_18] : memref<1x1x8x16xbf16, #tpu.memory_space<vmem>>, vector<1x1x8x16xbf16>
    %18 = vector.shape_cast %17 : vector<1x1x8x16xbf16> to vector<8x16xbf16>
    %19 = arith.extf %18 : vector<8x16xbf16> to vector<8x16xf32>
    %20 = vector.shape_cast %19 : vector<8x16xf32> to vector<1x8x16xf32>
    %21 = vector.broadcast %20 : vector<1x8x16xf32> to vector<8x8x16xf32>
    %22 = arith.addf %16, %21 : vector<8x8x16xf32>
    %c0_19 = arith.constant 0 : index
    %c0_20 = arith.constant 0 : index
    %23 = vector.load %arg13[%c0_19, %c0_20] : memref<8x8xf32, #tpu.memory_space<vmem>>, vector<8x8xf32>
    %cst_21 = arith.constant dense<0xFF800000> : vector<8x8xf32>
    %24 = vector.multi_reduction <maximumf>, %22, %cst_21 [2] : vector<8x8x16xf32> to vector<8x8xf32>
    %25 = arith.maximumf %23, %24 : vector<8x8xf32>
    %26 = arith.subf %23, %25 : vector<8x8xf32>
    %27 = math.exp %26 : vector<8x8xf32>
    %28 = vector.shape_cast %25 : vector<8x8xf32> to vector<8x8x1xf32>
    %29 = vector.broadcast %28 : vector<8x8x1xf32> to vector<8x8x16xf32>
    %30 = arith.subf %22, %29 : vector<8x8x16xf32>
    %31 = math.exp %30 : vector<8x8x16xf32>
    %c0_22 = arith.constant 0 : index
    %c0_23 = arith.constant 0 : index
    %32 = vector.load %arg14[%c0_22, %c0_23] : memref<8x8xf32, #tpu.memory_space<vmem>>, vector<8x8xf32>
    %33 = arith.mulf %27, %32 : vector<8x8xf32>
    %cst_24 = arith.constant dense<0.000000e+00> : vector<8x8xf32>
    %34 = vector.multi_reduction <add>, %31, %cst_24 [2] : vector<8x8x16xf32> to vector<8x8xf32>
    %35 = arith.addf %33, %34 : vector<8x8xf32>
    %c0_25 = arith.constant 0 : index
    %c0_26 = arith.constant 0 : index
    %36 = vector.load %arg14[%c0_25, %c0_26] : memref<8x8xf32, #tpu.memory_space<vmem>>, vector<8x8xf32>
    tpu.vector_store %arg14[%c0_25, %c0_26], %35 {strides = array<i32>} : memref<8x8xf32, #tpu.memory_space<vmem>>, vector<8x8xf32>,
    %c0_27 = arith.constant 0 : index
    %c0_28 = arith.constant 0 : index
    %37 = vector.load %arg13[%c0_27, %c0_28] : memref<8x8xf32, #tpu.memory_space<vmem>>, vector<8x8xf32>
    tpu.vector_store %arg13[%c0_27, %c0_28], %25 {strides = array<i32>} : memref<8x8xf32, #tpu.memory_space<vmem>>, vector<8x8xf32>,
    %38 = arith.truncf %31 : vector<8x8x16xf32> to vector<8x8x16xbf16>
    %cst_29 = arith.constant dense<0.000000e+00> : vector<8x16x8xf32>
    %39 = tpu.matmul %14, %38, %cst_29 {dimension_numbers = #tpu.dot_dimension_numbers<[2], [2], [1], [1], [0, 0, 0, 1, 1, 1], [0], [0]>} : vector<8x16x16xbf16>, vector<8x8x16xbf16>, vector<8x16x8xf32> -> vector<8x16x8xf32>
    %40 = vector.shape_cast %27 : vector<8x8xf32> to vector<8x1x8xf32>
    %c0_30 = arith.constant 0 : index
    %c0_31 = arith.constant 0 : index
    %c0_32 = arith.constant 0 : index
    %41 = vector.load %arg15[%c0_30, %c0_31, %c0_32] : memref<8x16x8xf32, #tpu.memory_space<vmem>>, vector<8x16x8xf32>
    %42 = vector.broadcast %40 : vector<8x1x8xf32> to vector<8x16x8xf32>
    %43 = arith.mulf %42, %41 : vector<8x16x8xf32>
    %44 = arith.addf %43, %39 : vector<8x16x8xf32>
    %c0_33 = arith.constant 0 : index
    %c0_34 = arith.constant 0 : index
    %c0_35 = arith.constant 0 : index
    %45 = vector.load %arg15[%c0_33, %c0_34, %c0_35] : memref<8x16x8xf32, #tpu.memory_space<vmem>>, vector<8x16x8xf32>
    tpu.vector_store %arg15[%c0_33, %c0_34, %c0_35], %44 {strides = array<i32>} : memref<8x16x8xf32, #tpu.memory_space<vmem>>, vector<8x16x8xf32>,
    %c0_i32_36 = arith.constant 0 : i32
    %46 = arith.cmpi eq, %arg1, %c0_i32_36 : i32
    %47 = arith.extui %46 : i1 to i32
    %c0_i32_37 = arith.constant 0 : i32
    %48 = arith.cmpi ne, %47, %c0_i32_37 : i32
    scf.if %48 {
      %c0_38 = arith.constant 0 : index
      %c0_39 = arith.constant 0 : index
      %49 = vector.load %arg14[%c0_38, %c0_39] : memref<8x8xf32, #tpu.memory_space<vmem>>, vector<8x8xf32>
      %50 = tpu.reciprocal %49 {approx = true} : vector<8x8xf32> -> vector<8x8xf32>
      %c0_40 = arith.constant 0 : index
      %c0_41 = arith.constant 0 : index
      %c0_42 = arith.constant 0 : index
      %51 = vector.load %arg15[%c0_40, %c0_41, %c0_42] : memref<8x16x8xf32, #tpu.memory_space<vmem>>, vector<8x16x8xf32>
      %52 = vector.shape_cast %50 : vector<8x8xf32> to vector<8x1x8xf32>
      %53 = vector.broadcast %52 : vector<8x1x8xf32> to vector<8x16x8xf32>
      %54 = arith.mulf %51, %53 : vector<8x16x8xf32>
      %55 = vector.shape_cast %54 : vector<8x16x8xf32> to vector<128x8xf32>
      %56 = arith.truncf %55 : vector<128x8xf32> to vector<128x8xbf16>
      %c0_43 = arith.constant 0 : index
      %c0_44 = arith.constant 0 : index
      %57 = vector.load %arg9[%c0_43, %c0_44] : memref<128x128xbf16, #tpu.memory_space<vmem>>, vector<128x128xbf16>
      %cst_45 = arith.constant dense<0.000000e+00> : vector<8x128xf32>
      %58 = tpu.matmul %56, %57, %cst_45 {dimension_numbers = #tpu.dot_dimension_numbers<[0], [0], [1], [1], [0, 1, 1, 1], [], []>} : vector<128x8xbf16>, vector<128x128xbf16>, vector<8x128xf32> -> vector<8x128xf32>
      %c0_46 = arith.constant 0 : index
      %c0_47 = arith.constant 0 : index
      %59 = vector.load %arg10[%c0_46, %c0_47] : memref<1x128xf32, #tpu.memory_space<vmem>>, vector<1x128xf32>
      %60 = vector.broadcast %59 : vector<1x128xf32> to vector<8x128xf32>
      %61 = arith.addf %58, %60 : vector<8x128xf32>
      %62 = vector.shape_cast %61 : vector<8x128xf32> to vector<1x8x128xf32>
      %c0_48 = arith.constant 0 : index
      %c0_49 = arith.constant 0 : index
      %c0_50 = arith.constant 0 : index
      %63 = vector.load %arg11[%c0_48, %c0_49, %c0_50] : memref<1x8x128xf32, #tpu.memory_space<vmem>>, vector<1x8x128xf32>
      tpu.vector_store %arg11[%c0_48, %c0_49, %c0_50], %62 {strides = array<i32>} : memref<1x8x128xf32, #tpu.memory_space<vmem>>, vector<1x8x128xf32>,
    } else {
    }
    return
  }
  func.func @transform_0(%arg0: i32, %arg1: i32) -> (i32, i32, i32) {
    %c0_i32 = arith.constant 0 : i32
    %c0_i32_0 = arith.constant 0 : i32
    %c0_i32_1 = arith.constant 0 : i32
    return %arg0, %c0_i32, %c0_i32_0 : i32, i32, i32
  }
  func.func @transform_1(%arg0: i32, %arg1: i32) -> (i32, i32, i32) {
    %c0_i32 = arith.constant 0 : i32
    %c0_i32_0 = arith.constant 0 : i32
    return %arg0, %arg1, %c0_i32 : i32, i32, i32
  }
  func.func @transform_2(%arg0: i32, %arg1: i32) -> (i32, i32, i32) {
    %c0_i32 = arith.constant 0 : i32
    %c0_i32_0 = arith.constant 0 : i32
    return %arg0, %arg1, %c0_i32 : i32, i32, i32
  }
  func.func @transform_3(%arg0: i32, %arg1: i32) -> (i32, i32, i32, i32) {
    %c0_i32 = arith.constant 0 : i32
    %c0_i32_0 = arith.constant 0 : i32
    %c0_i32_1 = arith.constant 0 : i32
    return %arg0, %c0_i32, %c0_i32_0, %arg1 : i32, i32, i32, i32
  }
  func.func @transform_4(%arg0: i32, %arg1: i32) -> (i32, i32) {
    %c0_i32 = arith.constant 0 : i32
    %c0_i32_0 = arith.constant 0 : i32
    %c0_i32_1 = arith.constant 0 : i32
    return %c0_i32, %c0_i32_0 : i32, i32
  }
  func.func @transform_5(%arg0: i32, %arg1: i32) -> (i32, i32) {
    %c0_i32 = arith.constant 0 : i32
    %c0_i32_0 = arith.constant 0 : i32
    %c0_i32_1 = arith.constant 0 : i32
    return %c0_i32, %c0_i32_0 : i32, i32
  }
  func.func @transform_6(%arg0: i32, %arg1: i32) -> (i32, i32) {
    %c0_i32 = arith.constant 0 : i32
    %c0_i32_0 = arith.constant 0 : i32
    %c0_i32_1 = arith.constant 0 : i32
    return %c0_i32, %c0_i32_0 : i32, i32
  }
  func.func @transform_7(%arg0: i32, %arg1: i32) -> (i32, i32) {
    %c0_i32 = arith.constant 0 : i32
    %c0_i32_0 = arith.constant 0 : i32
    %c0_i32_1 = arith.constant 0 : i32
    return %c0_i32, %c0_i32_0 : i32, i32
  }
  func.func @transform_8(%arg0: i32, %arg1: i32) -> (i32, i32) {
    %c0_i32 = arith.constant 0 : i32
    %c0_i32_0 = arith.constant 0 : i32
    %c0_i32_1 = arith.constant 0 : i32
    return %c0_i32, %c0_i32_0 : i32, i32
  }
  func.func @transform_9(%arg0: i32, %arg1: i32) -> (i32, i32, i32) {
    %c0_i32 = arith.constant 0 : i32
    %c0_i32_0 = arith.constant 0 : i32
    %c0_i32_1 = arith.constant 0 : i32
    return %arg0, %c0_i32, %c0_i32_0 : i32, i32, i32
  }
}

module attributes {stable_mosaic.version = 11 : i64} {
  func.func @_mha_kernel(%arg0: i32, %arg1: i32, %arg2: memref<1x8x128xbf16, #tpu.memory_space<vmem>>, %arg3: memref<1x16x128xbf16, #tpu.memory_space<vmem>>, %arg4: memref<1x16x128xbf16, #tpu.memory_space<vmem>>, %arg5: memref<1x1x8x16xbf16, #tpu.memory_space<vmem>>, %arg6: memref<128x128xbf16, #tpu.memory_space<vmem>>, %arg7: memref<128x128xbf16, #tpu.memory_space<vmem>>, %arg8: memref<128x128xbf16, #tpu.memory_space<vmem>>, %arg9: memref<128x128xbf16, #tpu.memory_space<vmem>>, %arg10: memref<1x128xf32, #tpu.memory_space<vmem>>, %arg11: memref<1x8x128xf32, #tpu.memory_space<vmem>>, %arg12: memref<8x16x8xbf16, #tpu.memory_space<vmem>>, %arg13: memref<8x8xf32, #tpu.memory_space<vmem>>, %arg14: memref<8x8xf32, #tpu.memory_space<vmem>>, %arg15: memref<8x16x8xf32, #tpu.memory_space<vmem>>) attributes {dimension_semantics = [#tpu.dimension_semantics<parallel>, #tpu.dimension_semantics<arbitrary>], iteration_bounds = array<i64: 2, 1>, scalar_prefetch = 0 : i64, scratch_operands = 4 : i64, tpu.core_type = #tpu.core_type<tc>, window_params = [{transform_indices = @transform_0, window_bounds = array<i64: 1, 8, 128>}, {transform_indices = @transform_1, window_bounds = array<i64: 1, 16, 128>}, {transform_indices = @transform_2, window_bounds = array<i64: 1, 16, 128>}, {transform_indices = @transform_3, window_bounds = array<i64: 1, 1, 8, 16>}, {pipeline_mode = #tpu.pipeline_mode<synchronous>, transform_indices = @transform_4, window_bounds = array<i64: 128, 128>}, {pipeline_mode = #tpu.pipeline_mode<synchronous>, transform_indices = @transform_5, window_bounds = array<i64: 128, 128>}, {pipeline_mode = #tpu.pipeline_mode<synchronous>, transform_indices = @transform_6, window_bounds = array<i64: 128, 128>}, {pipeline_mode = #tpu.pipeline_mode<synchronous>, transform_indices = @transform_7, window_bounds = array<i64: 128, 128>}, {pipeline_mode = #tpu.pipeline_mode<synchronous>, transform_indices = @transform_8, window_bounds = array<i64: 1, 128>}, {transform_indices = @transform_9, window_bounds = array<i64: 1, 8, 128>}]} {
    %c0_i32 = arith.constant 0 : i32
    %0 = arith.cmpi eq, %arg1, %c0_i32 : i32
    %1 = arith.extui %0 : i1 to i32
    %c0_i32_0 = arith.constant 0 : i32
    %2 = arith.cmpi ne, %1, %c0_i32_0 : i32
    scf.if %2 {
      %c0_38 = arith.constant 0 : index
      %c0_39 = arith.constant 0 : index
      %c0_40 = arith.constant 0 : index
      %49 = vector.load %arg2[%c0_38, %c0_39, %c0_40] : memref<1x8x128xbf16, #tpu.memory_space<vmem>>, vector<1x8x128xbf16>
      %50 = vector.shape_cast %49 : vector<1x8x128xbf16> to vector<8x128xbf16>
      %c0_41 = arith.constant 0 : index
      %c0_42 = arith.constant 0 : index
      %51 = vector.load %arg6[%c0_41, %c0_42] : memref<128x128xbf16, #tpu.memory_space<vmem>>, vector<128x128xbf16>
      %cst_43 = arith.constant dense<0.000000e+00> : vector<128x8xf32>
      %52 = tpu.matmul %51, %50, %cst_43 {dimension_numbers = #tpu.dot_dimension_numbers<[1], [1], [0], [0], [0, 0, 1, 0], [], []>} : vector<128x128xbf16>, vector<8x128xbf16>, vector<128x8xf32> -> vector<128x8xf32>
      %53 = vector.shape_cast %52 : vector<128x8xf32> to vector<8x16x8xf32>
      %54 = arith.truncf %53 : vector<8x16x8xf32> to vector<8x16x8xbf16>
      %c0_44 = arith.constant 0 : index
      %c0_45 = arith.constant 0 : index
      %c0_46 = arith.constant 0 : index
      %55 = vector.load %arg12[%c0_44, %c0_45, %c0_46] : memref<8x16x8xbf16, #tpu.memory_space<vmem>>, vector<8x16x8xbf16>
      tpu.vector_store %arg12[%c0_44, %c0_45, %c0_46], %54 {strides = array<i32>} : memref<8x16x8xbf16, #tpu.memory_space<vmem>>, vector<8x16x8xbf16>,
      %cst_47 = arith.constant 0xFF800000 : f32
      %56 = vector.broadcast %cst_47 : f32 to vector<8x8xf32>
      %c0_48 = arith.constant 0 : index
      %c0_49 = arith.constant 0 : index
      %57 = vector.load %arg13[%c0_48, %c0_49] : memref<8x8xf32, #tpu.memory_space<vmem>>, vector<8x8xf32>
      tpu.vector_store %arg13[%c0_48, %c0_49], %56 {strides = array<i32>} : memref<8x8xf32, #tpu.memory_space<vmem>>, vector<8x8xf32>,
      %cst_50 = arith.constant 0.000000e+00 : f32
      %58 = vector.broadcast %cst_50 : f32 to vector<8x8xf32>
      %c0_51 = arith.constant 0 : index
      %c0_52 = arith.constant 0 : index
      %59 = vector.load %arg14[%c0_51, %c0_52] : memref<8x8xf32, #tpu.memory_space<vmem>>, vector<8x8xf32>
      tpu.vector_store %arg14[%c0_51, %c0_52], %58 {strides = array<i32>} : memref<8x8xf32, #tpu.memory_space<vmem>>, vector<8x8xf32>,
      %cst_53 = arith.constant 0.000000e+00 : f32
      %60 = vector.broadcast %cst_53 : f32 to vector<8x16x8xf32>
      %c0_54 = arith.constant 0 : index
      %c0_55 = arith.constant 0 : index
      %c0_56 = arith.constant 0 : index
      %61 = vector.load %arg15[%c0_54, %c0_55, %c0_56] : memref<8x16x8xf32, #tpu.memory_space<vmem>>, vector<8x16x8xf32>
      tpu.vector_store %arg15[%c0_54, %c0_55, %c0_56], %60 {strides = array<i32>} : memref<8x16x8xf32, #tpu.memory_space<vmem>>, vector<8x16x8xf32>,
    } else {
    }
    %c0 = arith.constant 0 : index
    %c0_1 = arith.constant 0 : index
    %c0_2 = arith.constant 0 : index
    %3 = vector.load %arg3[%c0, %c0_1, %c0_2] : memref<1x16x128xbf16, #tpu.memory_space<vmem>>, vector<1x16x128xbf16>
    %4 = vector.shape_cast %3 : vector<1x16x128xbf16> to vector<16x128xbf16>
    %c0_3 = arith.constant 0 : index
    %c0_4 = arith.constant 0 : index
    %c0_5 = arith.constant 0 : index
    %5 = vector.load %arg4[%c0_3, %c0_4, %c0_5] : memref<1x16x128xbf16, #tpu.memory_space<vmem>>, vector<1x16x128xbf16>
    %6 = vector.shape_cast %5 : vector<1x16x128xbf16> to vector<16x128xbf16>
    %c0_6 = arith.constant 0 : index
    %c0_7 = arith.constant 0 : index
    %7 = vector.load %arg7[%c0_6, %c0_7] : memref<128x128xbf16, #tpu.memory_space<vmem>>, vector<128x128xbf16>
    %cst = arith.constant dense<0.000000e+00> : vector<128x16xf32>
    %8 = tpu.matmul %7, %4, %cst {dimension_numbers = #tpu.dot_dimension_numbers<[1], [1], [0], [0], [0, 0, 1, 0], [], []>} : vector<128x128xbf16>, vector<16x128xbf16>, vector<128x16xf32> -> vector<128x16xf32>
    %c0_8 = arith.constant 0 : index
    %c0_9 = arith.constant 0 : index
    %9 = vector.load %arg8[%c0_8, %c0_9] : memref<128x128xbf16, #tpu.memory_space<vmem>>, vector<128x128xbf16>
    %cst_10 = arith.constant dense<0.000000e+00> : vector<128x16xf32>
    %10 = tpu.matmul %9, %6, %cst_10 {dimension_numbers = #tpu.dot_dimension_numbers<[1], [1], [0], [0], [0, 0, 1, 0], [], []>} : vector<128x128xbf16>, vector<16x128xbf16>, vector<128x16xf32> -> vector<128x16xf32>
    %11 = vector.shape_cast %8 : vector<128x16xf32> to vector<8x16x16xf32>
    %12 = arith.truncf %11 : vector<8x16x16xf32> to vector<8x16x16xbf16>
    %13 = vector.shape_cast %10 : vector<128x16xf32> to vector<8x16x16xf32>
    %14 = arith.truncf %13 : vector<8x16x16xf32> to vector<8x16x16xbf16>
    %c0_11 = arith.constant 0 : index
    %c0_12 = arith.constant 0 : index
    %c0_13 = arith.constant 0 : index
    %15 = vector.load %arg12[%c0_11, %c0_12, %c0_13] : memref<8x16x8xbf16, #tpu.memory_space<vmem>>, vector<8x16x8xbf16>
    %cst_14 = arith.constant dense<0.000000e+00> : vector<8x8x16xf32>
    %16 = tpu.matmul %15, %12, %cst_14 {dimension_numbers = #tpu.dot_dimension_numbers<[1], [1], [2], [2], [0, 0, 0, 2, 1, 2], [0], [0]>} : vector<8x16x8xbf16>, vector<8x16x16xbf16>, vector<8x8x16xf32> -> vector<8x8x16xf32>
    %c0_15 = arith.constant 0 : index
    %c0_16 = arith.constant 0 : index
    %c0_17 = arith.constant 0 : index
    %c0_18 = arith.constant 0 : index
    %17 = vector.load %arg5[%c0_15, %c0_16, %c0_17, %c0_18] : memref<1x1x8x16xbf16, #tpu.memory_space<vmem>>, vector<1x1x8x16xbf16>
    %18 = vector.shape_cast %17 : vector<1x1x8x16xbf16> to vector<8x16xbf16>
    %19 = arith.extf %18 : vector<8x16xbf16> to vector<8x16xf32>
    %20 = vector.shape_cast %19 : vector<8x16xf32> to vector<1x8x16xf32>
    %21 = vector.broadcast %20 : vector<1x8x16xf32> to vector<8x8x16xf32>
    %22 = arith.addf %16, %21 : vector<8x8x16xf32>
    %c0_19 = arith.constant 0 : index
    %c0_20 = arith.constant 0 : index
    %23 = vector.load %arg13[%c0_19, %c0_20] : memref<8x8xf32, #tpu.memory_space<vmem>>, vector<8x8xf32>
    %cst_21 = arith.constant dense<0xFF800000> : vector<8x8xf32>
    %24 = vector.multi_reduction <maximumf>, %22, %cst_21 [2] : vector<8x8x16xf32> to vector<8x8xf32>
    %25 = arith.maximumf %23, %24 : vector<8x8xf32>
    %26 = arith.subf %23, %25 : vector<8x8xf32>
    %27 = math.exp %26 : vector<8x8xf32>
    %28 = vector.shape_cast %25 : vector<8x8xf32> to vector<8x8x1xf32>
    %29 = vector.broadcast %28 : vector<8x8x1xf32> to vector<8x8x16xf32>
    %30 = arith.subf %22, %29 : vector<8x8x16xf32>
    %31 = math.exp %30 : vector<8x8x16xf32>
    %c0_22 = arith.constant 0 : index
    %c0_23 = arith.constant 0 : index
    %32 = vector.load %arg14[%c0_22, %c0_23] : memref<8x8xf32, #tpu.memory_space<vmem>>, vector<8x8xf32>
    %33 = arith.mulf %27, %32 : vector<8x8xf32>
    %cst_24 = arith.constant dense<0.000000e+00> : vector<8x8xf32>
    %34 = vector.multi_reduction <add>, %31, %cst_24 [2] : vector<8x8x16xf32> to vector<8x8xf32>
    %35 = arith.addf %33, %34 : vector<8x8xf32>
    %c0_25 = arith.constant 0 : index
    %c0_26 = arith.constant 0 : index
    %36 = vector.load %arg14[%c0_25, %c0_26] : memref<8x8xf32, #tpu.memory_space<vmem>>, vector<8x8xf32>
    tpu.vector_store %arg14[%c0_25, %c0_26], %35 {strides = array<i32>} : memref<8x8xf32, #tpu.memory_space<vmem>>, vector<8x8xf32>,
    %c0_27 = arith.constant 0 : index
    %c0_28 = arith.constant 0 : index
    %37 = vector.load %arg13[%c0_27, %c0_28] : memref<8x8xf32, #tpu.memory_space<vmem>>, vector<8x8xf32>
    tpu.vector_store %arg13[%c0_27, %c0_28], %25 {strides = array<i32>} : memref<8x8xf32, #tpu.memory_space<vmem>>, vector<8x8xf32>,
    %38 = arith.truncf %31 : vector<8x8x16xf32> to vector<8x8x16xbf16>
    %cst_29 = arith.constant dense<0.000000e+00> : vector<8x16x8xf32>
    %39 = tpu.matmul %14, %38, %cst_29 {dimension_numbers = #tpu.dot_dimension_numbers<[2], [2], [1], [1], [0, 0, 0, 1, 1, 1], [0], [0]>} : vector<8x16x16xbf16>, vector<8x8x16xbf16>, vector<8x16x8xf32> -> vector<8x16x8xf32>
    %40 = vector.shape_cast %27 : vector<8x8xf32> to vector<8x1x8xf32>
    %c0_30 = arith.constant 0 : index
    %c0_31 = arith.constant 0 : index
    %c0_32 = arith.constant 0 : index
    %41 = vector.load %arg15[%c0_30, %c0_31, %c0_32] : memref<8x16x8xf32, #tpu.memory_space<vmem>>, vector<8x16x8xf32>
    %42 = vector.broadcast %40 : vector<8x1x8xf32> to vector<8x16x8xf32>
    %43 = arith.mulf %42, %41 : vector<8x16x8xf32>
    %44 = arith.addf %43, %39 : vector<8x16x8xf32>
    %c0_33 = arith.constant 0 : index
    %c0_34 = arith.constant 0 : index
    %c0_35 = arith.constant 0 : index
    %45 = vector.load %arg15[%c0_33, %c0_34, %c0_35] : memref<8x16x8xf32, #tpu.memory_space<vmem>>, vector<8x16x8xf32>
    tpu.vector_store %arg15[%c0_33, %c0_34, %c0_35], %44 {strides = array<i32>} : memref<8x16x8xf32, #tpu.memory_space<vmem>>, vector<8x16x8xf32>,
    %c0_i32_36 = arith.constant 0 : i32
    %46 = arith.cmpi eq, %arg1, %c0_i32_36 : i32
    %47 = arith.extui %46 : i1 to i32
    %c0_i32_37 = arith.constant 0 : i32
    %48 = arith.cmpi ne, %47, %c0_i32_37 : i32
    scf.if %48 {
      %c0_38 = arith.constant 0 : index
      %c0_39 = arith.constant 0 : index
      %49 = vector.load %arg14[%c0_38, %c0_39] : memref<8x8xf32, #tpu.memory_space<vmem>>, vector<8x8xf32>
      %50 = tpu.reciprocal %49 {approx = true} : vector<8x8xf32> -> vector<8x8xf32>
      %c0_40 = arith.constant 0 : index
      %c0_41 = arith.constant 0 : index
      %c0_42 = arith.constant 0 : index
      %51 = vector.load %arg15[%c0_40, %c0_41, %c0_42] : memref<8x16x8xf32, #tpu.memory_space<vmem>>, vector<8x16x8xf32>
      %52 = vector.shape_cast %50 : vector<8x8xf32> to vector<8x1x8xf32>
      %53 = vector.broadcast %52 : vector<8x1x8xf32> to vector<8x16x8xf32>
      %54 = arith.mulf %51, %53 : vector<8x16x8xf32>
      %55 = vector.shape_cast %54 : vector<8x16x8xf32> to vector<128x8xf32>
      %56 = arith.truncf %55 : vector<128x8xf32> to vector<128x8xbf16>
      %c0_43 = arith.constant 0 : index
      %c0_44 = arith.constant 0 : index
      %57 = vector.load %arg9[%c0_43, %c0_44] : memref<128x128xbf16, #tpu.memory_space<vmem>>, vector<128x128xbf16>
      %cst_45 = arith.constant dense<0.000000e+00> : vector<8x128xf32>
      %58 = tpu.matmul %56, %57, %cst_45 {dimension_numbers = #tpu.dot_dimension_numbers<[0], [0], [1], [1], [0, 1, 1, 1], [], []>} : vector<128x8xbf16>, vector<128x128xbf16>, vector<8x128xf32> -> vector<8x128xf32>
      %c0_46 = arith.constant 0 : index
      %c0_47 = arith.constant 0 : index
      %59 = vector.load %arg10[%c0_46, %c0_47] : memref<1x128xf32, #tpu.memory_space<vmem>>, vector<1x128xf32>
      %60 = vector.broadcast %59 : vector<1x128xf32> to vector<8x128xf32>
      %61 = arith.addf %58, %60 : vector<8x128xf32>
      %62 = vector.shape_cast %61 : vector<8x128xf32> to vector<1x8x128xf32>
      %c0_48 = arith.constant 0 : index
      %c0_49 = arith.constant 0 : index
      %c0_50 = arith.constant 0 : index
      %63 = vector.load %arg11[%c0_48, %c0_49, %c0_50] : memref<1x8x128xf32, #tpu.memory_space<vmem>>, vector<1x8x128xf32>
      tpu.vector_store %arg11[%c0_48, %c0_49, %c0_50], %62 {strides = array<i32>} : memref<1x8x128xf32, #tpu.memory_space<vmem>>, vector<1x8x128xf32>,
    } else {
    }
    return
  }
  func.func @transform_0(%arg0: i32, %arg1: i32) -> (i32, i32, i32) {
    %c0_i32 = arith.constant 0 : i32
    %c0_i32_0 = arith.constant 0 : i32
    %c0_i32_1 = arith.constant 0 : i32
    return %arg0, %c0_i32, %c0_i32_0 : i32, i32, i32
  }
  func.func @transform_1(%arg0: i32, %arg1: i32) -> (i32, i32, i32) {
    %c0_i32 = arith.constant 0 : i32
    %c0_i32_0 = arith.constant 0 : i32
    return %arg0, %arg1, %c0_i32 : i32, i32, i32
  }
  func.func @transform_2(%arg0: i32, %arg1: i32) -> (i32, i32, i32) {
    %c0_i32 = arith.constant 0 : i32
    %c0_i32_0 = arith.constant 0 : i32
    return %arg0, %arg1, %c0_i32 : i32, i32, i32
  }
  func.func @transform_3(%arg0: i32, %arg1: i32) -> (i32, i32, i32, i32) {
    %c0_i32 = arith.constant 0 : i32
    %c0_i32_0 = arith.constant 0 : i32
    %c0_i32_1 = arith.constant 0 : i32
    return %arg0, %c0_i32, %c0_i32_0, %arg1 : i32, i32, i32, i32
  }
  func.func @transform_4(%arg0: i32, %arg1: i32) -> (i32, i32) {
    %c0_i32 = arith.constant 0 : i32
    %c0_i32_0 = arith.constant 0 : i32
    %c0_i32_1 = arith.constant 0 : i32
    return %c0_i32, %c0_i32_0 : i32, i32
  }
  func.func @transform_5(%arg0: i32, %arg1: i32) -> (i32, i32) {
    %c0_i32 = arith.constant 0 : i32
    %c0_i32_0 = arith.constant 0 : i32
    %c0_i32_1 = arith.constant 0 : i32
    return %c0_i32, %c0_i32_0 : i32, i32
  }
  func.func @transform_6(%arg0: i32, %arg1: i32) -> (i32, i32) {
    %c0_i32 = arith.constant 0 : i32
    %c0_i32_0 = arith.constant 0 : i32
    %c0_i32_1 = arith.constant 0 : i32
    return %c0_i32, %c0_i32_0 : i32, i32
  }
  func.func @transform_7(%arg0: i32, %arg1: i32) -> (i32, i32) {
    %c0_i32 = arith.constant 0 : i32
    %c0_i32_0 = arith.constant 0 : i32
    %c0_i32_1 = arith.constant 0 : i32
    return %c0_i32, %c0_i32_0 : i32, i32
  }
  func.func @transform_8(%arg0: i32, %arg1: i32) -> (i32, i32) {
    %c0_i32 = arith.constant 0 : i32
    %c0_i32_0 = arith.constant 0 : i32
    %c0_i32_1 = arith.constant 0 : i32
    return %c0_i32, %c0_i32_0 : i32, i32
  }
  func.func @transform_9(%arg0: i32, %arg1: i32) -> (i32, i32, i32) {
    %c0_i32 = arith.constant 0 : i32
    %c0_i32_0 = arith.constant 0 : i32
    %c0_i32_1 = arith.constant 0 : i32
    return %arg0, %c0_i32, %c0_i32_0 : i32, i32, i32
  }
}

</mosaic_0001>

<llo_original>
// kernel: tpu_custom_call.1
$region0: #{tpu_custom_call.1}
  #allocation0 [shape = 'u32[]', space=smem, size = 0x4, offset = 0x4, fixed_abs, tag = 'smem constant byte address 0x4 - core index']
  #allocation1 [shape = 'u32[144,128]{1,0:T(1,128)}', space=vmem, size = 0x12000, scoped, tag = 'internal scratch']
  #allocation2 [shape = 'bf16[8,16,8]{2,1,0:T(16,128)(2,1)}', space=vmem, size = 0x8000, scoped, tag = 'scratch operand']
  #allocation3 [shape = 'f32[8,8]{1,0:T(8,128)}', space=vmem, size = 0x1000, scoped, tag = 'scratch operand']
  #allocation4 [shape = 'f32[8,8]{1,0:T(8,128)}', space=vmem, size = 0x1000, scoped, tag = 'scratch operand']
  #allocation5 [shape = 'f32[8,16,8]{2,1,0:T(8,128)}', space=vmem, size = 0x10000, scoped, tag = 'scratch operand']
  %s0 = inlined_call_operand.hbm [shape: bf16[2,8,128], index: 0, kind: input, shape index: {}]
  %s1 = inlined_call_operand.hbm [shape: bf16[2,16,128], index: 1, kind: input, shape index: {}]
  %s2 = inlined_call_operand.hbm [shape: bf16[2,16,128], index: 2, kind: input, shape index: {}]
  %s3 = inlined_call_operand.vmem [shape: bf16[2,1,8,16], index: 3, kind: input, shape index: {}]
  %s4 = inlined_call_operand.hbm [shape: bf16[128,128], index: 4, kind: input, shape index: {}]
  %s5 = inlined_call_operand.hbm [shape: bf16[128,128], index: 5, kind: input, shape index: {}]
  %s6 = inlined_call_operand.hbm [shape: bf16[128,128], index: 6, kind: input, shape index: {}]
  %s7 = inlined_call_operand.hbm [shape: bf16[128,128], index: 7, kind: input, shape index: {}]
  %s8 = inlined_call_operand.vmem [shape: f32[1,128], index: 8, kind: input, shape index: {}]
  %s9 = inlined_call_operand.hbm [shape: f32[2,8,128], index: 9, kind: output, shape index: {}]
  %s10 = sld [smem:[#allocation0]]
  $region105: #{tpu_custom_call.1} parent=0
    _
  %s12 = ssub.s32 1, %s10
  %s13 = scalar_select 0, %s12, %s10
  $region1: #{tpu_custom_call.1} parent=0
    #allocation6 [shape = 'u8[4096]{0}', space=vmem, size = 0x1000, scoped, tag = 'input window, operand 0']
    #allocation7 [shape = 's32[2]{0}', space=sflag, size = 0x8, scoped, tag = 'scoped memory for tpu_custom_call.1']
    #allocation8 [shape = 's32[2]{0}', space=sflag, size = 0x8, scoped, tag = 'scoped memory for tpu_custom_call.1']
    #allocation9 [shape = 'u8[8192]{0}', space=vmem, size = 0x2000, scoped, tag = 'input window, operand 1']
    #allocation10 [shape = 's32[2]{0}', space=sflag, size = 0x8, scoped, tag = 'scoped memory for tpu_custom_call.1']
    #allocation11 [shape = 'u8[8192]{0}', space=vmem, size = 0x2000, scoped, tag = 'input window, operand 2']
    #allocation12 [shape = 'u8[32768]{0}', space=vmem, size = 0x8000, scoped, tag = 'input window, operand 4, single buffered']
    #allocation13 [shape = 's32[1]{0}', space=sflag, size = 0x4, scoped, tag = 'scoped memory for tpu_custom_call.1']
    #allocation14 [shape = 'u8[32768]{0}', space=vmem, size = 0x8000, scoped, tag = 'input window, operand 5, single buffered']
    #allocation15 [shape = 'u8[32768]{0}', space=vmem, size = 0x8000, scoped, tag = 'input window, operand 6, single buffered']
    #allocation16 [shape = 's32[1]{0}', space=sflag, size = 0x4, scoped, tag = 'scoped memory for tpu_custom_call.1']
    #allocation17 [shape = 'u8[32768]{0}', space=vmem, size = 0x8000, scoped, tag = 'input window, operand 7, single buffered']
    #allocation18 [shape = 'u8[8192]{0}', space=vmem, size = 0x2000, scoped, tag = 'output window, operand 0']
    %14 = vsyncpa [#allocation7], 0
    %s15 = scalar_lea.sflag [#allocation7], 1
    %16 = vsyncpa %s15, 0
    %17 = vsyncpa [#allocation10], 0
    %s18 = scalar_lea.sflag [#allocation10], 1
    %19 = vsyncpa %s18, 0
    %20 = vsyncpa [#allocation13], 0
    %21 = vsyncpa [#allocation16], 0
    %22 = vsyncpa [#allocation8], 0
    %s23 = scalar_lea.sflag [#allocation8], 1
    %24 = vsyncpa %s23, 0
    loop: start=0, step=1, limit=4
    $region2: #{tpu_custom_call.1} parent=1 // loop_pre_header
      _
    $region3: #{tpu_custom_call.1} parent=1 // loop_header
      %s26 = sphi 0, %s30
      %p27 = scmp.ge.s32.totalorder %s26, 4
      %s33 = sphi 0, %s45
      %s34 = sphi 0, %s41
      %s35 = sphi 0, %s33
      %s36 = sphi 0, %s34
      %s37 = sphi 0, %s35
      %s38 = sphi 0, %s36
      %s48 = sphi 0, %s50
      %s51 = sphi 0, %s48
      %s52 = sphi 0, %s51
      %s68 = sphi 0, %s52
      %s76 = sphi 0, %s78
      %s79 = sphi 0, %s76
      %s80 = sphi 0, %s79
      %s96 = sphi 0, %s80
      %s104 = sphi 0, %s106
      %s107 = sphi 0, %s104
      %s108 = sphi 0, %s107
      %s124 = sphi 0, %s108
      %s132 = sphi 0, %s134
      %s135 = sphi 0, %s132
      %s136 = sphi 0, %s135
      %s152 = sphi 0, %s136
      %s156 = sphi 0, %s156
      %s158 = sphi 0, %s156
      %s159 = sphi 0, %s158
      %s173 = sphi 0, %s159
      %s177 = sphi 0, %s177
      %s179 = sphi 0, %s177
      %s180 = sphi 0, %s179
      %s194 = sphi 0, %s180
      %s198 = sphi 0, %s198
      %s200 = sphi 0, %s198
      %s201 = sphi 0, %s200
      %s215 = sphi 0, %s201
      %s219 = sphi 0, %s219
      %s221 = sphi 0, %s219
      %s222 = sphi 0, %s221
      %s236 = sphi 0, %s222
      %s240 = sphi 0, %s240
      %s242 = sphi 0, %s240
      %s243 = sphi 0, %s242
      %s257 = sphi 0, %s243
      %s263 = sphi 0, %s265
      %s266 = sphi 0, %s263
      %s267 = sphi 0, %s266
      %s283 = sphi 0, %s267
    $region4: #{tpu_custom_call.1} parent=1 // loop_header_branch
      %29 = sbr.rel (%p27) target = $region8
    $region5: #{tpu_custom_call.1} parent=1 // loop_body
      %s31 = ssub.s32 %s26, 1
      %s32 = ssub.s32 %s26, 2
      %s39 = sadd.s32 1, %s34
      %p40 = scmp.ge.s32.totalorder %s39, 1
      %s41 = scalar_select %p40, 0, %s39
      %s42 = sadd.s32 1, %s33
      %s43 = scalar_select %p40, %s42, %s33
      %p44 = scmp.ge.s32.totalorder %s43, 2
      %s45 = scalar_select %p44, 0, %s43
      %s46 = ssub.s32 %s33, %s45
      %p47 = scmp.eq.s32.totalorder %s46, 0
      %s49 = sadd.s32 %s48, 1
      %s50 = scalar_select %p47, %s48, %s49
      %p53 = pneg %p47
      %p54 = scmp.eq.s32.totalorder %s26, 1
      %p55 = por %p53, %p54
      %p56 = scmp.ne.s32.totalorder %s48, %s51
      %p57 = scmp.eq.s32.totalorder %s26, 0
      %p58 = por %p56, %p57
      %p59 = scmp.ne.s32.totalorder %s48, %s51
      %p60 = scmp.eq.s32.totalorder %s31, 1
      %p61 = por %p59, %p60
      %p62 = scmp.ne.s32.totalorder %s51, %s52
      %p63 = scmp.eq.s32.totalorder %s31, 0
      %p64 = por %p62, %p63
      %p65 = scmp.ne.s32.totalorder %s51, %s52
      %p66 = scmp.eq.s32.totalorder %s32, 1
      %p67 = por %p65, %p66
      %p69 = scmp.ne.s32.totalorder %s52, %s68
      %p70 = scmp.eq.s32.totalorder %s32, 0
      %p71 = por %p69, %p70
      %s72 = ssub.s32 %s33, %s45
      %s73 = ssub.s32 %s34, %s41
      %s74 = sor.u32 %s72, %s73
      %p75 = scmp.eq.s32.totalorder %s74, 0
      %s77 = sadd.s32 %s76, 1
      %s78 = scalar_select %p75, %s76, %s77
      %p81 = pneg %p75
      %p82 = scmp.eq.s32.totalorder %s26, 1
      %p83 = por %p81, %p82
      %p84 = scmp.ne.s32.totalorder %s76, %s79
      %p85 = scmp.eq.s32.totalorder %s26, 0
      %p86 = por %p84, %p85
      %p87 = scmp.ne.s32.totalorder %s76, %s79
      %p88 = scmp.eq.s32.totalorder %s31, 1
      %p89 = por %p87, %p88
      %p90 = scmp.ne.s32.totalorder %s79, %s80
      %p91 = scmp.eq.s32.totalorder %s31, 0
      %p92 = por %p90, %p91
      %p93 = scmp.ne.s32.totalorder %s79, %s80
      %p94 = scmp.eq.s32.totalorder %s32, 1
      %p95 = por %p93, %p94
      %p97 = scmp.ne.s32.totalorder %s80, %s96
      %p98 = scmp.eq.s32.totalorder %s32, 0
      %p99 = por %p97, %p98
      %s100 = ssub.s32 %s33, %s45
      %s101 = ssub.s32 %s34, %s41
      %s102 = sor.u32 %s100, %s101
      %p103 = scmp.eq.s32.totalorder %s102, 0
      %s105 = sadd.s32 %s104, 1
      %s106 = scalar_select %p103, %s104, %s105
      %p109 = pneg %p103
      %p110 = scmp.eq.s32.totalorder %s26, 1
      %p111 = por %p109, %p110
      %p112 = scmp.ne.s32.totalorder %s104, %s107
      %p113 = scmp.eq.s32.totalorder %s26, 0
      %p114 = por %p112, %p113
      %p115 = scmp.ne.s32.totalorder %s104, %s107
      %p116 = scmp.eq.s32.totalorder %s31, 1
      %p117 = por %p115, %p116
      %p118 = scmp.ne.s32.totalorder %s107, %s108
      %p119 = scmp.eq.s32.totalorder %s31, 0
      %p120 = por %p118, %p119
      %p121 = scmp.ne.s32.totalorder %s107, %s108
      %p122 = scmp.eq.s32.totalorder %s32, 1
      %p123 = por %p121, %p122
      %p125 = scmp.ne.s32.totalorder %s108, %s124
      %p126 = scmp.eq.s32.totalorder %s32, 0
      %p127 = por %p125, %p126
      %s128 = ssub.s32 %s33, %s45
      %s129 = ssub.s32 %s34, %s41
      %s130 = sor.u32 %s128, %s129
      %p131 = scmp.eq.s32.totalorder %s130, 0
      %s133 = sadd.s32 %s132, 1
      %s134 = scalar_select %p131, %s132, %s133
      %p137 = pneg %p131
      %p138 = scmp.eq.s32.totalorder %s26, 1
      %p139 = por %p137, %p138
      %p140 = scmp.ne.s32.totalorder %s132, %s135
      %p141 = scmp.eq.s32.totalorder %s26, 0
      %p142 = por %p140, %p141
      %p143 = scmp.ne.s32.totalorder %s132, %s135
      %p144 = scmp.eq.s32.totalorder %s31, 1
      %p145 = por %p143, %p144
      %p146 = scmp.ne.s32.totalorder %s135, %s136
      %p147 = scmp.eq.s32.totalorder %s31, 0
      %p148 = por %p146, %p147
      %p149 = scmp.ne.s32.totalorder %s135, %s136
      %p150 = scmp.eq.s32.totalorder %s32, 1
      %p151 = por %p149, %p150
      %p153 = scmp.ne.s32.totalorder %s136, %s152
      %p154 = scmp.eq.s32.totalorder %s32, 0
      %p155 = por %p153, %p154
      %s157 = sadd.s32 %s156, 1
      %p160 = scmp.eq.s32.totalorder %s26, 1
      %p161 = scmp.ne.s32.totalorder %s156, %s158
      %p162 = scmp.eq.s32.totalorder %s26, 0
      %p163 = por %p161, %p162
      %p164 = scmp.ne.s32.totalorder %s156, %s158
      %p165 = scmp.eq.s32.totalorder %s31, 1
      %p166 = por %p164, %p165
      %p167 = scmp.ne.s32.totalorder %s158, %s159
      %p168 = scmp.eq.s32.totalorder %s31, 0
      %p169 = por %p167, %p168
      %p170 = scmp.ne.s32.totalorder %s158, %s159
      %p171 = scmp.eq.s32.totalorder %s32, 1
      %p172 = por %p170, %p171
      %p174 = scmp.ne.s32.totalorder %s159, %s173
      %p175 = scmp.eq.s32.totalorder %s32, 0
      %p176 = por %p174, %p175
      %s178 = sadd.s32 %s177, 1
      %p181 = scmp.eq.s32.totalorder %s26, 1
      %p182 = scmp.ne.s32.totalorder %s177, %s179
      %p183 = scmp.eq.s32.totalorder %s26, 0
      %p184 = por %p182, %p183
      %p185 = scmp.ne.s32.totalorder %s177, %s179
      %p186 = scmp.eq.s32.totalorder %s31, 1
      %p187 = por %p185, %p186
      %p188 = scmp.ne.s32.totalorder %s179, %s180
      %p189 = scmp.eq.s32.totalorder %s31, 0
      %p190 = por %p188, %p189
      %p191 = scmp.ne.s32.totalorder %s179, %s180
      %p192 = scmp.eq.s32.totalorder %s32, 1
      %p193 = por %p191, %p192
      %p195 = scmp.ne.s32.totalorder %s180, %s194
      %p196 = scmp.eq.s32.totalorder %s32, 0
      %p197 = por %p195, %p196
      %s199 = sadd.s32 %s198, 1
      %p202 = scmp.eq.s32.totalorder %s26, 1
      %p203 = scmp.ne.s32.totalorder %s198, %s200
      %p204 = scmp.eq.s32.totalorder %s26, 0
      %p205 = por %p203, %p204
      %p206 = scmp.ne.s32.totalorder %s198, %s200
      %p207 = scmp.eq.s32.totalorder %s31, 1
      %p208 = por %p206, %p207
      %p209 = scmp.ne.s32.totalorder %s200, %s201
      %p210 = scmp.eq.s32.totalorder %s31, 0
      %p211 = por %p209, %p210
      %p212 = scmp.ne.s32.totalorder %s200, %s201
      %p213 = scmp.eq.s32.totalorder %s32, 1
      %p214 = por %p212, %p213
      %p216 = scmp.ne.s32.totalorder %s201, %s215
      %p217 = scmp.eq.s32.totalorder %s32, 0
      %p218 = por %p216, %p217
      %s220 = sadd.s32 %s219, 1
      %p223 = scmp.eq.s32.totalorder %s26, 1
      %p224 = scmp.ne.s32.totalorder %s219, %s221
      %p225 = scmp.eq.s32.totalorder %s26, 0
      %p226 = por %p224, %p225
      %p227 = scmp.ne.s32.totalorder %s219, %s221
      %p228 = scmp.eq.s32.totalorder %s31, 1
      %p229 = por %p227, %p228
      %p230 = scmp.ne.s32.totalorder %s221, %s222
      %p231 = scmp.eq.s32.totalorder %s31, 0
      %p232 = por %p230, %p231
      %p233 = scmp.ne.s32.totalorder %s221, %s222
      %p234 = scmp.eq.s32.totalorder %s32, 1
      %p235 = por %p233, %p234
      %p237 = scmp.ne.s32.totalorder %s222, %s236
      %p238 = scmp.eq.s32.totalorder %s32, 0
      %p239 = por %p237, %p238
      %s241 = sadd.s32 %s240, 1
      %p244 = scmp.eq.s32.totalorder %s26, 1
      %p245 = scmp.ne.s32.totalorder %s240, %s242
      %p246 = scmp.eq.s32.totalorder %s26, 0
      %p247 = por %p245, %p246
      %p248 = scmp.ne.s32.totalorder %s240, %s242
      %p249 = scmp.eq.s32.totalorder %s31, 1
      %p250 = por %p248, %p249
      %p251 = scmp.ne.s32.totalorder %s242, %s243
      %p252 = scmp.eq.s32.totalorder %s31, 0
      %p253 = por %p251, %p252
      %p254 = scmp.ne.s32.totalorder %s242, %s243
      %p255 = scmp.eq.s32.totalorder %s32, 1
      %p256 = por %p254, %p255
      %p258 = scmp.ne.s32.totalorder %s243, %s257
      %p259 = scmp.eq.s32.totalorder %s32, 0
      %p260 = por %p258, %p259
      %s261 = ssub.s32 %s33, %s45
      %p262 = scmp.eq.s32.totalorder %s261, 0
      %s264 = sadd.s32 %s263, 1
      %s265 = scalar_select %p262, %s263, %s264
      %p268 = pneg %p262
      %p269 = scmp.eq.s32.totalorder %s26, 1
      %p270 = por %p268, %p269
      %p271 = scmp.ne.s32.totalorder %s263, %s266
      %p272 = scmp.eq.s32.totalorder %s26, 0
      %p273 = por %p271, %p272
      %p274 = scmp.ne.s32.totalorder %s263, %s266
      %p275 = scmp.eq.s32.totalorder %s31, 1
      %p276 = por %p274, %p275
      %p277 = scmp.ne.s32.totalorder %s266, %s267
      %p278 = scmp.eq.s32.totalorder %s31, 0
      %p279 = por %p277, %p278
      %p280 = scmp.ne.s32.totalorder %s266, %s267
      %p281 = scmp.eq.s32.totalorder %s32, 1
      %p282 = por %p280, %p281
      %p284 = scmp.ne.s32.totalorder %s267, %s283
      %p285 = scmp.eq.s32.totalorder %s32, 0
      %p286 = por %p284, %p285
      %p287 = scmp.le.s32.totalorder 1, %s26
      %p288 = scmp.lt.s32.totalorder %s26, 3
      %p289 = pnand %p287, %p288
      %p290 = pneg %p289
      // Predicated region
      $region9: #{tpu_custom_call.1} parent=5 // pred_check
        _
      $region10: #{tpu_custom_call.1} parent=5 // pred_check_branch
        %292 = sbr.rel (%p289) target = $region12
      $region11: #{tpu_custom_call.1} parent=5 // pred_region
        %s293 = ssub.s32 %s26, 1
        // Predicated region
        $region13: #{tpu_custom_call.1} parent=11 // pred_check
          %p294 = pneg %p169
        $region14: #{tpu_custom_call.1} parent=11 // pred_check_branch
          %296 = sbr.rel (%p294) target = $region16
        $region15: #{tpu_custom_call.1} parent=11 // pred_region
          %s298 = ssub.s32 1024, 1024
          %299 = vsyncadd [#allocation13], %s298
          %s300 = sshll.u32 [#allocation12], 4
          %s301 = int_to_ptr.vmem [resolvable:$true] %s300
          %306 = dma.hbm_to_vmem [thread:$0]  %s4, 1024, %s301, [#allocation13], 64, 64, 4
        $region16: #{tpu_custom_call.1} parent=11 // pred_fallthru
          _
        // Predicated region
        $region17: #{tpu_custom_call.1} parent=11 // pred_check
          %p307 = pneg %p190
        $region18: #{tpu_custom_call.1} parent=11 // pred_check_branch
          %309 = sbr.rel (%p307) target = $region20
        $region19: #{tpu_custom_call.1} parent=11 // pred_region
          %s311 = ssub.s32 1024, 1024
          %312 = vsyncadd [#allocation13], %s311
          %s313 = sshll.u32 [#allocation14], 4
          %s314 = int_to_ptr.vmem [resolvable:$true] %s313
          %319 = dma.hbm_to_vmem [thread:$0]  %s5, 1024, %s314, [#allocation13], 64, 64, 4
        $region20: #{tpu_custom_call.1} parent=11 // pred_fallthru
          _
        // Predicated region
        $region21: #{tpu_custom_call.1} parent=11 // pred_check
          %p320 = pneg %p211
        $region22: #{tpu_custom_call.1} parent=11 // pred_check_branch
          %322 = sbr.rel (%p320) target = $region24
        $region23: #{tpu_custom_call.1} parent=11 // pred_region
          %s324 = ssub.s32 1024, 1024
          %325 = vsyncadd [#allocation16], %s324
          %s326 = sshll.u32 [#allocation15], 4
          %s327 = int_to_ptr.vmem [resolvable:$true] %s326
          %332 = dma.hbm_to_vmem [thread:$0]  %s6, 1024, %s327, [#allocation16], 64, 64, 4
        $region24: #{tpu_custom_call.1} parent=11 // pred_fallthru
          _
        // Predicated region
        $region25: #{tpu_custom_call.1} parent=11 // pred_check
          %p333 = pneg %p232
        $region26: #{tpu_custom_call.1} parent=11 // pred_check_branch
          %335 = sbr.rel (%p333) target = $region28
        $region27: #{tpu_custom_call.1} parent=11 // pred_region
          %s337 = ssub.s32 1024, 1024
          %338 = vsyncadd [#allocation16], %s337
          %s339 = sshll.u32 [#allocation17], 4
          %s340 = int_to_ptr.vmem [resolvable:$true] %s339
          %345 = dma.hbm_to_vmem [thread:$0]  %s7, 1024, %s340, [#allocation16], 64, 64, 4
        $region28: #{tpu_custom_call.1} parent=11 // pred_fallthru
          _
        // Predicated region
        $region29: #{tpu_custom_call.1} parent=11 // pred_check
          %p346 = pneg %p253
        $region30: #{tpu_custom_call.1} parent=11 // pred_check_branch
          %348 = sbr.rel (%p346) target = $region32
        $region31: #{tpu_custom_call.1} parent=11 // pred_region
          _
        $region32: #{tpu_custom_call.1} parent=11 // pred_fallthru
          _
      $region12: #{tpu_custom_call.1} parent=5 // pred_fallthru
        _
      %p349 = scmp.lt.s32.totalorder %s26, 2
      // Predicated region
      $region33: #{tpu_custom_call.1} parent=5 // pred_check
        %p350 = pneg %p349
      $region34: #{tpu_custom_call.1} parent=5 // pred_check_branch
        %352 = sbr.rel (%p350) target = $region36
      $region35: #{tpu_custom_call.1} parent=5 // pred_region
        // Predicated region
        $region37: #{tpu_custom_call.1} parent=35 // pred_check
          %p353 = pneg %p58
        $region38: #{tpu_custom_call.1} parent=35 // pred_check_branch
          %355 = sbr.rel (%p353) target = $region40
        $region39: #{tpu_custom_call.1} parent=35 // pred_region
          %s356 = sand.u32 %s48, 1
          %s357 = scalar_lea.sflag [#allocation7], %s356
          %s358 = sand.u32 %s48, 1
          %s359 = smul.addr %s358, 4
          %s360 = scalar_lea.vmem [#allocation6], %s359
          %s362 = ssub.s32 64, 64
          %363 = vsyncadd %s357, %s362
          %s364 = smul.addr %s33, 64
          %s365 = scalar_lea.hbm %s0, %s364
          %s367 = sshll.u32 %s360, 4
          %s368 = int_to_ptr.vmem [resolvable:$true] %s367
          %370 = dma.hbm_to_vmem [thread:$0]  %s365, 64, %s368, %s357
        $region40: #{tpu_custom_call.1} parent=35 // pred_fallthru
          _
        // Predicated region
        $region41: #{tpu_custom_call.1} parent=35 // pred_check
          %p371 = pneg %p86
        $region42: #{tpu_custom_call.1} parent=35 // pred_check_branch
          %373 = sbr.rel (%p371) target = $region44
        $region43: #{tpu_custom_call.1} parent=35 // pred_region
          %s374 = sand.u32 %s26, 1
          %s375 = scalar_lea.sflag [#allocation10], %s374
          %s376 = sand.u32 %s76, 1
          %s377 = smul.addr %s376, 8
          %s378 = scalar_lea.vmem [#allocation9], %s377
          %s379 = smul.u32 2, %s34
          %s381 = ssub.s32 128, 128
          %382 = vsyncadd %s375, %s381
          %s383 = smul.addr %s33, 2
          %s384 = sadd.s32 %s379, %s383
          %s385 = smul.addr %s384, 64
          %s386 = scalar_lea.hbm %s1, %s385
          %s387 = sshll.u32 %s378, 4
          %s388 = int_to_ptr.vmem [resolvable:$true] %s387
          %393 = dma.hbm_to_vmem [thread:$0]  %s386, 128, %s388, %s375, 64, 64, 4
        $region44: #{tpu_custom_call.1} parent=35 // pred_fallthru
          _
        // Predicated region
        $region45: #{tpu_custom_call.1} parent=35 // pred_check
          %p394 = pneg %p114
        $region46: #{tpu_custom_call.1} parent=35 // pred_check_branch
          %396 = sbr.rel (%p394) target = $region48
        $region47: #{tpu_custom_call.1} parent=35 // pred_region
          %s397 = sand.u32 %s26, 1
          %s398 = scalar_lea.sflag [#allocation10], %s397
          %s399 = sand.u32 %s104, 1
          %s400 = smul.addr %s399, 8
          %s401 = scalar_lea.vmem [#allocation11], %s400
          %s402 = smul.u32 2, %s34
          %s404 = ssub.s32 128, 128
          %405 = vsyncadd %s398, %s404
          %s406 = smul.addr %s33, 2
          %s407 = sadd.s32 %s402, %s406
          %s408 = smul.addr %s407, 64
          %s409 = scalar_lea.hbm %s2, %s408
          %s410 = sshll.u32 %s401, 4
          %s411 = int_to_ptr.vmem [resolvable:$true] %s410
          %416 = dma.hbm_to_vmem [thread:$0]  %s409, 128, %s411, %s398, 64, 64, 4
        $region48: #{tpu_custom_call.1} parent=35 // pred_fallthru
          _
        // Predicated region
        $region49: #{tpu_custom_call.1} parent=35 // pred_check
          %p417 = pneg %p142
        $region50: #{tpu_custom_call.1} parent=35 // pred_check_branch
          %419 = sbr.rel (%p417) target = $region52
        $region51: #{tpu_custom_call.1} parent=35 // pred_region
          %p420 = scmp.lt.s32.totalorder %s33, 1
          %s421 = scalar_select %p420, %s33, 1
          %p422 = scmp.lt.s32.totalorder %s34, 0
          %s423 = scalar_select %p422, %s34, 0
          %s424 = sadd.s32 %s423, %s421
          %s425 = smul.addr %s424, 4
          %s426 = scalar_lea.vmem %s3, %s425
        $region52: #{tpu_custom_call.1} parent=35 // pred_fallthru
          _
      $region36: #{tpu_custom_call.1} parent=5 // pred_fallthru
        _
      %p427 = scmp.le.s32.totalorder 1, %s26
      %p428 = scmp.lt.s32.totalorder %s26, 3
      %p429 = pnand %p427, %p428
      %p430 = pneg %p429
      // Predicated region
      $region53: #{tpu_custom_call.1} parent=5 // pred_check
        _
      $region54: #{tpu_custom_call.1} parent=5 // pred_check_branch
        %432 = sbr.rel (%p429) target = $region56
      $region55: #{tpu_custom_call.1} parent=5 // pred_region
        %s433 = ssub.s32 %s26, 1
        %s434 = sand.u32 %s51, 1
        %s435 = scalar_lea.sflag [#allocation7], %s434
        %s436 = sand.u32 %s51, 1
        %s437 = smul.addr %s436, 4
        %s438 = scalar_lea.vmem [#allocation6], %s437
        // Predicated region
        $region57: #{tpu_custom_call.1} parent=55 // pred_check
          %p439 = pneg %p64
        $region58: #{tpu_custom_call.1} parent=55 // pred_check_branch
          %441 = sbr.rel (%p439) target = $region60
        $region59: #{tpu_custom_call.1} parent=55 // pred_region
          %442 = dma.done %s435, 64
        $region60: #{tpu_custom_call.1} parent=55 // pred_fallthru
          _
        %s443 = sand.u32 %s31, 1
        %s444 = scalar_lea.sflag [#allocation10], %s443
        %s445 = sand.u32 %s79, 1
        %s446 = smul.addr %s445, 8
        %s447 = scalar_lea.vmem [#allocation9], %s446
        // Predicated region
        $region61: #{tpu_custom_call.1} parent=55 // pred_check
          %p448 = pneg %p92
        $region62: #{tpu_custom_call.1} parent=55 // pred_check_branch
          %450 = sbr.rel (%p448) target = $region64
        $region63: #{tpu_custom_call.1} parent=55 // pred_region
          %451 = dma.done %s444, 128
        $region64: #{tpu_custom_call.1} parent=55 // pred_fallthru
          _
        %s452 = sand.u32 %s31, 1
        %s453 = scalar_lea.sflag [#allocation10], %s452
        %s454 = sand.u32 %s107, 1
        %s455 = smul.addr %s454, 8
        %s456 = scalar_lea.vmem [#allocation11], %s455
        // Predicated region
        $region65: #{tpu_custom_call.1} parent=55 // pred_check
          %p457 = pneg %p120
        $region66: #{tpu_custom_call.1} parent=55 // pred_check_branch
          %459 = sbr.rel (%p457) target = $region68
        $region67: #{tpu_custom_call.1} parent=55 // pred_region
          %460 = dma.done %s453, 128
        $region68: #{tpu_custom_call.1} parent=55 // pred_fallthru
          _
        // Predicated region
        $region69: #{tpu_custom_call.1} parent=55 // pred_check
          %p461 = pneg %p169
        $region70: #{tpu_custom_call.1} parent=55 // pred_check_branch
          %463 = sbr.rel (%p461) target = $region72
        $region71: #{tpu_custom_call.1} parent=55 // pred_region
          %464 = dma.done [#allocation13], 1024
        $region72: #{tpu_custom_call.1} parent=55 // pred_fallthru
          _
        // Predicated region
        $region73: #{tpu_custom_call.1} parent=55 // pred_check
          %p465 = pneg %p190
        $region74: #{tpu_custom_call.1} parent=55 // pred_check_branch
          %467 = sbr.rel (%p465) target = $region76
        $region75: #{tpu_custom_call.1} parent=55 // pred_region
          %468 = dma.done [#allocation13], 1024
        $region76: #{tpu_custom_call.1} parent=55 // pred_fallthru
          _
        // Predicated region
        $region77: #{tpu_custom_call.1} parent=55 // pred_check
          %p469 = pneg %p211
        $region78: #{tpu_custom_call.1} parent=55 // pred_check_branch
          %471 = sbr.rel (%p469) target = $region80
        $region79: #{tpu_custom_call.1} parent=55 // pred_region
          %472 = dma.done [#allocation16], 1024
        $region80: #{tpu_custom_call.1} parent=55 // pred_fallthru
          _
        // Predicated region
        $region81: #{tpu_custom_call.1} parent=55 // pred_check
          %p473 = pneg %p232
        $region82: #{tpu_custom_call.1} parent=55 // pred_check_branch
          %475 = sbr.rel (%p473) target = $region84
        $region83: #{tpu_custom_call.1} parent=55 // pred_region
          %476 = dma.done [#allocation16], 1024
        $region84: #{tpu_custom_call.1} parent=55 // pred_fallthru
          _
        %s477 = sand.u32 %s51, 1
        %s478 = scalar_lea.sflag [#allocation7], %s477
        %s479 = sand.u32 %s51, 1
        %s480 = smul.addr %s479, 4
        %s481 = scalar_lea.vmem [#allocation6], %s480
        %p482 = pneg %p64
        %p483 = pneg %p61
        %s484 = sand.u32 %s31, 1
        %s485 = scalar_lea.sflag [#allocation10], %s484
        %s486 = sand.u32 %s79, 1
        %s487 = smul.addr %s486, 8
        %s488 = scalar_lea.vmem [#allocation9], %s487
        %p489 = pneg %p92
        %p490 = pneg %p89
        %s491 = sand.u32 %s31, 1
        %s492 = scalar_lea.sflag [#allocation10], %s491
        %s493 = sand.u32 %s107, 1
        %s494 = smul.addr %s493, 8
        %s495 = scalar_lea.vmem [#allocation11], %s494
        %p496 = pneg %p120
        %p497 = pneg %p117
        %p498 = scmp.lt.s32.totalorder %s35, 1
        %s499 = scalar_select %p498, %s35, 1
        %p500 = scmp.lt.s32.totalorder %s36, 0
        %s501 = scalar_select %p500, %s36, 0
        %s502 = sadd.s32 %s501, %s499
        %s503 = smul.addr %s502, 4
        %s504 = scalar_lea.vmem %s3, %s503
        %p505 = pneg %p148
        %p506 = pneg %p145
        %p507 = pneg %p169
        %p508 = pneg %p166
        %p509 = pneg %p190
        %p510 = pneg %p187
        %p511 = pneg %p211
        %p512 = pneg %p208
        %p513 = pneg %p232
        %p514 = pneg %p229
        %p515 = pneg %p253
        %p516 = pneg %p250
        %p517 = pneg %p279
        %p518 = pneg %p276
        %s519 = sand.u32 %s266, 1
        %s520 = scalar_lea.sflag [#allocation8], %s519
        %s521 = sand.u32 %s266, 1
        %s522 = smul.addr %s521, 8
        %s523 = scalar_lea.vmem [#allocation18], %s522
        %s524 = smul.u32 2, %s36
        %s525 = smul.u32 2, %s36
        %p526 = scmp.lt.s32.totalorder %s35, 1
        %s527 = scalar_select %p526, %s35, 1
        %p528 = scmp.lt.s32.totalorder %s36, 0
        %s529 = scalar_select %p528, %s36, 0
        %s530 = sadd.s32 %s529, %s527
        %s531 = smul.addr %s530, 4
        %s532 = scalar_lea.vmem %s3, %s531
        %p534 = scmp.eq.s32.totalorder %s36, 0
        // Predicated region
        $region85: #{tpu_custom_call.1} parent=55 // pred_check
          %p535 = pneg %p534
        $region86: #{tpu_custom_call.1} parent=55 // pred_check_branch
          %537 = sbr.rel (%p535) target = $region88
        $region87: #{tpu_custom_call.1} parent=55 // pred_region
          %v538 = vld [vmem:[%s438] sm:$0xf]
          %v539 = vld [vmem:[#allocation12] sm:$0xf]
          %v540 = vld [vmem:[#allocation12 + $0x4] sm:$0xf]
          %v541 = vld [vmem:[#allocation12 + $0x8] sm:$0xf]
          %v542 = vld [vmem:[#allocation12 + $0xc] sm:$0xf]
          %v543 = vld [vmem:[#allocation12 + $0x10] sm:$0xf]
          %v544 = vld [vmem:[#allocation12 + $0x14] sm:$0xf]
          %v545 = vld [vmem:[#allocation12 + $0x18] sm:$0xf]
          %v546 = vld [vmem:[#allocation12 + $0x1c] sm:$0xf]
          %v547 = vld [vmem:[#allocation12 + $0x20] sm:$0xf]
          %v548 = vld [vmem:[#allocation12 + $0x24] sm:$0xf]
          %v549 = vld [vmem:[#allocation12 + $0x28] sm:$0xf]
          %v550 = vld [vmem:[#allocation12 + $0x2c] sm:$0xf]
          %v551 = vld [vmem:[#allocation12 + $0x30] sm:$0xf]
          %v552 = vld [vmem:[#allocation12 + $0x34] sm:$0xf]
          %v553 = vld [vmem:[#allocation12 + $0x38] sm:$0xf]
          %v554 = vld [vmem:[#allocation12 + $0x3c] sm:$0xf]
          %v571 = vunpack.c.l.b16 %v539
          %v572 = vunpack.c.l.b16 %v540
          %v573 = vunpack.c.l.b16 %v541
          %v574 = vunpack.c.l.b16 %v542
          %v575 = vunpack.c.l.b16 %v543
          %v576 = vunpack.c.l.b16 %v544
          %v577 = vunpack.c.l.b16 %v545
          %v578 = vunpack.c.l.b16 %v546
          %v579 = vunpack.c.l.b16 %v547
          %v580 = vunpack.c.l.b16 %v548
          %v581 = vunpack.c.l.b16 %v549
          %v582 = vunpack.c.l.b16 %v550
          %v583 = vunpack.c.l.b16 %v551
          %v584 = vunpack.c.l.b16 %v552
          %v585 = vunpack.c.l.b16 %v553
          %v586 = vunpack.c.l.b16 %v554
          %v587 = vpack.c.b16 %v572, %v571
          %v588 = vpack.c.b16 %v574, %v573
          %v589 = vpack.c.b16 %v576, %v575
          %v590 = vpack.c.b16 %v578, %v577
          %v591 = vpack.c.b16 %v580, %v579
          %v592 = vpack.c.b16 %v582, %v581
          %v593 = vpack.c.b16 %v584, %v583
          %v594 = vpack.c.b16 %v586, %v585
          %603 = vmatprep.subr.bf16.mxu0 0
          %604 = vmatpush1.bf16.xpose.msra.mxu0 %v538
          %605 = vmatprep.subr.bf16.mxu0 0
          %606 = vmatpush1.bf16.xpose.msra.mxu0 0
          %607 = vmatprep.subr.bf16.mxu0 0
          %608 = vmatpush1.bf16.xpose.msra.mxu0 0
          %609 = vmatprep.subr.bf16.mxu0 0
          %610 = vmatpush1.bf16.xpose.msra.mxu0 0
          %611 = vmatprep.subr.bf16.mxu0 0
          %612 = vmatpush1.bf16.xpose.msra.mxu0 0
          %613 = vmatprep.subr.bf16.mxu0 0
          %614 = vmatpush1.bf16.xpose.msra.mxu0 0
          %615 = vmatprep.subr.bf16.mxu0 0
          %616 = vmatpush1.bf16.xpose.msra.mxu0 0
          %617 = vmatprep.subr.bf16.mxu0 0
          %618 = vmatpush1.bf16.xpose.msra.mxu0 0
          %619 = vmatprep.subr.bf16.mxu0 0
          %620 = vmatpush1.bf16.xpose.msra.mxu0 0
          %621 = vmatprep.subr.bf16.mxu0 0
          %622 = vmatpush1.bf16.xpose.msra.mxu0 0
          %623 = vmatprep.subr.bf16.mxu0 0
          %624 = vmatpush1.bf16.xpose.msra.mxu0 0
          %625 = vmatprep.subr.bf16.mxu0 0
          %626 = vmatpush1.bf16.xpose.msra.mxu0 0
          %627 = vmatprep.subr.bf16.mxu0 0
          %628 = vmatpush1.bf16.xpose.msra.mxu0 0
          %629 = vmatprep.subr.bf16.mxu0 0
          %630 = vmatpush1.bf16.xpose.msra.mxu0 0
          %631 = vmatprep.subr.bf16.mxu0 0
          %632 = vmatpush1.bf16.xpose.msra.mxu0 0
          %633 = vmatprep.subr.bf16.mxu0 0
          %634 = vmatpush1.bf16.xpose.msra.mxu0 0
          %635 = vmatprep.mubr.bf16.mxu0 0
          %636 = vmatmul.mubr.bf16.gmra.mrb[0].mxu0 %v587
          %v637 = vpop.f32.mrb[0].mxu0
          %v638 = vadd.f32 0.0, %v637
          %v639 = vpop.f32.mrb[0].mxu0
          %v640 = vpop.f32.mrb[0].mxu0
          %v641 = vadd.f32 0.0, %v640
          %v642 = vpop.f32.mrb[0].mxu0
          %643 = vmatprep.mubr.bf16.mxu0 0
          %644 = vmatmul.mubr.bf16.gmra.mrb[0].mxu0 %v588
          %v645 = vpop.f32.mrb[0].mxu0
          %v646 = vadd.f32 0.0, %v645
          %v647 = vpop.f32.mrb[0].mxu0
          %v648 = vpop.f32.mrb[0].mxu0
          %v649 = vadd.f32 0.0, %v648
          %v650 = vpop.f32.mrb[0].mxu0
          %651 = vmatprep.mubr.bf16.mxu0 0
          %652 = vmatmul.mubr.bf16.gmra.mrb[0].mxu0 %v589
          %v653 = vpop.f32.mrb[0].mxu0
          %v654 = vadd.f32 0.0, %v653
          %v655 = vpop.f32.mrb[0].mxu0
          %v656 = vpop.f32.mrb[0].mxu0
          %v657 = vadd.f32 0.0, %v656
          %v658 = vpop.f32.mrb[0].mxu0
          %659 = vmatprep.mubr.bf16.mxu0 0
          %660 = vmatmul.mubr.bf16.gmra.mrb[0].mxu0 %v590
          %v661 = vpop.f32.mrb[0].mxu0
          %v662 = vadd.f32 0.0, %v661
          %v663 = vpop.f32.mrb[0].mxu0
          %v664 = vpop.f32.mrb[0].mxu0
          %v665 = vadd.f32 0.0, %v664
          %v666 = vpop.f32.mrb[0].mxu0
          %667 = vmatprep.mubr.bf16.mxu0 0
          %668 = vmatmul.mubr.bf16.gmra.mrb[0].mxu0 %v591
          %v669 = vpop.f32.mrb[0].mxu0
          %v670 = vadd.f32 0.0, %v669
          %v671 = vpop.f32.mrb[0].mxu0
          %v672 = vpop.f32.mrb[0].mxu0
          %v673 = vadd.f32 0.0, %v672
          %v674 = vpop.f32.mrb[0].mxu0
          %675 = vmatprep.mubr.bf16.mxu0 0
          %676 = vmatmul.mubr.bf16.gmra.mrb[0].mxu0 %v592
          %v677 = vpop.f32.mrb[0].mxu0
          %v678 = vadd.f32 0.0, %v677
          %v679 = vpop.f32.mrb[0].mxu0
          %v680 = vpop.f32.mrb[0].mxu0
          %v681 = vadd.f32 0.0, %v680
          %v682 = vpop.f32.mrb[0].mxu0
          %683 = vmatprep.mubr.bf16.mxu0 0
          %684 = vmatmul.mubr.bf16.gmra.mrb[0].mxu0 %v593
          %v685 = vpop.f32.mrb[0].mxu0
          %v686 = vadd.f32 0.0, %v685
          %v687 = vpop.f32.mrb[0].mxu0
          %v688 = vpop.f32.mrb[0].mxu0
          %v689 = vadd.f32 0.0, %v688
          %v690 = vpop.f32.mrb[0].mxu0
          %691 = vmatprep.mubr.bf16.mxu0 0
          %692 = vmatmul.mubr.bf16.gmra.mrb[0].mxu0 %v594
          %v693 = vpop.f32.mrb[0].mxu0
          %v694 = vadd.f32 0.0, %v693
          %v695 = vpop.f32.mrb[0].mxu0
          %v696 = vpop.f32.mrb[0].mxu0
          %v697 = vadd.f32 0.0, %v696
          %v698 = vpop.f32.mrb[0].mxu0
          %699 = vdwg.mxu0
          %v700 = vpack.c.bf16 %v641, %v638
          %v701 = vpack.c.bf16 %v649, %v646
          %v702 = vpack.c.bf16 %v657, %v654
          %v703 = vpack.c.bf16 %v665, %v662
          %v704 = vpack.c.bf16 %v673, %v670
          %v705 = vpack.c.bf16 %v681, %v678
          %v706 = vpack.c.bf16 %v689, %v686
          %v707 = vpack.c.bf16 %v697, %v694
          %vm708 = vcmask 64512
          %709 = vst.msk [vmem:[#allocation2] sm:$0xff] %vm708, %v700
          %710 = vst.msk [vmem:[#allocation2 + $0x8] sm:$0xff] %vm708, %v701
          %711 = vst.msk [vmem:[#allocation2 + $0x10] sm:$0xff] %vm708, %v702
          %712 = vst.msk [vmem:[#allocation2 + $0x18] sm:$0xff] %vm708, %v703
          %713 = vst.msk [vmem:[#allocation2 + $0x20] sm:$0xff] %vm708, %v704
          %714 = vst.msk [vmem:[#allocation2 + $0x28] sm:$0xff] %vm708, %v705
          %715 = vst.msk [vmem:[#allocation2 + $0x30] sm:$0xff] %vm708, %v706
          %716 = vst.msk [vmem:[#allocation2 + $0x38] sm:$0xff] %vm708, %v707
          %717 = vst.msk [vmem:[#allocation3] sm:$0xff] %vm708, -inf
          %718 = vst.msk [vmem:[#allocation4] sm:$0xff] %vm708, 0.0
          %719 = vst.msk [vmem:[#allocation5] sm:$0xff] %vm708, 0.0
          %720 = vst.msk [vmem:[#allocation5 + $0x8] sm:$0xff] %vm708, 0.0
          %721 = vst.msk [vmem:[#allocation5 + $0x10] sm:$0xff] %vm708, 0.0
          %722 = vst.msk [vmem:[#allocation5 + $0x18] sm:$0xff] %vm708, 0.0
          %723 = vst.msk [vmem:[#allocation5 + $0x20] sm:$0xff] %vm708, 0.0
          %724 = vst.msk [vmem:[#allocation5 + $0x28] sm:$0xff] %vm708, 0.0
          %725 = vst.msk [vmem:[#allocation5 + $0x30] sm:$0xff] %vm708, 0.0
          %726 = vst.msk [vmem:[#allocation5 + $0x38] sm:$0xff] %vm708, 0.0
          %727 = vst.msk [vmem:[#allocation5 + $0x40] sm:$0xff] %vm708, 0.0
          %728 = vst.msk [vmem:[#allocation5 + $0x48] sm:$0xff] %vm708, 0.0
          %729 = vst.msk [vmem:[#allocation5 + $0x50] sm:$0xff] %vm708, 0.0
          %730 = vst.msk [vmem:[#allocation5 + $0x58] sm:$0xff] %vm708, 0.0
          %731 = vst.msk [vmem:[#allocation5 + $0x60] sm:$0xff] %vm708, 0.0
          %732 = vst.msk [vmem:[#allocation5 + $0x68] sm:$0xff] %vm708, 0.0
          %733 = vst.msk [vmem:[#allocation5 + $0x70] sm:$0xff] %vm708, 0.0
          %734 = vst.msk [vmem:[#allocation5 + $0x78] sm:$0xff] %vm708, 0.0
        $region88: #{tpu_custom_call.1} parent=55 // pred_fallthru
          _
        %v735 = vld [vmem:[%s447] sm:$0xf]
        %v736 = vld [vmem:[%s447 + $0x4] sm:$0xf]
        %v737 = vld [vmem:[%s456] sm:$0xf]
        %v738 = vld [vmem:[%s456 + $0x4] sm:$0xf]
        %v739 = vld [vmem:[#allocation14] sm:$0xf]
        %v740 = vld [vmem:[#allocation14 + $0x4] sm:$0xf]
        %v741 = vld [vmem:[#allocation14 + $0x8] sm:$0xf]
        %v742 = vld [vmem:[#allocation14 + $0xc] sm:$0xf]
        %v743 = vld [vmem:[#allocation14 + $0x10] sm:$0xf]
        %v744 = vld [vmem:[#allocation14 + $0x14] sm:$0xf]
        %v745 = vld [vmem:[#allocation14 + $0x18] sm:$0xf]
        %v746 = vld [vmem:[#allocation14 + $0x1c] sm:$0xf]
        %v747 = vld [vmem:[#allocation14 + $0x20] sm:$0xf]
        %v748 = vld [vmem:[#allocation14 + $0x24] sm:$0xf]
        %v749 = vld [vmem:[#allocation14 + $0x28] sm:$0xf]
        %v750 = vld [vmem:[#allocation14 + $0x2c] sm:$0xf]
        %v751 = vld [vmem:[#allocation14 + $0x30] sm:$0xf]
        %v752 = vld [vmem:[#allocation14 + $0x34] sm:$0xf]
        %v753 = vld [vmem:[#allocation14 + $0x38] sm:$0xf]
        %v754 = vld [vmem:[#allocation14 + $0x3c] sm:$0xf]
        %v771 = vunpack.c.l.b16 %v739
        %v772 = vunpack.c.l.b16 %v740
        %v773 = vunpack.c.l.b16 %v741
        %v774 = vunpack.c.l.b16 %v742
        %v775 = vunpack.c.l.b16 %v743
        %v776 = vunpack.c.l.b16 %v744
        %v777 = vunpack.c.l.b16 %v745
        %v778 = vunpack.c.l.b16 %v746
        %v779 = vunpack.c.l.b16 %v747
        %v780 = vunpack.c.l.b16 %v748
        %v781 = vunpack.c.l.b16 %v749
        %v782 = vunpack.c.l.b16 %v750
        %v783 = vunpack.c.l.b16 %v751
        %v784 = vunpack.c.l.b16 %v752
        %v785 = vunpack.c.l.b16 %v753
        %v786 = vunpack.c.l.b16 %v754
        %v787 = vpack.c.b16 %v772, %v771
        %v788 = vpack.c.b16 %v774, %v773
        %v789 = vpack.c.b16 %v776, %v775
        %v790 = vpack.c.b16 %v778, %v777
        %v791 = vpack.c.b16 %v780, %v779
        %v792 = vpack.c.b16 %v782, %v781
        %v793 = vpack.c.b16 %v784, %v783
        %v794 = vpack.c.b16 %v786, %v785
        %v805 = vunpack.c.l.b16 %v735
        %v806 = vunpack.c.l.b16 %v736
        %v807 = vpack.c.b16 %v806, %v805
        %809 = vmatprep.subr.bf16.mxu0 0
        %810 = vmatpush1.bf16.xpose.msra.mxu0 %v807
        %811 = vmatprep.subr.bf16.mxu0 0
        %812 = vmatpush1.bf16.xpose.msra.mxu0 0
        %813 = vmatprep.subr.bf16.mxu0 0
        %814 = vmatpush1.bf16.xpose.msra.mxu0 0
        %815 = vmatprep.subr.bf16.mxu0 0
        %816 = vmatpush1.bf16.xpose.msra.mxu0 0
        %817 = vmatprep.subr.bf16.mxu0 0
        %818 = vmatpush1.bf16.xpose.msra.mxu0 0
        %819 = vmatprep.subr.bf16.mxu0 0
        %820 = vmatpush1.bf16.xpose.msra.mxu0 0
        %821 = vmatprep.subr.bf16.mxu0 0
        %822 = vmatpush1.bf16.xpose.msra.mxu0 0
        %823 = vmatprep.subr.bf16.mxu0 0
        %824 = vmatpush1.bf16.xpose.msra.mxu0 0
        %825 = vmatprep.subr.bf16.mxu0 0
        %826 = vmatpush1.bf16.xpose.msra.mxu0 0
        %827 = vmatprep.subr.bf16.mxu0 0
        %828 = vmatpush1.bf16.xpose.msra.mxu0 0
        %829 = vmatprep.subr.bf16.mxu0 0
        %830 = vmatpush1.bf16.xpose.msra.mxu0 0
        %831 = vmatprep.subr.bf16.mxu0 0
        %832 = vmatpush1.bf16.xpose.msra.mxu0 0
        %833 = vmatprep.subr.bf16.mxu0 0
        %834 = vmatpush1.bf16.xpose.msra.mxu0 0
        %835 = vmatprep.subr.bf16.mxu0 0
        %836 = vmatpush1.bf16.xpose.msra.mxu0 0
        %837 = vmatprep.subr.bf16.mxu0 0
        %838 = vmatpush1.bf16.xpose.msra.mxu0 0
        %839 = vmatprep.subr.bf16.mxu0 0
        %840 = vmatpush1.bf16.xpose.msra.mxu0 0
        %841 = vmatprep.mubr.bf16.mxu0 0
        %842 = vmatmul.mubr.bf16.gmra.mrb[0].mxu0 %v787
        %v843 = vpop.f32.mrb[0].mxu0
        %v844 = vadd.f32 0.0, %v843
        %v845 = vpop.f32.mrb[0].mxu0
        %v846 = vpop.f32.mrb[0].mxu0
        %v847 = vadd.f32 0.0, %v846
        %v848 = vpop.f32.mrb[0].mxu0
        %849 = vmatprep.mubr.bf16.mxu0 0
        %850 = vmatmul.mubr.bf16.gmra.mrb[0].mxu0 %v788
        %v851 = vpop.f32.mrb[0].mxu0
        %v852 = vadd.f32 0.0, %v851
        %v853 = vpop.f32.mrb[0].mxu0
        %v854 = vpop.f32.mrb[0].mxu0
        %v855 = vadd.f32 0.0, %v854
        %v856 = vpop.f32.mrb[0].mxu0
        %857 = vmatprep.mubr.bf16.mxu0 0
        %858 = vmatmul.mubr.bf16.gmra.mrb[0].mxu0 %v789
        %v859 = vpop.f32.mrb[0].mxu0
        %v860 = vadd.f32 0.0, %v859
        %v861 = vpop.f32.mrb[0].mxu0
        %v862 = vpop.f32.mrb[0].mxu0
        %v863 = vadd.f32 0.0, %v862
        %v864 = vpop.f32.mrb[0].mxu0
        %865 = vmatprep.mubr.bf16.mxu0 0
        %866 = vmatmul.mubr.bf16.gmra.mrb[0].mxu0 %v790
        %v867 = vpop.f32.mrb[0].mxu0
        %v868 = vadd.f32 0.0, %v867
        %v869 = vpop.f32.mrb[0].mxu0
        %v870 = vpop.f32.mrb[0].mxu0
        %v871 = vadd.f32 0.0, %v870
        %v872 = vpop.f32.mrb[0].mxu0
        %873 = vmatprep.mubr.bf16.mxu0 0
        %874 = vmatmul.mubr.bf16.gmra.mrb[0].mxu0 %v791
        %v875 = vpop.f32.mrb[0].mxu0
        %v876 = vadd.f32 0.0, %v875
        %v877 = vpop.f32.mrb[0].mxu0
        %v878 = vpop.f32.mrb[0].mxu0
        %v879 = vadd.f32 0.0, %v878
        %v880 = vpop.f32.mrb[0].mxu0
        %881 = vmatprep.mubr.bf16.mxu0 0
        %882 = vmatmul.mubr.bf16.gmra.mrb[0].mxu0 %v792
        %v883 = vpop.f32.mrb[0].mxu0
        %v884 = vadd.f32 0.0, %v883
        %v885 = vpop.f32.mrb[0].mxu0
        %v886 = vpop.f32.mrb[0].mxu0
        %v887 = vadd.f32 0.0, %v886
        %v888 = vpop.f32.mrb[0].mxu0
        %889 = vmatprep.mubr.bf16.mxu0 0
        %890 = vmatmul.mubr.bf16.gmra.mrb[0].mxu0 %v793
        %v891 = vpop.f32.mrb[0].mxu0
        %v892 = vadd.f32 0.0, %v891
        %v893 = vpop.f32.mrb[0].mxu0
        %v894 = vpop.f32.mrb[0].mxu0
        %v895 = vadd.f32 0.0, %v894
        %v896 = vpop.f32.mrb[0].mxu0
        %897 = vmatprep.mubr.bf16.mxu0 0
        %898 = vmatmul.mubr.bf16.gmra.mrb[0].mxu0 %v794
        %v899 = vpop.f32.mrb[0].mxu0
        %v900 = vadd.f32 0.0, %v899
        %v901 = vpop.f32.mrb[0].mxu0
        %v902 = vpop.f32.mrb[0].mxu0
        %v903 = vadd.f32 0.0, %v902
        %v904 = vpop.f32.mrb[0].mxu0
        %905 = vdwg.mxu0
        %v906 = vld [vmem:[#allocation15] sm:$0xf]
        %v907 = vld [vmem:[#allocation15 + $0x4] sm:$0xf]
        %v908 = vld [vmem:[#allocation15 + $0x8] sm:$0xf]
        %v909 = vld [vmem:[#allocation15 + $0xc] sm:$0xf]
        %v910 = vld [vmem:[#allocation15 + $0x10] sm:$0xf]
        %v911 = vld [vmem:[#allocation15 + $0x14] sm:$0xf]
        %v912 = vld [vmem:[#allocation15 + $0x18] sm:$0xf]
        %v913 = vld [vmem:[#allocation15 + $0x1c] sm:$0xf]
        %v914 = vld [vmem:[#allocation15 + $0x20] sm:$0xf]
        %v915 = vld [vmem:[#allocation15 + $0x24] sm:$0xf]
        %v916 = vld [vmem:[#allocation15 + $0x28] sm:$0xf]
        %v917 = vld [vmem:[#allocation15 + $0x2c] sm:$0xf]
        %v918 = vld [vmem:[#allocation15 + $0x30] sm:$0xf]
        %v919 = vld [vmem:[#allocation15 + $0x34] sm:$0xf]
        %v920 = vld [vmem:[#allocation15 + $0x38] sm:$0xf]
        %v921 = vld [vmem:[#allocation15 + $0x3c] sm:$0xf]
        %v938 = vunpack.c.l.b16 %v906
        %v939 = vunpack.c.l.b16 %v907
        %v940 = vunpack.c.l.b16 %v908
        %v941 = vunpack.c.l.b16 %v909
        %v942 = vunpack.c.l.b16 %v910
        %v943 = vunpack.c.l.b16 %v911
        %v944 = vunpack.c.l.b16 %v912
        %v945 = vunpack.c.l.b16 %v913
        %v946 = vunpack.c.l.b16 %v914
        %v947 = vunpack.c.l.b16 %v915
        %v948 = vunpack.c.l.b16 %v916
        %v949 = vunpack.c.l.b16 %v917
        %v950 = vunpack.c.l.b16 %v918
        %v951 = vunpack.c.l.b16 %v919
        %v952 = vunpack.c.l.b16 %v920
        %v953 = vunpack.c.l.b16 %v921
        %v954 = vpack.c.b16 %v939, %v938
        %v955 = vpack.c.b16 %v941, %v940
        %v956 = vpack.c.b16 %v943, %v942
        %v957 = vpack.c.b16 %v945, %v944
        %v958 = vpack.c.b16 %v947, %v946
        %v959 = vpack.c.b16 %v949, %v948
        %v960 = vpack.c.b16 %v951, %v950
        %v961 = vpack.c.b16 %v953, %v952
        %v972 = vunpack.c.l.b16 %v737
        %v973 = vunpack.c.l.b16 %v738
        %v974 = vpack.c.b16 %v973, %v972
        %976 = vmatprep.subr.bf16.mxu0 0
        %977 = vmatpush1.bf16.xpose.msra.mxu0 %v974
        %978 = vmatprep.subr.bf16.mxu0 0
        %979 = vmatpush1.bf16.xpose.msra.mxu0 0
        %980 = vmatprep.subr.bf16.mxu0 0
        %981 = vmatpush1.bf16.xpose.msra.mxu0 0
        %982 = vmatprep.subr.bf16.mxu0 0
        %983 = vmatpush1.bf16.xpose.msra.mxu0 0
        %984 = vmatprep.subr.bf16.mxu0 0
        %985 = vmatpush1.bf16.xpose.msra.mxu0 0
        %986 = vmatprep.subr.bf16.mxu0 0
        %987 = vmatpush1.bf16.xpose.msra.mxu0 0
        %988 = vmatprep.subr.bf16.mxu0 0
        %989 = vmatpush1.bf16.xpose.msra.mxu0 0
        %990 = vmatprep.subr.bf16.mxu0 0
        %991 = vmatpush1.bf16.xpose.msra.mxu0 0
        %992 = vmatprep.subr.bf16.mxu0 0
        %993 = vmatpush1.bf16.xpose.msra.mxu0 0
        %994 = vmatprep.subr.bf16.mxu0 0
        %995 = vmatpush1.bf16.xpose.msra.mxu0 0
        %996 = vmatprep.subr.bf16.mxu0 0
        %997 = vmatpush1.bf16.xpose.msra.mxu0 0
        %998 = vmatprep.subr.bf16.mxu0 0
        %999 = vmatpush1.bf16.xpose.msra.mxu0 0
        %1000 = vmatprep.subr.bf16.mxu0 0
        %1001 = vmatpush1.bf16.xpose.msra.mxu0 0
        %1002 = vmatprep.subr.bf16.mxu0 0
        %1003 = vmatpush1.bf16.xpose.msra.mxu0 0
        %1004 = vmatprep.subr.bf16.mxu0 0
        %1005 = vmatpush1.bf16.xpose.msra.mxu0 0
        %1006 = vmatprep.subr.bf16.mxu0 0
        %1007 = vmatpush1.bf16.xpose.msra.mxu0 0
        %1008 = vmatprep.mubr.bf16.mxu0 0
        %1009 = vmatmul.mubr.bf16.gmra.mrb[0].mxu0 %v954
        %v1010 = vpop.f32.mrb[0].mxu0
        %v1011 = vadd.f32 0.0, %v1010
        %v1012 = vpop.f32.mrb[0].mxu0
        %v1013 = vpop.f32.mrb[0].mxu0
        %v1014 = vadd.f32 0.0, %v1013
        %v1015 = vpop.f32.mrb[0].mxu0
        %1016 = vmatprep.mubr.bf16.mxu0 0
        %1017 = vmatmul.mubr.bf16.gmra.mrb[0].mxu0 %v955
        %v1018 = vpop.f32.mrb[0].mxu0
        %v1019 = vadd.f32 0.0, %v1018
        %v1020 = vpop.f32.mrb[0].mxu0
        %v1021 = vpop.f32.mrb[0].mxu0
        %v1022 = vadd.f32 0.0, %v1021
        %v1023 = vpop.f32.mrb[0].mxu0
        %1024 = vmatprep.mubr.bf16.mxu0 0
        %1025 = vmatmul.mubr.bf16.gmra.mrb[0].mxu0 %v956
        %v1026 = vpop.f32.mrb[0].mxu0
        %v1027 = vadd.f32 0.0, %v1026
        %v1028 = vpop.f32.mrb[0].mxu0
        %v1029 = vpop.f32.mrb[0].mxu0
        %v1030 = vadd.f32 0.0, %v1029
        %v1031 = vpop.f32.mrb[0].mxu0
        %1032 = vmatprep.mubr.bf16.mxu0 0
        %1033 = vmatmul.mubr.bf16.gmra.mrb[0].mxu0 %v957
        %v1034 = vpop.f32.mrb[0].mxu0
        %v1035 = vadd.f32 0.0, %v1034
        %v1036 = vpop.f32.mrb[0].mxu0
        %v1037 = vpop.f32.mrb[0].mxu0
        %v1038 = vadd.f32 0.0, %v1037
        %v1039 = vpop.f32.mrb[0].mxu0
        %1040 = vmatprep.mubr.bf16.mxu0 0
        %1041 = vmatmul.mubr.bf16.gmra.mrb[0].mxu0 %v958
        %v1042 = vpop.f32.mrb[0].mxu0
        %v1043 = vadd.f32 0.0, %v1042
        %v1044 = vpop.f32.mrb[0].mxu0
        %v1045 = vpop.f32.mrb[0].mxu0
        %v1046 = vadd.f32 0.0, %v1045
        %v1047 = vpop.f32.mrb[0].mxu0
        %1048 = vmatprep.mubr.bf16.mxu0 0
        %1049 = vmatmul.mubr.bf16.gmra.mrb[0].mxu0 %v959
        %v1050 = vpop.f32.mrb[0].mxu0
        %v1051 = vadd.f32 0.0, %v1050
        %v1052 = vpop.f32.mrb[0].mxu0
        %v1053 = vpop.f32.mrb[0].mxu0
        %v1054 = vadd.f32 0.0, %v1053
        %v1055 = vpop.f32.mrb[0].mxu0
        %1056 = vmatprep.mubr.bf16.mxu0 0
        %1057 = vmatmul.mubr.bf16.gmra.mrb[0].mxu0 %v960
        %v1058 = vpop.f32.mrb[0].mxu0
        %v1059 = vadd.f32 0.0, %v1058
        %v1060 = vpop.f32.mrb[0].mxu0
        %v1061 = vpop.f32.mrb[0].mxu0
        %v1062 = vadd.f32 0.0, %v1061
        %v1063 = vpop.f32.mrb[0].mxu0
        %1064 = vmatprep.mubr.bf16.mxu0 0
        %1065 = vmatmul.mubr.bf16.gmra.mrb[0].mxu0 %v961
        %v1066 = vpop.f32.mrb[0].mxu0
        %v1067 = vadd.f32 0.0, %v1066
        %v1068 = vpop.f32.mrb[0].mxu0
        %v1069 = vpop.f32.mrb[0].mxu0
        %v1070 = vadd.f32 0.0, %v1069
        %v1071 = vpop.f32.mrb[0].mxu0
        %1072 = vdwg.mxu0
        %v1073 = vpack.c.bf16 %v847, %v844
        %v1074 = vpack.c.bf16 %v855, %v852
        %v1075 = vpack.c.bf16 %v863, %v860
        %v1076 = vpack.c.bf16 %v871, %v868
        %v1077 = vpack.c.bf16 %v879, %v876
        %v1078 = vpack.c.bf16 %v887, %v884
        %v1079 = vpack.c.bf16 %v895, %v892
        %v1080 = vpack.c.bf16 %v903, %v900
        %v1081 = vpack.c.bf16 %v1014, %v1011
        %v1082 = vpack.c.bf16 %v1022, %v1019
        %v1083 = vpack.c.bf16 %v1030, %v1027
        %v1084 = vpack.c.bf16 %v1038, %v1035
        %v1085 = vpack.c.bf16 %v1046, %v1043
        %v1086 = vpack.c.bf16 %v1054, %v1051
        %v1087 = vpack.c.bf16 %v1062, %v1059
        %v1088 = vpack.c.bf16 %v1070, %v1067
        %v1089 = vld [vmem:[#allocation2] sm:$0xff]
        %v1090 = vld [vmem:[#allocation2 + $0x8] sm:$0xff]
        %v1091 = vld [vmem:[#allocation2 + $0x10] sm:$0xff]
        %v1092 = vld [vmem:[#allocation2 + $0x18] sm:$0xff]
        %v1093 = vld [vmem:[#allocation2 + $0x20] sm:$0xff]
        %v1094 = vld [vmem:[#allocation2 + $0x28] sm:$0xff]
        %v1095 = vld [vmem:[#allocation2 + $0x30] sm:$0xff]
        %v1096 = vld [vmem:[#allocation2 + $0x38] sm:$0xff]
        %v1097 = vld [vmem:[%s532] sm:$0xf]
        %v1098 = vunpack.c.l.bf16 %v1097
        %1099 = vxpose.xlu0.c.b16.start [1/8] %v1089, 128
        %1100 = vxpose.xlu0.c.b16.cont [2/8] 0, 128
        %1101 = vxpose.xlu0.c.b16.cont [3/8] 0, 128
        %1102 = vxpose.xlu0.c.b16.cont [4/8] 0, 128
        %1103 = vxpose.xlu0.c.b16.cont [5/8] 0, 128
        %1104 = vxpose.xlu0.c.b16.cont [6/8] 0, 128
        %1105 = vxpose.xlu0.c.b16.cont [7/8] 0, 128
        %1106 = vxpose.xlu0.c.b16.end [8/8] 0, 128
        %v1107 = vpop.trf.xlu0
        %v1108 = vpop.trf.xlu0
        %v1109 = vpop.trf.xlu0
        %v1110 = vpop.trf.xlu0
        %v1111 = vpop.trf.xlu0
        %v1112 = vpop.trf.xlu0
        %v1113 = vpop.trf.xlu0
        %v1114 = vpop.trf.xlu0
        %vm1115 = vcmask 130048
        %v1117 = vsel %vm1115, %v1107, 0
        %1119 = vmatprep.subr.bf16.mxu0 0
        %1120 = vmatpush1.bf16.msra.mxu0 %v1073
        %1121 = vmatprep.subr.bf16.mxu0 0
        %1122 = vmatpush1.bf16.msra.mxu0 0
        %1123 = vmatprep.subr.bf16.mxu0 0
        %1124 = vmatpush1.bf16.msra.mxu0 0
        %1125 = vmatprep.subr.bf16.mxu0 0
        %1126 = vmatpush1.bf16.msra.mxu0 0
        %1127 = vmatprep.subr.bf16.mxu0 0
        %1128 = vmatpush1.bf16.msra.mxu0 0
        %1129 = vmatprep.subr.bf16.mxu0 0
        %1130 = vmatpush1.bf16.msra.mxu0 0
        %1131 = vmatprep.subr.bf16.mxu0 0
        %1132 = vmatpush1.bf16.msra.mxu0 0
        %1133 = vmatprep.subr.bf16.mxu0 0
        %1134 = vmatpush1.bf16.msra.mxu0 0
        %1135 = vmatprep.subr.bf16.mxu0 0
        %1136 = vmatpush1.bf16.msra.mxu0 0
        %1137 = vmatprep.subr.bf16.mxu0 0
        %1138 = vmatpush1.bf16.msra.mxu0 0
        %1139 = vmatprep.subr.bf16.mxu0 0
        %1140 = vmatpush1.bf16.msra.mxu0 0
        %1141 = vmatprep.subr.bf16.mxu0 0
        %1142 = vmatpush1.bf16.msra.mxu0 0
        %1143 = vmatprep.subr.bf16.mxu0 0
        %1144 = vmatpush1.bf16.msra.mxu0 0
        %1145 = vmatprep.subr.bf16.mxu0 0
        %1146 = vmatpush1.bf16.msra.mxu0 0
        %1147 = vmatprep.subr.bf16.mxu0 0
        %1148 = vmatpush1.bf16.msra.mxu0 0
        %1149 = vmatprep.subr.bf16.mxu0 0
        %1150 = vmatpush1.bf16.msra.mxu0 0
        %1151 = vmatprep.mubr.bf16.mxu0 0
        %1152 = vmatmul.mubr.bf16.gmra.mrb[0].mxu0 %v1117
        %v1153 = vpop.f32.mrb[0].mxu0
        %v1154 = vadd.f32 %v1098, %v1153
        %v1155 = vpop.f32.mrb[0].mxu0
        %v1156 = vpop.f32.mrb[0].mxu0
        %v1157 = vpop.f32.mrb[0].mxu0
        %1158 = vdwg.mxu0
        %1159 = vxpose.xlu0.c.b16.start [1/8] %v1090, 128
        %1160 = vxpose.xlu0.c.b16.cont [2/8] 0, 128
        %1161 = vxpose.xlu0.c.b16.cont [3/8] 0, 128
        %1162 = vxpose.xlu0.c.b16.cont [4/8] 0, 128
        %1163 = vxpose.xlu0.c.b16.cont [5/8] 0, 128
        %1164 = vxpose.xlu0.c.b16.cont [6/8] 0, 128
        %1165 = vxpose.xlu0.c.b16.cont [7/8] 0, 128
        %1166 = vxpose.xlu0.c.b16.end [8/8] 0, 128
        %v1167 = vpop.trf.xlu0
        %v1168 = vpop.trf.xlu0
        %v1169 = vpop.trf.xlu0
        %v1170 = vpop.trf.xlu0
        %v1171 = vpop.trf.xlu0
        %v1172 = vpop.trf.xlu0
        %v1173 = vpop.trf.xlu0
        %v1174 = vpop.trf.xlu0
        %v1176 = vsel %vm1115, %v1167, 0
        %1178 = vmatprep.subr.bf16.mxu0 0
        %1179 = vmatpush1.bf16.msra.mxu0 %v1074
        %1180 = vmatprep.subr.bf16.mxu0 0
        %1181 = vmatpush1.bf16.msra.mxu0 0
        %1182 = vmatprep.subr.bf16.mxu0 0
        %1183 = vmatpush1.bf16.msra.mxu0 0
        %1184 = vmatprep.subr.bf16.mxu0 0
        %1185 = vmatpush1.bf16.msra.mxu0 0
        %1186 = vmatprep.subr.bf16.mxu0 0
        %1187 = vmatpush1.bf16.msra.mxu0 0
        %1188 = vmatprep.subr.bf16.mxu0 0
        %1189 = vmatpush1.bf16.msra.mxu0 0
        %1190 = vmatprep.subr.bf16.mxu0 0
        %1191 = vmatpush1.bf16.msra.mxu0 0
        %1192 = vmatprep.subr.bf16.mxu0 0
        %1193 = vmatpush1.bf16.msra.mxu0 0
        %1194 = vmatprep.subr.bf16.mxu0 0
        %1195 = vmatpush1.bf16.msra.mxu0 0
        %1196 = vmatprep.subr.bf16.mxu0 0
        %1197 = vmatpush1.bf16.msra.mxu0 0
        %1198 = vmatprep.subr.bf16.mxu0 0
        %1199 = vmatpush1.bf16.msra.mxu0 0
        %1200 = vmatprep.subr.bf16.mxu0 0
        %1201 = vmatpush1.bf16.msra.mxu0 0
        %1202 = vmatprep.subr.bf16.mxu0 0
        %1203 = vmatpush1.bf16.msra.mxu0 0
        %1204 = vmatprep.subr.bf16.mxu0 0
        %1205 = vmatpush1.bf16.msra.mxu0 0
        %1206 = vmatprep.subr.bf16.mxu0 0
        %1207 = vmatpush1.bf16.msra.mxu0 0
        %1208 = vmatprep.subr.bf16.mxu0 0
        %1209 = vmatpush1.bf16.msra.mxu0 0
        %1210 = vmatprep.mubr.bf16.mxu0 0
        %1211 = vmatmul.mubr.bf16.gmra.mrb[0].mxu0 %v1176
        %v1212 = vpop.f32.mrb[0].mxu0
        %v1213 = vadd.f32 %v1098, %v1212
        %v1214 = vpop.f32.mrb[0].mxu0
        %v1215 = vpop.f32.mrb[0].mxu0
        %v1216 = vpop.f32.mrb[0].mxu0
        %1217 = vdwg.mxu0
        %1218 = vxpose.xlu0.c.b16.start [1/8] %v1091, 128
        %1219 = vxpose.xlu0.c.b16.cont [2/8] 0, 128
        %1220 = vxpose.xlu0.c.b16.cont [3/8] 0, 128
        %1221 = vxpose.xlu0.c.b16.cont [4/8] 0, 128
        %1222 = vxpose.xlu0.c.b16.cont [5/8] 0, 128
        %1223 = vxpose.xlu0.c.b16.cont [6/8] 0, 128
        %1224 = vxpose.xlu0.c.b16.cont [7/8] 0, 128
        %1225 = vxpose.xlu0.c.b16.end [8/8] 0, 128
        %v1226 = vpop.trf.xlu0
        %v1227 = vpop.trf.xlu0
        %v1228 = vpop.trf.xlu0
        %v1229 = vpop.trf.xlu0
        %v1230 = vpop.trf.xlu0
        %v1231 = vpop.trf.xlu0
        %v1232 = vpop.trf.xlu0
        %v1233 = vpop.trf.xlu0
        %v1235 = vsel %vm1115, %v1226, 0
        %1237 = vmatprep.subr.bf16.mxu0 0
        %1238 = vmatpush1.bf16.msra.mxu0 %v1075
        %1239 = vmatprep.subr.bf16.mxu0 0
        %1240 = vmatpush1.bf16.msra.mxu0 0
        %1241 = vmatprep.subr.bf16.mxu0 0
        %1242 = vmatpush1.bf16.msra.mxu0 0
        %1243 = vmatprep.subr.bf16.mxu0 0
        %1244 = vmatpush1.bf16.msra.mxu0 0
        %1245 = vmatprep.subr.bf16.mxu0 0
        %1246 = vmatpush1.bf16.msra.mxu0 0
        %1247 = vmatprep.subr.bf16.mxu0 0
        %1248 = vmatpush1.bf16.msra.mxu0 0
        %1249 = vmatprep.subr.bf16.mxu0 0
        %1250 = vmatpush1.bf16.msra.mxu0 0
        %1251 = vmatprep.subr.bf16.mxu0 0
        %1252 = vmatpush1.bf16.msra.mxu0 0
        %1253 = vmatprep.subr.bf16.mxu0 0
        %1254 = vmatpush1.bf16.msra.mxu0 0
        %1255 = vmatprep.subr.bf16.mxu0 0
        %1256 = vmatpush1.bf16.msra.mxu0 0
        %1257 = vmatprep.subr.bf16.mxu0 0
        %1258 = vmatpush1.bf16.msra.mxu0 0
        %1259 = vmatprep.subr.bf16.mxu0 0
        %1260 = vmatpush1.bf16.msra.mxu0 0
        %1261 = vmatprep.subr.bf16.mxu0 0
        %1262 = vmatpush1.bf16.msra.mxu0 0
        %1263 = vmatprep.subr.bf16.mxu0 0
        %1264 = vmatpush1.bf16.msra.mxu0 0
        %1265 = vmatprep.subr.bf16.mxu0 0
        %1266 = vmatpush1.bf16.msra.mxu0 0
        %1267 = vmatprep.subr.bf16.mxu0 0
        %1268 = vmatpush1.bf16.msra.mxu0 0
        %1269 = vmatprep.mubr.bf16.mxu0 0
        %1270 = vmatmul.mubr.bf16.gmra.mrb[0].mxu0 %v1235
        %v1271 = vpop.f32.mrb[0].mxu0
        %v1272 = vadd.f32 %v1098, %v1271
        %v1273 = vpop.f32.mrb[0].mxu0
        %v1274 = vpop.f32.mrb[0].mxu0
        %v1275 = vpop.f32.mrb[0].mxu0
        %1276 = vdwg.mxu0
        %1277 = vxpose.xlu0.c.b16.start [1/8] %v1092, 128
        %1278 = vxpose.xlu0.c.b16.cont [2/8] 0, 128
        %1279 = vxpose.xlu0.c.b16.cont [3/8] 0, 128
        %1280 = vxpose.xlu0.c.b16.cont [4/8] 0, 128
        %1281 = vxpose.xlu0.c.b16.cont [5/8] 0, 128
        %1282 = vxpose.xlu0.c.b16.cont [6/8] 0, 128
        %1283 = vxpose.xlu0.c.b16.cont [7/8] 0, 128
        %1284 = vxpose.xlu0.c.b16.end [8/8] 0, 128
        %v1285 = vpop.trf.xlu0
        %v1286 = vpop.trf.xlu0
        %v1287 = vpop.trf.xlu0
        %v1288 = vpop.trf.xlu0
        %v1289 = vpop.trf.xlu0
        %v1290 = vpop.trf.xlu0
        %v1291 = vpop.trf.xlu0
        %v1292 = vpop.trf.xlu0
        %v1294 = vsel %vm1115, %v1285, 0
        %1296 = vmatprep.subr.bf16.mxu0 0
        %1297 = vmatpush1.bf16.msra.mxu0 %v1076
        %1298 = vmatprep.subr.bf16.mxu0 0
        %1299 = vmatpush1.bf16.msra.mxu0 0
        %1300 = vmatprep.subr.bf16.mxu0 0
        %1301 = vmatpush1.bf16.msra.mxu0 0
        %1302 = vmatprep.subr.bf16.mxu0 0
        %1303 = vmatpush1.bf16.msra.mxu0 0
        %1304 = vmatprep.subr.bf16.mxu0 0
        %1305 = vmatpush1.bf16.msra.mxu0 0
        %1306 = vmatprep.subr.bf16.mxu0 0
        %1307 = vmatpush1.bf16.msra.mxu0 0
        %1308 = vmatprep.subr.bf16.mxu0 0
        %1309 = vmatpush1.bf16.msra.mxu0 0
        %1310 = vmatprep.subr.bf16.mxu0 0
        %1311 = vmatpush1.bf16.msra.mxu0 0
        %1312 = vmatprep.subr.bf16.mxu0 0
        %1313 = vmatpush1.bf16.msra.mxu0 0
        %1314 = vmatprep.subr.bf16.mxu0 0
        %1315 = vmatpush1.bf16.msra.mxu0 0
        %1316 = vmatprep.subr.bf16.mxu0 0
        %1317 = vmatpush1.bf16.msra.mxu0 0
        %1318 = vmatprep.subr.bf16.mxu0 0
        %1319 = vmatpush1.bf16.msra.mxu0 0
        %1320 = vmatprep.subr.bf16.mxu0 0
        %1321 = vmatpush1.bf16.msra.mxu0 0
        %1322 = vmatprep.subr.bf16.mxu0 0
        %1323 = vmatpush1.bf16.msra.mxu0 0
        %1324 = vmatprep.subr.bf16.mxu0 0
        %1325 = vmatpush1.bf16.msra.mxu0 0
        %1326 = vmatprep.subr.bf16.mxu0 0
        %1327 = vmatpush1.bf16.msra.mxu0 0
        %1328 = vmatprep.mubr.bf16.mxu0 0
        %1329 = vmatmul.mubr.bf16.gmra.mrb[0].mxu0 %v1294
        %v1330 = vpop.f32.mrb[0].mxu0
        %v1331 = vadd.f32 %v1098, %v1330
        %v1332 = vpop.f32.mrb[0].mxu0
        %v1333 = vpop.f32.mrb[0].mxu0
        %v1334 = vpop.f32.mrb[0].mxu0
        %1335 = vdwg.mxu0
        %1336 = vxpose.xlu0.c.b16.start [1/8] %v1093, 128
        %1337 = vxpose.xlu0.c.b16.cont [2/8] 0, 128
        %1338 = vxpose.xlu0.c.b16.cont [3/8] 0, 128
        %1339 = vxpose.xlu0.c.b16.cont [4/8] 0, 128
        %1340 = vxpose.xlu0.c.b16.cont [5/8] 0, 128
        %1341 = vxpose.xlu0.c.b16.cont [6/8] 0, 128
        %1342 = vxpose.xlu0.c.b16.cont [7/8] 0, 128
        %1343 = vxpose.xlu0.c.b16.end [8/8] 0, 128
        %v1344 = vpop.trf.xlu0
        %v1345 = vpop.trf.xlu0
        %v1346 = vpop.trf.xlu0
        %v1347 = vpop.trf.xlu0
        %v1348 = vpop.trf.xlu0
        %v1349 = vpop.trf.xlu0
        %v1350 = vpop.trf.xlu0
        %v1351 = vpop.trf.xlu0
        %v1353 = vsel %vm1115, %v1344, 0
        %1355 = vmatprep.subr.bf16.mxu0 0
        %1356 = vmatpush1.bf16.msra.mxu0 %v1077
        %1357 = vmatprep.subr.bf16.mxu0 0
        %1358 = vmatpush1.bf16.msra.mxu0 0
        %1359 = vmatprep.subr.bf16.mxu0 0
        %1360 = vmatpush1.bf16.msra.mxu0 0
        %1361 = vmatprep.subr.bf16.mxu0 0
        %1362 = vmatpush1.bf16.msra.mxu0 0
        %1363 = vmatprep.subr.bf16.mxu0 0
        %1364 = vmatpush1.bf16.msra.mxu0 0
        %1365 = vmatprep.subr.bf16.mxu0 0
        %1366 = vmatpush1.bf16.msra.mxu0 0
        %1367 = vmatprep.subr.bf16.mxu0 0
        %1368 = vmatpush1.bf16.msra.mxu0 0
        %1369 = vmatprep.subr.bf16.mxu0 0
        %1370 = vmatpush1.bf16.msra.mxu0 0
        %1371 = vmatprep.subr.bf16.mxu0 0
        %1372 = vmatpush1.bf16.msra.mxu0 0
        %1373 = vmatprep.subr.bf16.mxu0 0
        %1374 = vmatpush1.bf16.msra.mxu0 0
        %1375 = vmatprep.subr.bf16.mxu0 0
        %1376 = vmatpush1.bf16.msra.mxu0 0
        %1377 = vmatprep.subr.bf16.mxu0 0
        %1378 = vmatpush1.bf16.msra.mxu0 0
        %1379 = vmatprep.subr.bf16.mxu0 0
        %1380 = vmatpush1.bf16.msra.mxu0 0
        %1381 = vmatprep.subr.bf16.mxu0 0
        %1382 = vmatpush1.bf16.msra.mxu0 0
        %1383 = vmatprep.subr.bf16.mxu0 0
        %1384 = vmatpush1.bf16.msra.mxu0 0
        %1385 = vmatprep.subr.bf16.mxu0 0
        %1386 = vmatpush1.bf16.msra.mxu0 0
        %1387 = vmatprep.mubr.bf16.mxu0 0
        %1388 = vmatmul.mubr.bf16.gmra.mrb[0].mxu0 %v1353
        %v1389 = vpop.f32.mrb[0].mxu0
        %v1390 = vadd.f32 %v1098, %v1389
        %v1391 = vpop.f32.mrb[0].mxu0
        %v1392 = vpop.f32.mrb[0].mxu0
        %v1393 = vpop.f32.mrb[0].mxu0
        %1394 = vdwg.mxu0
        %1395 = vxpose.xlu0.c.b16.start [1/8] %v1094, 128
        %1396 = vxpose.xlu0.c.b16.cont [2/8] 0, 128
        %1397 = vxpose.xlu0.c.b16.cont [3/8] 0, 128
        %1398 = vxpose.xlu0.c.b16.cont [4/8] 0, 128
        %1399 = vxpose.xlu0.c.b16.cont [5/8] 0, 128
        %1400 = vxpose.xlu0.c.b16.cont [6/8] 0, 128
        %1401 = vxpose.xlu0.c.b16.cont [7/8] 0, 128
        %1402 = vxpose.xlu0.c.b16.end [8/8] 0, 128
        %v1403 = vpop.trf.xlu0
        %v1404 = vpop.trf.xlu0
        %v1405 = vpop.trf.xlu0
        %v1406 = vpop.trf.xlu0
        %v1407 = vpop.trf.xlu0
        %v1408 = vpop.trf.xlu0
        %v1409 = vpop.trf.xlu0
        %v1410 = vpop.trf.xlu0
        %v1412 = vsel %vm1115, %v1403, 0
        %1414 = vmatprep.subr.bf16.mxu0 0
        %1415 = vmatpush1.bf16.msra.mxu0 %v1078
        %1416 = vmatprep.subr.bf16.mxu0 0
        %1417 = vmatpush1.bf16.msra.mxu0 0
        %1418 = vmatprep.subr.bf16.mxu0 0
        %1419 = vmatpush1.bf16.msra.mxu0 0
        %1420 = vmatprep.subr.bf16.mxu0 0
        %1421 = vmatpush1.bf16.msra.mxu0 0
        %1422 = vmatprep.subr.bf16.mxu0 0
        %1423 = vmatpush1.bf16.msra.mxu0 0
        %1424 = vmatprep.subr.bf16.mxu0 0
        %1425 = vmatpush1.bf16.msra.mxu0 0
        %1426 = vmatprep.subr.bf16.mxu0 0
        %1427 = vmatpush1.bf16.msra.mxu0 0
        %1428 = vmatprep.subr.bf16.mxu0 0
        %1429 = vmatpush1.bf16.msra.mxu0 0
        %1430 = vmatprep.subr.bf16.mxu0 0
        %1431 = vmatpush1.bf16.msra.mxu0 0
        %1432 = vmatprep.subr.bf16.mxu0 0
        %1433 = vmatpush1.bf16.msra.mxu0 0
        %1434 = vmatprep.subr.bf16.mxu0 0
        %1435 = vmatpush1.bf16.msra.mxu0 0
        %1436 = vmatprep.subr.bf16.mxu0 0
        %1437 = vmatpush1.bf16.msra.mxu0 0
        %1438 = vmatprep.subr.bf16.mxu0 0
        %1439 = vmatpush1.bf16.msra.mxu0 0
        %1440 = vmatprep.subr.bf16.mxu0 0
        %1441 = vmatpush1.bf16.msra.mxu0 0
        %1442 = vmatprep.subr.bf16.mxu0 0
        %1443 = vmatpush1.bf16.msra.mxu0 0
        %1444 = vmatprep.subr.bf16.mxu0 0
        %1445 = vmatpush1.bf16.msra.mxu0 0
        %1446 = vmatprep.mubr.bf16.mxu0 0
        %1447 = vmatmul.mubr.bf16.gmra.mrb[0].mxu0 %v1412
        %v1448 = vpop.f32.mrb[0].mxu0
        %v1449 = vadd.f32 %v1098, %v1448
        %v1450 = vpop.f32.mrb[0].mxu0
        %v1451 = vpop.f32.mrb[0].mxu0
        %v1452 = vpop.f32.mrb[0].mxu0
        %1453 = vdwg.mxu0
        %1454 = vxpose.xlu0.c.b16.start [1/8] %v1095, 128
        %1455 = vxpose.xlu0.c.b16.cont [2/8] 0, 128
        %1456 = vxpose.xlu0.c.b16.cont [3/8] 0, 128
        %1457 = vxpose.xlu0.c.b16.cont [4/8] 0, 128
        %1458 = vxpose.xlu0.c.b16.cont [5/8] 0, 128
        %1459 = vxpose.xlu0.c.b16.cont [6/8] 0, 128
        %1460 = vxpose.xlu0.c.b16.cont [7/8] 0, 128
        %1461 = vxpose.xlu0.c.b16.end [8/8] 0, 128
        %v1462 = vpop.trf.xlu0
        %v1463 = vpop.trf.xlu0
        %v1464 = vpop.trf.xlu0
        %v1465 = vpop.trf.xlu0
        %v1466 = vpop.trf.xlu0
        %v1467 = vpop.trf.xlu0
        %v1468 = vpop.trf.xlu0
        %v1469 = vpop.trf.xlu0
        %v1471 = vsel %vm1115, %v1462, 0
        %1473 = vmatprep.subr.bf16.mxu0 0
        %1474 = vmatpush1.bf16.msra.mxu0 %v1079
        %1475 = vmatprep.subr.bf16.mxu0 0
        %1476 = vmatpush1.bf16.msra.mxu0 0
        %1477 = vmatprep.subr.bf16.mxu0 0
        %1478 = vmatpush1.bf16.msra.mxu0 0
        %1479 = vmatprep.subr.bf16.mxu0 0
        %1480 = vmatpush1.bf16.msra.mxu0 0
        %1481 = vmatprep.subr.bf16.mxu0 0
        %1482 = vmatpush1.bf16.msra.mxu0 0
        %1483 = vmatprep.subr.bf16.mxu0 0
        %1484 = vmatpush1.bf16.msra.mxu0 0
        %1485 = vmatprep.subr.bf16.mxu0 0
        %1486 = vmatpush1.bf16.msra.mxu0 0
        %1487 = vmatprep.subr.bf16.mxu0 0
        %1488 = vmatpush1.bf16.msra.mxu0 0
        %1489 = vmatprep.subr.bf16.mxu0 0
        %1490 = vmatpush1.bf16.msra.mxu0 0
        %1491 = vmatprep.subr.bf16.mxu0 0
        %1492 = vmatpush1.bf16.msra.mxu0 0
        %1493 = vmatprep.subr.bf16.mxu0 0
        %1494 = vmatpush1.bf16.msra.mxu0 0
        %1495 = vmatprep.subr.bf16.mxu0 0
        %1496 = vmatpush1.bf16.msra.mxu0 0
        %1497 = vmatprep.subr.bf16.mxu0 0
        %1498 = vmatpush1.bf16.msra.mxu0 0
        %1499 = vmatprep.subr.bf16.mxu0 0
        %1500 = vmatpush1.bf16.msra.mxu0 0
        %1501 = vmatprep.subr.bf16.mxu0 0
        %1502 = vmatpush1.bf16.msra.mxu0 0
        %1503 = vmatprep.subr.bf16.mxu0 0
        %1504 = vmatpush1.bf16.msra.mxu0 0
        %1505 = vmatprep.mubr.bf16.mxu0 0
        %1506 = vmatmul.mubr.bf16.gmra.mrb[0].mxu0 %v1471
        %v1507 = vpop.f32.mrb[0].mxu0
        %v1508 = vadd.f32 %v1098, %v1507
        %v1509 = vpop.f32.mrb[0].mxu0
        %v1510 = vpop.f32.mrb[0].mxu0
        %v1511 = vpop.f32.mrb[0].mxu0
        %1512 = vdwg.mxu0
        %1513 = vxpose.xlu0.c.b16.start [1/8] %v1096, 128
        %1514 = vxpose.xlu0.c.b16.cont [2/8] 0, 128
        %1515 = vxpose.xlu0.c.b16.cont [3/8] 0, 128
        %1516 = vxpose.xlu0.c.b16.cont [4/8] 0, 128
        %1517 = vxpose.xlu0.c.b16.cont [5/8] 0, 128
        %1518 = vxpose.xlu0.c.b16.cont [6/8] 0, 128
        %1519 = vxpose.xlu0.c.b16.cont [7/8] 0, 128
        %1520 = vxpose.xlu0.c.b16.end [8/8] 0, 128
        %v1521 = vpop.trf.xlu0
        %v1522 = vpop.trf.xlu0
        %v1523 = vpop.trf.xlu0
        %v1524 = vpop.trf.xlu0
        %v1525 = vpop.trf.xlu0
        %v1526 = vpop.trf.xlu0
        %v1527 = vpop.trf.xlu0
        %v1528 = vpop.trf.xlu0
        %v1530 = vsel %vm1115, %v1521, 0
        %1532 = vmatprep.subr.bf16.mxu0 0
        %1533 = vmatpush1.bf16.msra.mxu0 %v1080
        %1534 = vmatprep.subr.bf16.mxu0 0
        %1535 = vmatpush1.bf16.msra.mxu0 0
        %1536 = vmatprep.subr.bf16.mxu0 0
        %1537 = vmatpush1.bf16.msra.mxu0 0
        %1538 = vmatprep.subr.bf16.mxu0 0
        %1539 = vmatpush1.bf16.msra.mxu0 0
        %1540 = vmatprep.subr.bf16.mxu0 0
        %1541 = vmatpush1.bf16.msra.mxu0 0
        %1542 = vmatprep.subr.bf16.mxu0 0
        %1543 = vmatpush1.bf16.msra.mxu0 0
        %1544 = vmatprep.subr.bf16.mxu0 0
        %1545 = vmatpush1.bf16.msra.mxu0 0
        %1546 = vmatprep.subr.bf16.mxu0 0
        %1547 = vmatpush1.bf16.msra.mxu0 0
        %1548 = vmatprep.subr.bf16.mxu0 0
        %1549 = vmatpush1.bf16.msra.mxu0 0
        %1550 = vmatprep.subr.bf16.mxu0 0
        %1551 = vmatpush1.bf16.msra.mxu0 0
        %1552 = vmatprep.subr.bf16.mxu0 0
        %1553 = vmatpush1.bf16.msra.mxu0 0
        %1554 = vmatprep.subr.bf16.mxu0 0
        %1555 = vmatpush1.bf16.msra.mxu0 0
        %1556 = vmatprep.subr.bf16.mxu0 0
        %1557 = vmatpush1.bf16.msra.mxu0 0
        %1558 = vmatprep.subr.bf16.mxu0 0
        %1559 = vmatpush1.bf16.msra.mxu0 0
        %1560 = vmatprep.subr.bf16.mxu0 0
        %1561 = vmatpush1.bf16.msra.mxu0 0
        %1562 = vmatprep.subr.bf16.mxu0 0
        %1563 = vmatpush1.bf16.msra.mxu0 0
        %1564 = vmatprep.mubr.bf16.mxu0 0
        %1565 = vmatmul.mubr.bf16.gmra.mrb[0].mxu0 %v1530
        %v1566 = vpop.f32.mrb[0].mxu0
        %v1567 = vadd.f32 %v1098, %v1566
        %v1568 = vpop.f32.mrb[0].mxu0
        %v1569 = vpop.f32.mrb[0].mxu0
        %v1570 = vpop.f32.mrb[0].mxu0
        %1571 = vdwg.mxu0
        %v1572 = vld [vmem:[#allocation3] sm:$0xff]
        %v1573 = vsel %vm1115, %v1154, -inf
        %1574 = vmax.xlane.f32.xlu0 %v1573
        %v1575 = vpop.xlane.xlu0 %1574
        %v1576 = vsel %vm1115, %v1213, -inf
        %1577 = vmax.xlane.f32.xlu0 %v1576
        %v1578 = vpop.xlane.xlu0 %1577
        %v1579 = vsel %vm1115, %v1272, -inf
        %1580 = vmax.xlane.f32.xlu0 %v1579
        %v1581 = vpop.xlane.xlu0 %1580
        %v1582 = vsel %vm1115, %v1331, -inf
        %1583 = vmax.xlane.f32.xlu0 %v1582
        %v1584 = vpop.xlane.xlu0 %1583
        %v1585 = vsel %vm1115, %v1390, -inf
        %1586 = vmax.xlane.f32.xlu0 %v1585
        %v1587 = vpop.xlane.xlu0 %1586
        %v1588 = vsel %vm1115, %v1449, -inf
        %1589 = vmax.xlane.f32.xlu0 %v1588
        %v1590 = vpop.xlane.xlu0 %1589
        %v1591 = vsel %vm1115, %v1508, -inf
        %1592 = vmax.xlane.f32.xlu0 %v1591
        %v1593 = vpop.xlane.xlu0 %1592
        %v1594 = vsel %vm1115, %v1567, -inf
        %1595 = vmax.xlane.f32.xlu0 %v1594
        %v1596 = vpop.xlane.xlu0 %1595
        %v1605 = vlaneseq
        %v1606 = vand.u32 %v1605, 127
        %v1607 = vlaneseq
        %v1608 = vshrl.u32 %v1607, 7
        %v1609 = vsub.s32 %v1606, %v1608
        %v1610 = vrot.slane %v1575, %v1609
        %v1611 = vlaneseq
        %v1612 = vshrl.u32 %v1611, 7
        %v1613 = vsub.s32 %v1606, %v1612
        %v1614 = vrot.slane %v1578, %v1613
        %v1615 = vlaneseq
        %v1616 = vshrl.u32 %v1615, 7
        %v1617 = vsub.s32 %v1606, %v1616
        %v1618 = vrot.slane %v1581, %v1617
        %v1619 = vlaneseq
        %v1620 = vshrl.u32 %v1619, 7
        %v1621 = vsub.s32 %v1606, %v1620
        %v1622 = vrot.slane %v1584, %v1621
        %v1623 = vlaneseq
        %v1624 = vshrl.u32 %v1623, 7
        %v1625 = vsub.s32 %v1606, %v1624
        %v1626 = vrot.slane %v1587, %v1625
        %v1627 = vlaneseq
        %v1628 = vshrl.u32 %v1627, 7
        %v1629 = vsub.s32 %v1606, %v1628
        %v1630 = vrot.slane %v1590, %v1629
        %v1631 = vlaneseq
        %v1632 = vshrl.u32 %v1631, 7
        %v1633 = vsub.s32 %v1606, %v1632
        %v1634 = vrot.slane %v1593, %v1633
        %v1635 = vlaneseq
        %v1636 = vshrl.u32 %v1635, 7
        %v1637 = vsub.s32 %v1606, %v1636
        %v1638 = vrot.slane %v1596, %v1637
        %vm1639 = vcmask 1041409
        %v1640 = vsel %vm1639, %v1614, %v1610
        %vm1641 = vcmask 1042434
        %v1642 = vsel %vm1641, %v1618, %v1640
        %vm1643 = vcmask 1043459
        %v1644 = vsel %vm1643, %v1622, %v1642
        %vm1645 = vcmask 1044484
        %v1646 = vsel %vm1645, %v1626, %v1644
        %vm1647 = vcmask 1045509
        %v1648 = vsel %vm1647, %v1630, %v1646
        %vm1649 = vcmask 1046534
        %v1650 = vsel %vm1649, %v1634, %v1648
        %vm1651 = vcmask 1047559
        %v1652 = vsel %vm1651, %v1638, %v1650
        %v1654 = vmax.f32 %v1572, %v1652
        %v1655 = vsub.f32 %v1572, %v1654
        %v1656 = vmul.f32 %v1655, 1.442695
        %v1657 = vpow.pop %v1656
        %v1658 = vlaneseq
        %v1659 = vshrl.u32 %v1658, 7
        %v1660 = vsub.s32 0, %v1659
        %v1661 = vrot.slane %v1654, %v1660
        %1663 = vbcast.lane.b32.xlu0 %v1661, 256
        %v1664 = vpop.permute.xlu0 %1663
        %v1665 = vlaneseq
        %v1666 = vshrl.u32 %v1665, 7
        %v1667 = vsub.s32 1, %v1666
        %v1668 = vrot.slane %v1654, %v1667
        %1670 = vbcast.lane.b32.xlu0 %v1668, 256
        %v1671 = vpop.permute.xlu0 %1670
        %v1672 = vlaneseq
        %v1673 = vshrl.u32 %v1672, 7
        %v1674 = vsub.s32 2, %v1673
        %v1675 = vrot.slane %v1654, %v1674
        %1677 = vbcast.lane.b32.xlu0 %v1675, 256
        %v1678 = vpop.permute.xlu0 %1677
        %v1679 = vlaneseq
        %v1680 = vshrl.u32 %v1679, 7
        %v1681 = vsub.s32 3, %v1680
        %v1682 = vrot.slane %v1654, %v1681
        %1684 = vbcast.lane.b32.xlu0 %v1682, 256
        %v1685 = vpop.permute.xlu0 %1684
        %v1686 = vlaneseq
        %v1687 = vshrl.u32 %v1686, 7
        %v1688 = vsub.s32 4, %v1687
        %v1689 = vrot.slane %v1654, %v1688
        %1691 = vbcast.lane.b32.xlu0 %v1689, 256
        %v1692 = vpop.permute.xlu0 %1691
        %v1693 = vlaneseq
        %v1694 = vshrl.u32 %v1693, 7
        %v1695 = vsub.s32 5, %v1694
        %v1696 = vrot.slane %v1654, %v1695
        %1698 = vbcast.lane.b32.xlu0 %v1696, 256
        %v1699 = vpop.permute.xlu0 %1698
        %v1700 = vlaneseq
        %v1701 = vshrl.u32 %v1700, 7
        %v1702 = vsub.s32 6, %v1701
        %v1703 = vrot.slane %v1654, %v1702
        %1705 = vbcast.lane.b32.xlu0 %v1703, 256
        %v1706 = vpop.permute.xlu0 %1705
        %v1707 = vlaneseq
        %v1708 = vshrl.u32 %v1707, 7
        %v1709 = vsub.s32 7, %v1708
        %v1710 = vrot.slane %v1654, %v1709
        %1712 = vbcast.lane.b32.xlu0 %v1710, 256
        %v1713 = vpop.permute.xlu0 %1712
        %v1714 = vsub.f32 %v1154, %v1664
        %v1715 = vsub.f32 %v1213, %v1671
        %v1716 = vsub.f32 %v1272, %v1678
        %v1717 = vsub.f32 %v1331, %v1685
        %v1718 = vsub.f32 %v1390, %v1692
        %v1719 = vsub.f32 %v1449, %v1699
        %v1720 = vsub.f32 %v1508, %v1706
        %v1721 = vsub.f32 %v1567, %v1713
        %v1722 = vmul.f32 %v1714, 1.442695
        %v1723 = vpow.pop %v1722
        %v1724 = vmul.f32 %v1715, 1.442695
        %v1725 = vpow.pop %v1724
        %v1726 = vmul.f32 %v1716, 1.442695
        %v1727 = vpow.pop %v1726
        %v1728 = vmul.f32 %v1717, 1.442695
        %v1729 = vpow.pop %v1728
        %v1730 = vmul.f32 %v1718, 1.442695
        %v1731 = vpow.pop %v1730
        %v1732 = vmul.f32 %v1719, 1.442695
        %v1733 = vpow.pop %v1732
        %v1734 = vmul.f32 %v1720, 1.442695
        %v1735 = vpow.pop %v1734
        %v1736 = vmul.f32 %v1721, 1.442695
        %v1737 = vpow.pop %v1736
        %v1738 = vld [vmem:[#allocation4] sm:$0xff]
        %v1739 = vmul.f32 %v1657, %v1738
        %v1740 = vsel %vm1115, %v1723, 0.0
        %1741 = vadd.xlane.f32.xlu0 %v1740
        %v1742 = vpop.xlane.xlu0 %1741
        %v1743 = vsel %vm1115, %v1725, 0.0
        %1744 = vadd.xlane.f32.xlu0 %v1743
        %v1745 = vpop.xlane.xlu0 %1744
        %v1746 = vsel %vm1115, %v1727, 0.0
        %1747 = vadd.xlane.f32.xlu0 %v1746
        %v1748 = vpop.xlane.xlu0 %1747
        %v1749 = vsel %vm1115, %v1729, 0.0
        %1750 = vadd.xlane.f32.xlu0 %v1749
        %v1751 = vpop.xlane.xlu0 %1750
        %v1752 = vsel %vm1115, %v1731, 0.0
        %1753 = vadd.xlane.f32.xlu0 %v1752
        %v1754 = vpop.xlane.xlu0 %1753
        %v1755 = vsel %vm1115, %v1733, 0.0
        %1756 = vadd.xlane.f32.xlu0 %v1755
        %v1757 = vpop.xlane.xlu0 %1756
        %v1758 = vsel %vm1115, %v1735, 0.0
        %1759 = vadd.xlane.f32.xlu0 %v1758
        %v1760 = vpop.xlane.xlu0 %1759
        %v1761 = vsel %vm1115, %v1737, 0.0
        %1762 = vadd.xlane.f32.xlu0 %v1761
        %v1763 = vpop.xlane.xlu0 %1762
        %v1772 = vlaneseq
        %v1773 = vshrl.u32 %v1772, 7
        %v1774 = vsub.s32 %v1606, %v1773
        %v1775 = vrot.slane %v1742, %v1774
        %v1776 = vlaneseq
        %v1777 = vshrl.u32 %v1776, 7
        %v1778 = vsub.s32 %v1606, %v1777
        %v1779 = vrot.slane %v1745, %v1778
        %v1780 = vlaneseq
        %v1781 = vshrl.u32 %v1780, 7
        %v1782 = vsub.s32 %v1606, %v1781
        %v1783 = vrot.slane %v1748, %v1782
        %v1784 = vlaneseq
        %v1785 = vshrl.u32 %v1784, 7
        %v1786 = vsub.s32 %v1606, %v1785
        %v1787 = vrot.slane %v1751, %v1786
        %v1788 = vlaneseq
        %v1789 = vshrl.u32 %v1788, 7
        %v1790 = vsub.s32 %v1606, %v1789
        %v1791 = vrot.slane %v1754, %v1790
        %v1792 = vlaneseq
        %v1793 = vshrl.u32 %v1792, 7
        %v1794 = vsub.s32 %v1606, %v1793
        %v1795 = vrot.slane %v1757, %v1794
        %v1796 = vlaneseq
        %v1797 = vshrl.u32 %v1796, 7
        %v1798 = vsub.s32 %v1606, %v1797
        %v1799 = vrot.slane %v1760, %v1798
        %v1800 = vlaneseq
        %v1801 = vshrl.u32 %v1800, 7
        %v1802 = vsub.s32 %v1606, %v1801
        %v1803 = vrot.slane %v1763, %v1802
        %v1804 = vsel %vm1639, %v1779, %v1775
        %v1805 = vsel %vm1641, %v1783, %v1804
        %v1806 = vsel %vm1643, %v1787, %v1805
        %v1807 = vsel %vm1645, %v1791, %v1806
        %v1808 = vsel %vm1647, %v1795, %v1807
        %v1809 = vsel %vm1649, %v1799, %v1808
        %v1810 = vsel %vm1651, %v1803, %v1809
        %v1812 = vadd.f32 %v1739, %v1810
        %vm1813 = vcmask 64512
        %1814 = vst.msk [vmem:[#allocation4] sm:$0xff] %vm1813, %v1812
        %1815 = vst.msk [vmem:[#allocation3] sm:$0xff] %vm1813, %v1654
        %v1816 = vpack.c.bf16 %v1723, %v1723
        %v1817 = vpack.c.bf16 %v1725, %v1725
        %v1818 = vpack.c.bf16 %v1727, %v1727
        %v1819 = vpack.c.bf16 %v1729, %v1729
        %v1820 = vpack.c.bf16 %v1731, %v1731
        %v1821 = vpack.c.bf16 %v1733, %v1733
        %v1822 = vpack.c.bf16 %v1735, %v1735
        %v1823 = vpack.c.bf16 %v1737, %v1737
        %v1825 = vsel %vm1115, %v1081, 0
        %v1828 = vsel %vm1115, %v1816, 0
        %1830 = vmatprep.subr.bf16.mxu0 0
        %1831 = vmatpush1.bf16.xpose.msra.mxu0 %v1828
        %1832 = vmatprep.subr.bf16.mxu0 0
        %1833 = vmatpush1.bf16.xpose.msra.mxu0 0
        %1834 = vmatprep.subr.bf16.mxu0 0
        %1835 = vmatpush1.bf16.xpose.msra.mxu0 0
        %1836 = vmatprep.subr.bf16.mxu0 0
        %1837 = vmatpush1.bf16.xpose.msra.mxu0 0
        %1838 = vmatprep.subr.bf16.mxu0 0
        %1839 = vmatpush1.bf16.xpose.msra.mxu0 0
        %1840 = vmatprep.subr.bf16.mxu0 0
        %1841 = vmatpush1.bf16.xpose.msra.mxu0 0
        %1842 = vmatprep.subr.bf16.mxu0 0
        %1843 = vmatpush1.bf16.xpose.msra.mxu0 0
        %1844 = vmatprep.subr.bf16.mxu0 0
        %1845 = vmatpush1.bf16.xpose.msra.mxu0 0
        %1846 = vmatprep.subr.bf16.mxu0 0
        %1847 = vmatpush1.bf16.xpose.msra.mxu0 0
        %1848 = vmatprep.subr.bf16.mxu0 0
        %1849 = vmatpush1.bf16.xpose.msra.mxu0 0
        %1850 = vmatprep.subr.bf16.mxu0 0
        %1851 = vmatpush1.bf16.xpose.msra.mxu0 0
        %1852 = vmatprep.subr.bf16.mxu0 0
        %1853 = vmatpush1.bf16.xpose.msra.mxu0 0
        %1854 = vmatprep.subr.bf16.mxu0 0
        %1855 = vmatpush1.bf16.xpose.msra.mxu0 0
        %1856 = vmatprep.subr.bf16.mxu0 0
        %1857 = vmatpush1.bf16.xpose.msra.mxu0 0
        %1858 = vmatprep.subr.bf16.mxu0 0
        %1859 = vmatpush1.bf16.xpose.msra.mxu0 0
        %1860 = vmatprep.subr.bf16.mxu0 0
        %1861 = vmatpush1.bf16.xpose.msra.mxu0 0
        %1862 = vmatprep.mubr.bf16.mxu0 0
        %1863 = vmatmul.mubr.bf16.gmra.mrb[0].mxu0 %v1825
        %v1864 = vpop.f32.mrb[0].mxu0
        %v1865 = vadd.f32 0.0, %v1864
        %v1866 = vpop.f32.mrb[0].mxu0
        %v1867 = vpop.f32.mrb[0].mxu0
        %v1868 = vadd.f32 0.0, %v1867
        %v1869 = vpop.f32.mrb[0].mxu0
        %1870 = vdwg.mxu0
        %v1872 = vsel %vm1115, %v1082, 0
        %v1875 = vsel %vm1115, %v1817, 0
        %1877 = vmatprep.subr.bf16.mxu0 0
        %1878 = vmatpush1.bf16.xpose.msra.mxu0 %v1875
        %1879 = vmatprep.subr.bf16.mxu0 0
        %1880 = vmatpush1.bf16.xpose.msra.mxu0 0
        %1881 = vmatprep.subr.bf16.mxu0 0
        %1882 = vmatpush1.bf16.xpose.msra.mxu0 0
        %1883 = vmatprep.subr.bf16.mxu0 0
        %1884 = vmatpush1.bf16.xpose.msra.mxu0 0
        %1885 = vmatprep.subr.bf16.mxu0 0
        %1886 = vmatpush1.bf16.xpose.msra.mxu0 0
        %1887 = vmatprep.subr.bf16.mxu0 0
        %1888 = vmatpush1.bf16.xpose.msra.mxu0 0
        %1889 = vmatprep.subr.bf16.mxu0 0
        %1890 = vmatpush1.bf16.xpose.msra.mxu0 0
        %1891 = vmatprep.subr.bf16.mxu0 0
        %1892 = vmatpush1.bf16.xpose.msra.mxu0 0
        %1893 = vmatprep.subr.bf16.mxu0 0
        %1894 = vmatpush1.bf16.xpose.msra.mxu0 0
        %1895 = vmatprep.subr.bf16.mxu0 0
        %1896 = vmatpush1.bf16.xpose.msra.mxu0 0
        %1897 = vmatprep.subr.bf16.mxu0 0
        %1898 = vmatpush1.bf16.xpose.msra.mxu0 0
        %1899 = vmatprep.subr.bf16.mxu0 0
        %1900 = vmatpush1.bf16.xpose.msra.mxu0 0
        %1901 = vmatprep.subr.bf16.mxu0 0
        %1902 = vmatpush1.bf16.xpose.msra.mxu0 0
        %1903 = vmatprep.subr.bf16.mxu0 0
        %1904 = vmatpush1.bf16.xpose.msra.mxu0 0
        %1905 = vmatprep.subr.bf16.mxu0 0
        %1906 = vmatpush1.bf16.xpose.msra.mxu0 0
        %1907 = vmatprep.subr.bf16.mxu0 0
        %1908 = vmatpush1.bf16.xpose.msra.mxu0 0
        %1909 = vmatprep.mubr.bf16.mxu0 0
        %1910 = vmatmul.mubr.bf16.gmra.mrb[0].mxu0 %v1872
        %v1911 = vpop.f32.mrb[0].mxu0
        %v1912 = vadd.f32 0.0, %v1911
        %v1913 = vpop.f32.mrb[0].mxu0
        %v1914 = vpop.f32.mrb[0].mxu0
        %v1915 = vadd.f32 0.0, %v1914
        %v1916 = vpop.f32.mrb[0].mxu0
        %1917 = vdwg.mxu0
        %v1919 = vsel %vm1115, %v1083, 0
        %v1922 = vsel %vm1115, %v1818, 0
        %1924 = vmatprep.subr.bf16.mxu0 0
        %1925 = vmatpush1.bf16.xpose.msra.mxu0 %v1922
        %1926 = vmatprep.subr.bf16.mxu0 0
        %1927 = vmatpush1.bf16.xpose.msra.mxu0 0
        %1928 = vmatprep.subr.bf16.mxu0 0
        %1929 = vmatpush1.bf16.xpose.msra.mxu0 0
        %1930 = vmatprep.subr.bf16.mxu0 0
        %1931 = vmatpush1.bf16.xpose.msra.mxu0 0
        %1932 = vmatprep.subr.bf16.mxu0 0
        %1933 = vmatpush1.bf16.xpose.msra.mxu0 0
        %1934 = vmatprep.subr.bf16.mxu0 0
        %1935 = vmatpush1.bf16.xpose.msra.mxu0 0
        %1936 = vmatprep.subr.bf16.mxu0 0
        %1937 = vmatpush1.bf16.xpose.msra.mxu0 0
        %1938 = vmatprep.subr.bf16.mxu0 0
        %1939 = vmatpush1.bf16.xpose.msra.mxu0 0
        %1940 = vmatprep.subr.bf16.mxu0 0
        %1941 = vmatpush1.bf16.xpose.msra.mxu0 0
        %1942 = vmatprep.subr.bf16.mxu0 0
        %1943 = vmatpush1.bf16.xpose.msra.mxu0 0
        %1944 = vmatprep.subr.bf16.mxu0 0
        %1945 = vmatpush1.bf16.xpose.msra.mxu0 0
        %1946 = vmatprep.subr.bf16.mxu0 0
        %1947 = vmatpush1.bf16.xpose.msra.mxu0 0
        %1948 = vmatprep.subr.bf16.mxu0 0
        %1949 = vmatpush1.bf16.xpose.msra.mxu0 0
        %1950 = vmatprep.subr.bf16.mxu0 0
        %1951 = vmatpush1.bf16.xpose.msra.mxu0 0
        %1952 = vmatprep.subr.bf16.mxu0 0
        %1953 = vmatpush1.bf16.xpose.msra.mxu0 0
        %1954 = vmatprep.subr.bf16.mxu0 0
        %1955 = vmatpush1.bf16.xpose.msra.mxu0 0
        %1956 = vmatprep.mubr.bf16.mxu0 0
        %1957 = vmatmul.mubr.bf16.gmra.mrb[0].mxu0 %v1919
        %v1958 = vpop.f32.mrb[0].mxu0
        %v1959 = vadd.f32 0.0, %v1958
        %v1960 = vpop.f32.mrb[0].mxu0
        %v1961 = vpop.f32.mrb[0].mxu0
        %v1962 = vadd.f32 0.0, %v1961
        %v1963 = vpop.f32.mrb[0].mxu0
        %1964 = vdwg.mxu0
        %v1966 = vsel %vm1115, %v1084, 0
        %v1969 = vsel %vm1115, %v1819, 0
        %1971 = vmatprep.subr.bf16.mxu0 0
        %1972 = vmatpush1.bf16.xpose.msra.mxu0 %v1969
        %1973 = vmatprep.subr.bf16.mxu0 0
        %1974 = vmatpush1.bf16.xpose.msra.mxu0 0
        %1975 = vmatprep.subr.bf16.mxu0 0
        %1976 = vmatpush1.bf16.xpose.msra.mxu0 0
        %1977 = vmatprep.subr.bf16.mxu0 0
        %1978 = vmatpush1.bf16.xpose.msra.mxu0 0
        %1979 = vmatprep.subr.bf16.mxu0 0
        %1980 = vmatpush1.bf16.xpose.msra.mxu0 0
        %1981 = vmatprep.subr.bf16.mxu0 0
        %1982 = vmatpush1.bf16.xpose.msra.mxu0 0
        %1983 = vmatprep.subr.bf16.mxu0 0
        %1984 = vmatpush1.bf16.xpose.msra.mxu0 0
        %1985 = vmatprep.subr.bf16.mxu0 0
        %1986 = vmatpush1.bf16.xpose.msra.mxu0 0
        %1987 = vmatprep.subr.bf16.mxu0 0
        %1988 = vmatpush1.bf16.xpose.msra.mxu0 0
        %1989 = vmatprep.subr.bf16.mxu0 0
        %1990 = vmatpush1.bf16.xpose.msra.mxu0 0
        %1991 = vmatprep.subr.bf16.mxu0 0
        %1992 = vmatpush1.bf16.xpose.msra.mxu0 0
        %1993 = vmatprep.subr.bf16.mxu0 0
        %1994 = vmatpush1.bf16.xpose.msra.mxu0 0
        %1995 = vmatprep.subr.bf16.mxu0 0
        %1996 = vmatpush1.bf16.xpose.msra.mxu0 0
        %1997 = vmatprep.subr.bf16.mxu0 0
        %1998 = vmatpush1.bf16.xpose.msra.mxu0 0
        %1999 = vmatprep.subr.bf16.mxu0 0
        %2000 = vmatpush1.bf16.xpose.msra.mxu0 0
        %2001 = vmatprep.subr.bf16.mxu0 0
        %2002 = vmatpush1.bf16.xpose.msra.mxu0 0
        %2003 = vmatprep.mubr.bf16.mxu0 0
        %2004 = vmatmul.mubr.bf16.gmra.mrb[0].mxu0 %v1966
        %v2005 = vpop.f32.mrb[0].mxu0
        %v2006 = vadd.f32 0.0, %v2005
        %v2007 = vpop.f32.mrb[0].mxu0
        %v2008 = vpop.f32.mrb[0].mxu0
        %v2009 = vadd.f32 0.0, %v2008
        %v2010 = vpop.f32.mrb[0].mxu0
        %2011 = vdwg.mxu0
        %v2013 = vsel %vm1115, %v1085, 0
        %v2016 = vsel %vm1115, %v1820, 0
        %2018 = vmatprep.subr.bf16.mxu0 0
        %2019 = vmatpush1.bf16.xpose.msra.mxu0 %v2016
        %2020 = vmatprep.subr.bf16.mxu0 0
        %2021 = vmatpush1.bf16.xpose.msra.mxu0 0
        %2022 = vmatprep.subr.bf16.mxu0 0
        %2023 = vmatpush1.bf16.xpose.msra.mxu0 0
        %2024 = vmatprep.subr.bf16.mxu0 0
        %2025 = vmatpush1.bf16.xpose.msra.mxu0 0
        %2026 = vmatprep.subr.bf16.mxu0 0
        %2027 = vmatpush1.bf16.xpose.msra.mxu0 0
        %2028 = vmatprep.subr.bf16.mxu0 0
        %2029 = vmatpush1.bf16.xpose.msra.mxu0 0
        %2030 = vmatprep.subr.bf16.mxu0 0
        %2031 = vmatpush1.bf16.xpose.msra.mxu0 0
        %2032 = vmatprep.subr.bf16.mxu0 0
        %2033 = vmatpush1.bf16.xpose.msra.mxu0 0
        %2034 = vmatprep.subr.bf16.mxu0 0
        %2035 = vmatpush1.bf16.xpose.msra.mxu0 0
        %2036 = vmatprep.subr.bf16.mxu0 0
        %2037 = vmatpush1.bf16.xpose.msra.mxu0 0
        %2038 = vmatprep.subr.bf16.mxu0 0
        %2039 = vmatpush1.bf16.xpose.msra.mxu0 0
        %2040 = vmatprep.subr.bf16.mxu0 0
        %2041 = vmatpush1.bf16.xpose.msra.mxu0 0
        %2042 = vmatprep.subr.bf16.mxu0 0
        %2043 = vmatpush1.bf16.xpose.msra.mxu0 0
        %2044 = vmatprep.subr.bf16.mxu0 0
        %2045 = vmatpush1.bf16.xpose.msra.mxu0 0
        %2046 = vmatprep.subr.bf16.mxu0 0
        %2047 = vmatpush1.bf16.xpose.msra.mxu0 0
        %2048 = vmatprep.subr.bf16.mxu0 0
        %2049 = vmatpush1.bf16.xpose.msra.mxu0 0
        %2050 = vmatprep.mubr.bf16.mxu0 0
        %2051 = vmatmul.mubr.bf16.gmra.mrb[0].mxu0 %v2013
        %v2052 = vpop.f32.mrb[0].mxu0
        %v2053 = vadd.f32 0.0, %v2052
        %v2054 = vpop.f32.mrb[0].mxu0
        %v2055 = vpop.f32.mrb[0].mxu0
        %v2056 = vadd.f32 0.0, %v2055
        %v2057 = vpop.f32.mrb[0].mxu0
        %2058 = vdwg.mxu0
        %v2060 = vsel %vm1115, %v1086, 0
        %v2063 = vsel %vm1115, %v1821, 0
        %2065 = vmatprep.subr.bf16.mxu0 0
        %2066 = vmatpush1.bf16.xpose.msra.mxu0 %v2063
        %2067 = vmatprep.subr.bf16.mxu0 0
        %2068 = vmatpush1.bf16.xpose.msra.mxu0 0
        %2069 = vmatprep.subr.bf16.mxu0 0
        %2070 = vmatpush1.bf16.xpose.msra.mxu0 0
        %2071 = vmatprep.subr.bf16.mxu0 0
        %2072 = vmatpush1.bf16.xpose.msra.mxu0 0
        %2073 = vmatprep.subr.bf16.mxu0 0
        %2074 = vmatpush1.bf16.xpose.msra.mxu0 0
        %2075 = vmatprep.subr.bf16.mxu0 0
        %2076 = vmatpush1.bf16.xpose.msra.mxu0 0
        %2077 = vmatprep.subr.bf16.mxu0 0
        %2078 = vmatpush1.bf16.xpose.msra.mxu0 0
        %2079 = vmatprep.subr.bf16.mxu0 0
        %2080 = vmatpush1.bf16.xpose.msra.mxu0 0
        %2081 = vmatprep.subr.bf16.mxu0 0
        %2082 = vmatpush1.bf16.xpose.msra.mxu0 0
        %2083 = vmatprep.subr.bf16.mxu0 0
        %2084 = vmatpush1.bf16.xpose.msra.mxu0 0
        %2085 = vmatprep.subr.bf16.mxu0 0
        %2086 = vmatpush1.bf16.xpose.msra.mxu0 0
        %2087 = vmatprep.subr.bf16.mxu0 0
        %2088 = vmatpush1.bf16.xpose.msra.mxu0 0
        %2089 = vmatprep.subr.bf16.mxu0 0
        %2090 = vmatpush1.bf16.xpose.msra.mxu0 0
        %2091 = vmatprep.subr.bf16.mxu0 0
        %2092 = vmatpush1.bf16.xpose.msra.mxu0 0
        %2093 = vmatprep.subr.bf16.mxu0 0
        %2094 = vmatpush1.bf16.xpose.msra.mxu0 0
        %2095 = vmatprep.subr.bf16.mxu0 0
        %2096 = vmatpush1.bf16.xpose.msra.mxu0 0
        %2097 = vmatprep.mubr.bf16.mxu0 0
        %2098 = vmatmul.mubr.bf16.gmra.mrb[0].mxu0 %v2060
        %v2099 = vpop.f32.mrb[0].mxu0
        %v2100 = vadd.f32 0.0, %v2099
        %v2101 = vpop.f32.mrb[0].mxu0
        %v2102 = vpop.f32.mrb[0].mxu0
        %v2103 = vadd.f32 0.0, %v2102
        %v2104 = vpop.f32.mrb[0].mxu0
        %2105 = vdwg.mxu0
        %v2107 = vsel %vm1115, %v1087, 0
        %v2110 = vsel %vm1115, %v1822, 0
        %2112 = vmatprep.subr.bf16.mxu0 0
        %2113 = vmatpush1.bf16.xpose.msra.mxu0 %v2110
        %2114 = vmatprep.subr.bf16.mxu0 0
        %2115 = vmatpush1.bf16.xpose.msra.mxu0 0
        %2116 = vmatprep.subr.bf16.mxu0 0
        %2117 = vmatpush1.bf16.xpose.msra.mxu0 0
        %2118 = vmatprep.subr.bf16.mxu0 0
        %2119 = vmatpush1.bf16.xpose.msra.mxu0 0
        %2120 = vmatprep.subr.bf16.mxu0 0
        %2121 = vmatpush1.bf16.xpose.msra.mxu0 0
        %2122 = vmatprep.subr.bf16.mxu0 0
        %2123 = vmatpush1.bf16.xpose.msra.mxu0 0
        %2124 = vmatprep.subr.bf16.mxu0 0
        %2125 = vmatpush1.bf16.xpose.msra.mxu0 0
        %2126 = vmatprep.subr.bf16.mxu0 0
        %2127 = vmatpush1.bf16.xpose.msra.mxu0 0
        %2128 = vmatprep.subr.bf16.mxu0 0
        %2129 = vmatpush1.bf16.xpose.msra.mxu0 0
        %2130 = vmatprep.subr.bf16.mxu0 0
        %2131 = vmatpush1.bf16.xpose.msra.mxu0 0
        %2132 = vmatprep.subr.bf16.mxu0 0
        %2133 = vmatpush1.bf16.xpose.msra.mxu0 0
        %2134 = vmatprep.subr.bf16.mxu0 0
        %2135 = vmatpush1.bf16.xpose.msra.mxu0 0
        %2136 = vmatprep.subr.bf16.mxu0 0
        %2137 = vmatpush1.bf16.xpose.msra.mxu0 0
        %2138 = vmatprep.subr.bf16.mxu0 0
        %2139 = vmatpush1.bf16.xpose.msra.mxu0 0
        %2140 = vmatprep.subr.bf16.mxu0 0
        %2141 = vmatpush1.bf16.xpose.msra.mxu0 0
        %2142 = vmatprep.subr.bf16.mxu0 0
        %2143 = vmatpush1.bf16.xpose.msra.mxu0 0
        %2144 = vmatprep.mubr.bf16.mxu0 0
        %2145 = vmatmul.mubr.bf16.gmra.mrb[0].mxu0 %v2107
        %v2146 = vpop.f32.mrb[0].mxu0
        %v2147 = vadd.f32 0.0, %v2146
        %v2148 = vpop.f32.mrb[0].mxu0
        %v2149 = vpop.f32.mrb[0].mxu0
        %v2150 = vadd.f32 0.0, %v2149
        %v2151 = vpop.f32.mrb[0].mxu0
        %2152 = vdwg.mxu0
        %v2154 = vsel %vm1115, %v1088, 0
        %v2157 = vsel %vm1115, %v1823, 0
        %2159 = vmatprep.subr.bf16.mxu0 0
        %2160 = vmatpush1.bf16.xpose.msra.mxu0 %v2157
        %2161 = vmatprep.subr.bf16.mxu0 0
        %2162 = vmatpush1.bf16.xpose.msra.mxu0 0
        %2163 = vmatprep.subr.bf16.mxu0 0
        %2164 = vmatpush1.bf16.xpose.msra.mxu0 0
        %2165 = vmatprep.subr.bf16.mxu0 0
        %2166 = vmatpush1.bf16.xpose.msra.mxu0 0
        %2167 = vmatprep.subr.bf16.mxu0 0
        %2168 = vmatpush1.bf16.xpose.msra.mxu0 0
        %2169 = vmatprep.subr.bf16.mxu0 0
        %2170 = vmatpush1.bf16.xpose.msra.mxu0 0
        %2171 = vmatprep.subr.bf16.mxu0 0
        %2172 = vmatpush1.bf16.xpose.msra.mxu0 0
        %2173 = vmatprep.subr.bf16.mxu0 0
        %2174 = vmatpush1.bf16.xpose.msra.mxu0 0
        %2175 = vmatprep.subr.bf16.mxu0 0
        %2176 = vmatpush1.bf16.xpose.msra.mxu0 0
        %2177 = vmatprep.subr.bf16.mxu0 0
        %2178 = vmatpush1.bf16.xpose.msra.mxu0 0
        %2179 = vmatprep.subr.bf16.mxu0 0
        %2180 = vmatpush1.bf16.xpose.msra.mxu0 0
        %2181 = vmatprep.subr.bf16.mxu0 0
        %2182 = vmatpush1.bf16.xpose.msra.mxu0 0
        %2183 = vmatprep.subr.bf16.mxu0 0
        %2184 = vmatpush1.bf16.xpose.msra.mxu0 0
        %2185 = vmatprep.subr.bf16.mxu0 0
        %2186 = vmatpush1.bf16.xpose.msra.mxu0 0
        %2187 = vmatprep.subr.bf16.mxu0 0
        %2188 = vmatpush1.bf16.xpose.msra.mxu0 0
        %2189 = vmatprep.subr.bf16.mxu0 0
        %2190 = vmatpush1.bf16.xpose.msra.mxu0 0
        %2191 = vmatprep.mubr.bf16.mxu0 0
        %2192 = vmatmul.mubr.bf16.gmra.mrb[0].mxu0 %v2154
        %v2193 = vpop.f32.mrb[0].mxu0
        %v2194 = vadd.f32 0.0, %v2193
        %v2195 = vpop.f32.mrb[0].mxu0
        %v2196 = vpop.f32.mrb[0].mxu0
        %v2197 = vadd.f32 0.0, %v2196
        %v2198 = vpop.f32.mrb[0].mxu0
        %2199 = vdwg.mxu0
        %v2201 = vcombine.high %v1657, %v1657
        %v2203 = vunpack.c.l.s4 1966171168
        %v2204 = vunpack.c.0.s8 %v2203
        %v2205 = vlaneseq
        %v2206 = vshrl.u32 %v2205, 7
        %v2207 = vsub.s32 %v2204, %v2206
        %v2208 = vrot.slane %v1657, %v2207
        %v2210 = vunpack.c.l.s4 1966171168
        %v2211 = vunpack.c.0.s8 %v2210
        %v2212 = vlaneseq
        %v2213 = vshrl.u32 %v2212, 7
        %v2214 = vsub.s32 %v2211, %v2213
        %v2215 = vrot.slane %v2201, %v2214
        %v2216 = vcombine.high %v2208, %v2208
        %v2217 = vcombine.high %v2215, %v2215
        %v2219 = vunpack.c.l.s4 1966171168
        %v2220 = vunpack.c.0.s8 %v2219
        %v2221 = vlaneseq
        %v2222 = vshrl.u32 %v2221, 7
        %v2223 = vsub.s32 %v2220, %v2222
        %v2224 = vrot.slane %v2208, %v2223
        %v2226 = vunpack.c.l.s4 1966171168
        %v2227 = vunpack.c.0.s8 %v2226
        %v2228 = vlaneseq
        %v2229 = vshrl.u32 %v2228, 7
        %v2230 = vsub.s32 %v2227, %v2229
        %v2231 = vrot.slane %v2215, %v2230
        %v2233 = vunpack.c.l.s4 1966171168
        %v2234 = vunpack.c.0.s8 %v2233
        %v2235 = vlaneseq
        %v2236 = vshrl.u32 %v2235, 7
        %v2237 = vsub.s32 %v2234, %v2236
        %v2238 = vrot.slane %v2216, %v2237
        %v2240 = vunpack.c.l.s4 1966171168
        %v2241 = vunpack.c.0.s8 %v2240
        %v2242 = vlaneseq
        %v2243 = vshrl.u32 %v2242, 7
        %v2244 = vsub.s32 %v2241, %v2243
        %v2245 = vrot.slane %v2217, %v2244
        %v2246 = vcombine.high %v2224, %v2224
        %v2247 = vcombine.high %v2231, %v2231
        %v2248 = vcombine.high %v2238, %v2238
        %v2249 = vcombine.high %v2245, %v2245
        %v2250 = vld [vmem:[#allocation5] sm:$0xff]
        %v2251 = vld [vmem:[#allocation5 + $0x8] sm:$0xff]
        %v2252 = vld [vmem:[#allocation5 + $0x10] sm:$0xff]
        %v2253 = vld [vmem:[#allocation5 + $0x18] sm:$0xff]
        %v2254 = vld [vmem:[#allocation5 + $0x20] sm:$0xff]
        %v2255 = vld [vmem:[#allocation5 + $0x28] sm:$0xff]
        %v2256 = vld [vmem:[#allocation5 + $0x30] sm:$0xff]
        %v2257 = vld [vmem:[#allocation5 + $0x38] sm:$0xff]
        %v2258 = vld [vmem:[#allocation5 + $0x40] sm:$0xff]
        %v2259 = vld [vmem:[#allocation5 + $0x48] sm:$0xff]
        %v2260 = vld [vmem:[#allocation5 + $0x50] sm:$0xff]
        %v2261 = vld [vmem:[#allocation5 + $0x58] sm:$0xff]
        %v2262 = vld [vmem:[#allocation5 + $0x60] sm:$0xff]
        %v2263 = vld [vmem:[#allocation5 + $0x68] sm:$0xff]
        %v2264 = vld [vmem:[#allocation5 + $0x70] sm:$0xff]
        %v2265 = vld [vmem:[#allocation5 + $0x78] sm:$0xff]
        %v2266 = vlaneseq
        %v2267 = vshrl.u32 %v2266, 7
        %v2268 = vsub.s32 0, %v2267
        %v2269 = vrot.slane %v2224, %v2268
        %v2270 = vlaneseq
        %v2271 = vshrl.u32 %v2270, 7
        %v2272 = vsub.s32 0, %v2271
        %v2273 = vrot.slane %v2238, %v2272
        %v2274 = vlaneseq
        %v2275 = vshrl.u32 %v2274, 7
        %v2276 = vsub.s32 0, %v2275
        %v2277 = vrot.slane %v2246, %v2276
        %v2278 = vlaneseq
        %v2279 = vshrl.u32 %v2278, 7
        %v2280 = vsub.s32 0, %v2279
        %v2281 = vrot.slane %v2248, %v2280
        %v2282 = vlaneseq
        %v2283 = vshrl.u32 %v2282, 7
        %v2284 = vsub.s32 0, %v2283
        %v2285 = vrot.slane %v2231, %v2284
        %v2286 = vlaneseq
        %v2287 = vshrl.u32 %v2286, 7
        %v2288 = vsub.s32 0, %v2287
        %v2289 = vrot.slane %v2245, %v2288
        %v2290 = vlaneseq
        %v2291 = vshrl.u32 %v2290, 7
        %v2292 = vsub.s32 0, %v2291
        %v2293 = vrot.slane %v2247, %v2292
        %v2294 = vlaneseq
        %v2295 = vshrl.u32 %v2294, 7
        %v2296 = vsub.s32 0, %v2295
        %v2297 = vrot.slane %v2249, %v2296
        %v2306 = vmul.f32 %v2269, %v2250
        %v2307 = vmul.f32 %v2269, %v2251
        %v2308 = vmul.f32 %v2273, %v2252
        %v2309 = vmul.f32 %v2273, %v2253
        %v2310 = vmul.f32 %v2277, %v2254
        %v2311 = vmul.f32 %v2277, %v2255
        %v2312 = vmul.f32 %v2281, %v2256
        %v2313 = vmul.f32 %v2281, %v2257
        %v2314 = vmul.f32 %v2285, %v2258
        %v2315 = vmul.f32 %v2285, %v2259
        %v2316 = vmul.f32 %v2289, %v2260
        %v2317 = vmul.f32 %v2289, %v2261
        %v2318 = vmul.f32 %v2293, %v2262
        %v2319 = vmul.f32 %v2293, %v2263
        %v2320 = vmul.f32 %v2297, %v2264
        %v2321 = vmul.f32 %v2297, %v2265
        %v2322 = vadd.f32 %v2306, %v1865
        %v2323 = vadd.f32 %v2307, %v1868
        %v2324 = vadd.f32 %v2308, %v1912
        %v2325 = vadd.f32 %v2309, %v1915
        %v2326 = vadd.f32 %v2310, %v1959
        %v2327 = vadd.f32 %v2311, %v1962
        %v2328 = vadd.f32 %v2312, %v2006
        %v2329 = vadd.f32 %v2313, %v2009
        %v2330 = vadd.f32 %v2314, %v2053
        %v2331 = vadd.f32 %v2315, %v2056
        %v2332 = vadd.f32 %v2316, %v2100
        %v2333 = vadd.f32 %v2317, %v2103
        %v2334 = vadd.f32 %v2318, %v2147
        %v2335 = vadd.f32 %v2319, %v2150
        %v2336 = vadd.f32 %v2320, %v2194
        %v2337 = vadd.f32 %v2321, %v2197
        %2338 = vst.msk [vmem:[#allocation5] sm:$0xff] %vm1813, %v2322
        %2339 = vst.msk [vmem:[#allocation5 + $0x8] sm:$0xff] %vm1813, %v2323
        %2340 = vst.msk [vmem:[#allocation5 + $0x10] sm:$0xff] %vm1813, %v2324
        %2341 = vst.msk [vmem:[#allocation5 + $0x18] sm:$0xff] %vm1813, %v2325
        %2342 = vst.msk [vmem:[#allocation5 + $0x20] sm:$0xff] %vm1813, %v2326
        %2343 = vst.msk [vmem:[#allocation5 + $0x28] sm:$0xff] %vm1813, %v2327
        %2344 = vst.msk [vmem:[#allocation5 + $0x30] sm:$0xff] %vm1813, %v2328
        %2345 = vst.msk [vmem:[#allocation5 + $0x38] sm:$0xff] %vm1813, %v2329
        %2346 = vst.msk [vmem:[#allocation5 + $0x40] sm:$0xff] %vm1813, %v2330
        %2347 = vst.msk [vmem:[#allocation5 + $0x48] sm:$0xff] %vm1813, %v2331
        %2348 = vst.msk [vmem:[#allocation5 + $0x50] sm:$0xff] %vm1813, %v2332
        %2349 = vst.msk [vmem:[#allocation5 + $0x58] sm:$0xff] %vm1813, %v2333
        %2350 = vst.msk [vmem:[#allocation5 + $0x60] sm:$0xff] %vm1813, %v2334
        %2351 = vst.msk [vmem:[#allocation5 + $0x68] sm:$0xff] %vm1813, %v2335
        %2352 = vst.msk [vmem:[#allocation5 + $0x70] sm:$0xff] %vm1813, %v2336
        %2353 = vst.msk [vmem:[#allocation5 + $0x78] sm:$0xff] %vm1813, %v2337
        // Predicated region
        $region89: #{tpu_custom_call.1} parent=55 // pred_check
          %p2354 = pneg %p534
        $region90: #{tpu_custom_call.1} parent=55 // pred_check_branch
          %2356 = sbr.rel (%p2354) target = $region92
        $region91: #{tpu_custom_call.1} parent=55 // pred_region
          %v2357 = vld [vmem:[#allocation4] sm:$0xff]
          %v2358 = vrcp.pop %v2357
          %v2359 = vld [vmem:[#allocation5] sm:$0xff]
          %v2360 = vld [vmem:[#allocation5 + $0x8] sm:$0xff]
          %v2361 = vld [vmem:[#allocation5 + $0x10] sm:$0xff]
          %v2362 = vld [vmem:[#allocation5 + $0x18] sm:$0xff]
          %v2363 = vld [vmem:[#allocation5 + $0x20] sm:$0xff]
          %v2364 = vld [vmem:[#allocation5 + $0x28] sm:$0xff]
          %v2365 = vld [vmem:[#allocation5 + $0x30] sm:$0xff]
          %v2366 = vld [vmem:[#allocation5 + $0x38] sm:$0xff]
          %v2367 = vld [vmem:[#allocation5 + $0x40] sm:$0xff]
          %v2368 = vld [vmem:[#allocation5 + $0x48] sm:$0xff]
          %v2369 = vld [vmem:[#allocation5 + $0x50] sm:$0xff]
          %v2370 = vld [vmem:[#allocation5 + $0x58] sm:$0xff]
          %v2371 = vld [vmem:[#allocation5 + $0x60] sm:$0xff]
          %v2372 = vld [vmem:[#allocation5 + $0x68] sm:$0xff]
          %v2373 = vld [vmem:[#allocation5 + $0x70] sm:$0xff]
          %v2374 = vld [vmem:[#allocation5 + $0x78] sm:$0xff]
          %v2376 = vcombine.high %v2358, %v2358
          %v2378 = vunpack.c.l.s4 1966171168
          %v2379 = vunpack.c.0.s8 %v2378
          %v2380 = vlaneseq
          %v2381 = vshrl.u32 %v2380, 7
          %v2382 = vsub.s32 %v2379, %v2381
          %v2383 = vrot.slane %v2358, %v2382
          %v2385 = vunpack.c.l.s4 1966171168
          %v2386 = vunpack.c.0.s8 %v2385
          %v2387 = vlaneseq
          %v2388 = vshrl.u32 %v2387, 7
          %v2389 = vsub.s32 %v2386, %v2388
          %v2390 = vrot.slane %v2376, %v2389
          %v2391 = vcombine.high %v2383, %v2383
          %v2392 = vcombine.high %v2390, %v2390
          %v2394 = vunpack.c.l.s4 1966171168
          %v2395 = vunpack.c.0.s8 %v2394
          %v2396 = vlaneseq
          %v2397 = vshrl.u32 %v2396, 7
          %v2398 = vsub.s32 %v2395, %v2397
          %v2399 = vrot.slane %v2383, %v2398
          %v2401 = vunpack.c.l.s4 1966171168
          %v2402 = vunpack.c.0.s8 %v2401
          %v2403 = vlaneseq
          %v2404 = vshrl.u32 %v2403, 7
          %v2405 = vsub.s32 %v2402, %v2404
          %v2406 = vrot.slane %v2390, %v2405
          %v2408 = vunpack.c.l.s4 1966171168
          %v2409 = vunpack.c.0.s8 %v2408
          %v2410 = vlaneseq
          %v2411 = vshrl.u32 %v2410, 7
          %v2412 = vsub.s32 %v2409, %v2411
          %v2413 = vrot.slane %v2391, %v2412
          %v2415 = vunpack.c.l.s4 1966171168
          %v2416 = vunpack.c.0.s8 %v2415
          %v2417 = vlaneseq
          %v2418 = vshrl.u32 %v2417, 7
          %v2419 = vsub.s32 %v2416, %v2418
          %v2420 = vrot.slane %v2392, %v2419
          %v2421 = vcombine.high %v2399, %v2399
          %v2422 = vcombine.high %v2406, %v2406
          %v2423 = vcombine.high %v2413, %v2413
          %v2424 = vcombine.high %v2420, %v2420
          %v2425 = vlaneseq
          %v2426 = vshrl.u32 %v2425, 7
          %v2427 = vsub.s32 0, %v2426
          %v2428 = vrot.slane %v2399, %v2427
          %v2429 = vlaneseq
          %v2430 = vshrl.u32 %v2429, 7
          %v2431 = vsub.s32 0, %v2430
          %v2432 = vrot.slane %v2413, %v2431
          %v2433 = vlaneseq
          %v2434 = vshrl.u32 %v2433, 7
          %v2435 = vsub.s32 0, %v2434
          %v2436 = vrot.slane %v2421, %v2435
          %v2437 = vlaneseq
          %v2438 = vshrl.u32 %v2437, 7
          %v2439 = vsub.s32 0, %v2438
          %v2440 = vrot.slane %v2423, %v2439
          %v2441 = vlaneseq
          %v2442 = vshrl.u32 %v2441, 7
          %v2443 = vsub.s32 0, %v2442
          %v2444 = vrot.slane %v2406, %v2443
          %v2445 = vlaneseq
          %v2446 = vshrl.u32 %v2445, 7
          %v2447 = vsub.s32 0, %v2446
          %v2448 = vrot.slane %v2420, %v2447
          %v2449 = vlaneseq
          %v2450 = vshrl.u32 %v2449, 7
          %v2451 = vsub.s32 0, %v2450
          %v2452 = vrot.slane %v2422, %v2451
          %v2453 = vlaneseq
          %v2454 = vshrl.u32 %v2453, 7
          %v2455 = vsub.s32 0, %v2454
          %v2456 = vrot.slane %v2424, %v2455
          %v2465 = vmul.f32 %v2359, %v2428
          %v2466 = vmul.f32 %v2360, %v2428
          %v2467 = vmul.f32 %v2361, %v2432
          %v2468 = vmul.f32 %v2362, %v2432
          %v2469 = vmul.f32 %v2363, %v2436
          %v2470 = vmul.f32 %v2364, %v2436
          %v2471 = vmul.f32 %v2365, %v2440
          %v2472 = vmul.f32 %v2366, %v2440
          %v2473 = vmul.f32 %v2367, %v2444
          %v2474 = vmul.f32 %v2368, %v2444
          %v2475 = vmul.f32 %v2369, %v2448
          %v2476 = vmul.f32 %v2370, %v2448
          %v2477 = vmul.f32 %v2371, %v2452
          %v2478 = vmul.f32 %v2372, %v2452
          %v2479 = vmul.f32 %v2373, %v2456
          %v2480 = vmul.f32 %v2374, %v2456
          %v2481 = vpack.c.bf16 %v2466, %v2465
          %v2482 = vpack.c.bf16 %v2468, %v2467
          %v2483 = vpack.c.bf16 %v2470, %v2469
          %v2484 = vpack.c.bf16 %v2472, %v2471
          %v2485 = vpack.c.bf16 %v2474, %v2473
          %v2486 = vpack.c.bf16 %v2476, %v2475
          %v2487 = vpack.c.bf16 %v2478, %v2477
          %v2488 = vpack.c.bf16 %v2480, %v2479
          %v2489 = vld [vmem:[#allocation17] sm:$0xf]
          %v2490 = vld [vmem:[#allocation17 + $0x4] sm:$0xf]
          %v2491 = vld [vmem:[#allocation17 + $0x8] sm:$0xf]
          %v2492 = vld [vmem:[#allocation17 + $0xc] sm:$0xf]
          %v2493 = vld [vmem:[#allocation17 + $0x10] sm:$0xf]
          %v2494 = vld [vmem:[#allocation17 + $0x14] sm:$0xf]
          %v2495 = vld [vmem:[#allocation17 + $0x18] sm:$0xf]
          %v2496 = vld [vmem:[#allocation17 + $0x1c] sm:$0xf]
          %v2497 = vld [vmem:[#allocation17 + $0x20] sm:$0xf]
          %v2498 = vld [vmem:[#allocation17 + $0x24] sm:$0xf]
          %v2499 = vld [vmem:[#allocation17 + $0x28] sm:$0xf]
          %v2500 = vld [vmem:[#allocation17 + $0x2c] sm:$0xf]
          %v2501 = vld [vmem:[#allocation17 + $0x30] sm:$0xf]
          %v2502 = vld [vmem:[#allocation17 + $0x34] sm:$0xf]
          %v2503 = vld [vmem:[#allocation17 + $0x38] sm:$0xf]
          %v2504 = vld [vmem:[#allocation17 + $0x3c] sm:$0xf]
          %v2505 = vld [vmem:[%s8] sm:$0x1]
          %v2507 = vlaneseq
          %v2508 = vshrl.u32 %v2507, 7
          %v2509 = vsub.s32 0, %v2508
          %v2510 = vrot.slane %v2505, %v2509
          %2512 = vxpose.xlu0.c.b16.start [1/8] %v2481, 128
          %2513 = vxpose.xlu0.c.b16.cont [2/8] %v2482, 128
          %2514 = vxpose.xlu0.c.b16.cont [3/8] %v2483, 128
          %2515 = vxpose.xlu0.c.b16.cont [4/8] %v2484, 128
          %2516 = vxpose.xlu0.c.b16.cont [5/8] %v2485, 128
          %2517 = vxpose.xlu0.c.b16.cont [6/8] %v2486, 128
          %2518 = vxpose.xlu0.c.b16.cont [7/8] %v2487, 128
          %2519 = vxpose.xlu0.c.b16.end [8/8] %v2488, 128
          %v2520 = vpop.trf.xlu0
          %v2521 = vpop.trf.xlu0
          %v2522 = vpop.trf.xlu0
          %v2523 = vpop.trf.xlu0
          %v2524 = vpop.trf.xlu0
          %v2525 = vpop.trf.xlu0
          %v2526 = vpop.trf.xlu0
          %v2527 = vpop.trf.xlu0
          %v2544 = vunpack.c.l.b16 %v2489
          %v2545 = vunpack.c.l.b16 %v2490
          %v2546 = vunpack.c.l.b16 %v2491
          %v2547 = vunpack.c.l.b16 %v2492
          %v2548 = vunpack.c.l.b16 %v2493
          %v2549 = vunpack.c.l.b16 %v2494
          %v2550 = vunpack.c.l.b16 %v2495
          %v2551 = vunpack.c.l.b16 %v2496
          %v2552 = vunpack.c.l.b16 %v2497
          %v2553 = vunpack.c.l.b16 %v2498
          %v2554 = vunpack.c.l.b16 %v2499
          %v2555 = vunpack.c.l.b16 %v2500
          %v2556 = vunpack.c.l.b16 %v2501
          %v2557 = vunpack.c.l.b16 %v2502
          %v2558 = vunpack.c.l.b16 %v2503
          %v2559 = vunpack.c.l.b16 %v2504
          %v2560 = vpack.c.b16 %v2545, %v2544
          %v2561 = vpack.c.b16 %v2547, %v2546
          %v2562 = vpack.c.b16 %v2549, %v2548
          %v2563 = vpack.c.b16 %v2551, %v2550
          %v2564 = vpack.c.b16 %v2553, %v2552
          %v2565 = vpack.c.b16 %v2555, %v2554
          %v2566 = vpack.c.b16 %v2557, %v2556
          %v2567 = vpack.c.b16 %v2559, %v2558
          %2576 = vmatprep.subr.bf16.mxu0 0
          %2577 = vmatpush1.bf16.msra.mxu0 %v2560
          %2578 = vmatprep.subr.bf16.mxu0 0
          %2579 = vmatpush1.bf16.msra.mxu0 %v2561
          %2580 = vmatprep.subr.bf16.mxu0 0
          %2581 = vmatpush1.bf16.msra.mxu0 %v2562
          %2582 = vmatprep.subr.bf16.mxu0 0
          %2583 = vmatpush1.bf16.msra.mxu0 %v2563
          %2584 = vmatprep.subr.bf16.mxu0 0
          %2585 = vmatpush1.bf16.msra.mxu0 %v2564
          %2586 = vmatprep.subr.bf16.mxu0 0
          %2587 = vmatpush1.bf16.msra.mxu0 %v2565
          %2588 = vmatprep.subr.bf16.mxu0 0
          %2589 = vmatpush1.bf16.msra.mxu0 %v2566
          %2590 = vmatprep.subr.bf16.mxu0 0
          %2591 = vmatpush1.bf16.msra.mxu0 %v2567
          %2592 = vmatprep.subr.bf16.mxu0 0
          %2593 = vmatpush1.bf16.msra.mxu0 0
          %2594 = vmatprep.subr.bf16.mxu0 0
          %2595 = vmatpush1.bf16.msra.mxu0 0
          %2596 = vmatprep.subr.bf16.mxu0 0
          %2597 = vmatpush1.bf16.msra.mxu0 0
          %2598 = vmatprep.subr.bf16.mxu0 0
          %2599 = vmatpush1.bf16.msra.mxu0 0
          %2600 = vmatprep.subr.bf16.mxu0 0
          %2601 = vmatpush1.bf16.msra.mxu0 0
          %2602 = vmatprep.subr.bf16.mxu0 0
          %2603 = vmatpush1.bf16.msra.mxu0 0
          %2604 = vmatprep.subr.bf16.mxu0 0
          %2605 = vmatpush1.bf16.msra.mxu0 0
          %2606 = vmatprep.subr.bf16.mxu0 0
          %2607 = vmatpush1.bf16.msra.mxu0 0
          %2608 = vmatprep.mubr.bf16.mxu0 0
          %2609 = vmatmul.mubr.bf16.gmra.mrb[0].mxu0 %v2520
          %v2610 = vpop.f32.mrb[0].mxu0
          %v2611 = vadd.f32 %v2510, %v2610
          %v2612 = vpop.f32.mrb[0].mxu0
          %v2613 = vpop.f32.mrb[0].mxu0
          %v2614 = vpop.f32.mrb[0].mxu0
          %2615 = vdwg.mxu0
          %2616 = vst [vmem:[%s523] sm:$0xff] %v2611
        $region92: #{tpu_custom_call.1} parent=55 // pred_fallthru
          _
        %s2617 = sand.u32 %s266, 1
        %s2618 = scalar_lea.sflag [#allocation8], %s2617
        %s2619 = sand.u32 %s266, 1
        %s2620 = smul.addr %s2619, 8
        %s2621 = scalar_lea.vmem [#allocation18], %s2620
        // Predicated region
        $region93: #{tpu_custom_call.1} parent=55 // pred_check
          %p2622 = pneg %p276
        $region94: #{tpu_custom_call.1} parent=55 // pred_check_branch
          %2624 = sbr.rel (%p2622) target = $region96
        $region95: #{tpu_custom_call.1} parent=55 // pred_region
          %s2626 = ssub.s32 128, 128
          %2627 = vsyncadd %s2618, %s2626
          %s2628 = smul.addr %s35, 128
          %s2629 = scalar_lea.hbm %s9, %s2628
          %s2631 = sshll.u32 %s2621, 4
          %s2632 = int_to_ptr.vmem [resolvable:$true] %s2631
          %2634 = dma.vmem_to_hbm [thread:$0]  %s2632, 128, %s2629, %s2618
        $region96: #{tpu_custom_call.1} parent=55 // pred_fallthru
          _
      $region56: #{tpu_custom_call.1} parent=5 // pred_fallthru
        _
      %p2635 = scmp.le.s32.totalorder 2, %s26
      // Predicated region
      $region97: #{tpu_custom_call.1} parent=5 // pred_check
        %p2636 = pneg %p2635
      $region98: #{tpu_custom_call.1} parent=5 // pred_check_branch
        %2638 = sbr.rel (%p2636) target = $region100
      $region99: #{tpu_custom_call.1} parent=5 // pred_region
        %s2639 = ssub.s32 %s26, 2
        // Predicated region
        $region101: #{tpu_custom_call.1} parent=99 // pred_check
          %p2640 = pneg %p282
        $region102: #{tpu_custom_call.1} parent=99 // pred_check_branch
          %2642 = sbr.rel (%p2640) target = $region104
        $region103: #{tpu_custom_call.1} parent=99 // pred_region
          %s2643 = sand.u32 %s267, 1
          %s2644 = scalar_lea.sflag [#allocation8], %s2643
          %s2645 = sand.u32 %s267, 1
          %s2646 = smul.addr %s2645, 8
          %s2647 = scalar_lea.vmem [#allocation18], %s2646
          %2648 = dma.done %s2644, 128
        $region104: #{tpu_custom_call.1} parent=99 // pred_fallthru
          _
      $region100: #{tpu_custom_call.1} parent=5 // pred_fallthru
        _
    $region6: #{tpu_custom_call.1} parent=1 // loop_footer
      %s30 = sadd.s32 1, %s26
    $region7: #{tpu_custom_call.1} parent=1 // loop_footer_branch
      %25 = sbr.rel target = $region3
    $region8: #{tpu_custom_call.1} parent=1 // loop_exit
      _
    %2649 = vsyncpa [#allocation7], 1
    %s2650 = scalar_lea.sflag [#allocation7], 1
    %2651 = vsyncpa %s2650, 1
    %2652 = vsyncpa [#allocation10], 1
    %s2653 = scalar_lea.sflag [#allocation10], 1
    %2654 = vsyncpa %s2653, 1
    %2655 = vsyncpa [#allocation13], 1
    %2656 = vsyncpa [#allocation16], 1
    %2657 = vsyncpa [#allocation8], 1
    %s2658 = scalar_lea.sflag [#allocation8], 1
    %2659 = vsyncpa %s2658, 1

// kernel: tpu_custom_call.1
$region0: #{tpu_custom_call.1}
  #allocation0 [shape = 'u32[]', space=smem, size = 0x4, offset = 0x4, fixed_abs, tag = 'smem constant byte address 0x4 - core index']
  #allocation1 [shape = 'u32[144,128]{1,0:T(1,128)}', space=vmem, size = 0x12000, scoped, tag = 'internal scratch']
  #allocation2 [shape = 'bf16[8,16,8]{2,1,0:T(16,128)(2,1)}', space=vmem, size = 0x8000, scoped, tag = 'scratch operand']
  #allocation3 [shape = 'f32[8,8]{1,0:T(8,128)}', space=vmem, size = 0x1000, scoped, tag = 'scratch operand']
  #allocation4 [shape = 'f32[8,8]{1,0:T(8,128)}', space=vmem, size = 0x1000, scoped, tag = 'scratch operand']
  #allocation5 [shape = 'f32[8,16,8]{2,1,0:T(8,128)}', space=vmem, size = 0x10000, scoped, tag = 'scratch operand']
  %s0 = inlined_call_operand.hbm [shape: bf16[2,8,128], index: 0, kind: input, shape index: {}]
  %s1 = inlined_call_operand.hbm [shape: bf16[2,16,128], index: 1, kind: input, shape index: {}]
  %s2 = inlined_call_operand.hbm [shape: bf16[2,16,128], index: 2, kind: input, shape index: {}]
  %s3 = inlined_call_operand.vmem [shape: bf16[2,1,8,16], index: 3, kind: input, shape index: {}]
  %s4 = inlined_call_operand.hbm [shape: bf16[128,128], index: 4, kind: input, shape index: {}]
  %s5 = inlined_call_operand.hbm [shape: bf16[128,128], index: 5, kind: input, shape index: {}]
  %s6 = inlined_call_operand.hbm [shape: bf16[128,128], index: 6, kind: input, shape index: {}]
  %s7 = inlined_call_operand.hbm [shape: bf16[128,128], index: 7, kind: input, shape index: {}]
  %s8 = inlined_call_operand.vmem [shape: f32[1,128], index: 8, kind: input, shape index: {}]
  %s9 = inlined_call_operand.hbm [shape: f32[2,8,128], index: 9, kind: output, shape index: {}]
  %s10 = sld [smem:[#allocation0]]
  $region105: #{tpu_custom_call.1} parent=0
    _
  %s12 = ssub.s32 1, %s10
  %s13 = scalar_select 0, %s12, %s10
  $region1: #{tpu_custom_call.1} parent=0
    #allocation6 [shape = 'u8[4096]{0}', space=vmem, size = 0x1000, scoped, tag = 'input window, operand 0']
    #allocation7 [shape = 's32[2]{0}', space=sflag, size = 0x8, scoped, tag = 'scoped memory for tpu_custom_call.1']
    #allocation8 [shape = 's32[2]{0}', space=sflag, size = 0x8, scoped, tag = 'scoped memory for tpu_custom_call.1']
    #allocation9 [shape = 'u8[8192]{0}', space=vmem, size = 0x2000, scoped, tag = 'input window, operand 1']
    #allocation10 [shape = 's32[2]{0}', space=sflag, size = 0x8, scoped, tag = 'scoped memory for tpu_custom_call.1']
    #allocation11 [shape = 'u8[8192]{0}', space=vmem, size = 0x2000, scoped, tag = 'input window, operand 2']
    #allocation12 [shape = 'u8[32768]{0}', space=vmem, size = 0x8000, scoped, tag = 'input window, operand 4, single buffered']
    #allocation13 [shape = 's32[1]{0}', space=sflag, size = 0x4, scoped, tag = 'scoped memory for tpu_custom_call.1']
    #allocation14 [shape = 'u8[32768]{0}', space=vmem, size = 0x8000, scoped, tag = 'input window, operand 5, single buffered']
    #allocation15 [shape = 'u8[32768]{0}', space=vmem, size = 0x8000, scoped, tag = 'input window, operand 6, single buffered']
    #allocation16 [shape = 's32[1]{0}', space=sflag, size = 0x4, scoped, tag = 'scoped memory for tpu_custom_call.1']
    #allocation17 [shape = 'u8[32768]{0}', space=vmem, size = 0x8000, scoped, tag = 'input window, operand 7, single buffered']
    #allocation18 [shape = 'u8[8192]{0}', space=vmem, size = 0x2000, scoped, tag = 'output window, operand 0']
    %14 = vsyncpa [#allocation7], 0
    %s15 = scalar_lea.sflag [#allocation7], 1
    %16 = vsyncpa %s15, 0
    %17 = vsyncpa [#allocation10], 0
    %s18 = scalar_lea.sflag [#allocation10], 1
    %19 = vsyncpa %s18, 0
    %20 = vsyncpa [#allocation13], 0
    %21 = vsyncpa [#allocation16], 0
    %22 = vsyncpa [#allocation8], 0
    %s23 = scalar_lea.sflag [#allocation8], 1
    %24 = vsyncpa %s23, 0
    loop: start=0, step=1, limit=4
    $region2: #{tpu_custom_call.1} parent=1 // loop_pre_header
      _
    $region3: #{tpu_custom_call.1} parent=1 // loop_header
      %s26 = sphi 0, %s30
      %p27 = scmp.ge.s32.totalorder %s26, 4
      %s33 = sphi 0, %s45
      %s34 = sphi 0, %s41
      %s35 = sphi 0, %s33
      %s36 = sphi 0, %s34
      %s37 = sphi 0, %s35
      %s38 = sphi 0, %s36
      %s48 = sphi 0, %s50
      %s51 = sphi 0, %s48
      %s52 = sphi 0, %s51
      %s68 = sphi 0, %s52
      %s76 = sphi 0, %s78
      %s79 = sphi 0, %s76
      %s80 = sphi 0, %s79
      %s96 = sphi 0, %s80
      %s104 = sphi 0, %s106
      %s107 = sphi 0, %s104
      %s108 = sphi 0, %s107
      %s124 = sphi 0, %s108
      %s132 = sphi 0, %s134
      %s135 = sphi 0, %s132
      %s136 = sphi 0, %s135
      %s152 = sphi 0, %s136
      %s156 = sphi 0, %s156
      %s158 = sphi 0, %s156
      %s159 = sphi 0, %s158
      %s173 = sphi 0, %s159
      %s177 = sphi 0, %s177
      %s179 = sphi 0, %s177
      %s180 = sphi 0, %s179
      %s194 = sphi 0, %s180
      %s198 = sphi 0, %s198
      %s200 = sphi 0, %s198
      %s201 = sphi 0, %s200
      %s215 = sphi 0, %s201
      %s219 = sphi 0, %s219
      %s221 = sphi 0, %s219
      %s222 = sphi 0, %s221
      %s236 = sphi 0, %s222
      %s240 = sphi 0, %s240
      %s242 = sphi 0, %s240
      %s243 = sphi 0, %s242
      %s257 = sphi 0, %s243
      %s263 = sphi 0, %s265
      %s266 = sphi 0, %s263
      %s267 = sphi 0, %s266
      %s283 = sphi 0, %s267
    $region4: #{tpu_custom_call.1} parent=1 // loop_header_branch
      %29 = sbr.rel (%p27) target = $region8
    $region5: #{tpu_custom_call.1} parent=1 // loop_body
      %s31 = ssub.s32 %s26, 1
      %s32 = ssub.s32 %s26, 2
      %s39 = sadd.s32 1, %s34
      %p40 = scmp.ge.s32.totalorder %s39, 1
      %s41 = scalar_select %p40, 0, %s39
      %s42 = sadd.s32 1, %s33
      %s43 = scalar_select %p40, %s42, %s33
      %p44 = scmp.ge.s32.totalorder %s43, 2
      %s45 = scalar_select %p44, 0, %s43
      %s46 = ssub.s32 %s33, %s45
      %p47 = scmp.eq.s32.totalorder %s46, 0
      %s49 = sadd.s32 %s48, 1
      %s50 = scalar_select %p47, %s48, %s49
      %p53 = pneg %p47
      %p54 = scmp.eq.s32.totalorder %s26, 1
      %p55 = por %p53, %p54
      %p56 = scmp.ne.s32.totalorder %s48, %s51
      %p57 = scmp.eq.s32.totalorder %s26, 0
      %p58 = por %p56, %p57
      %p59 = scmp.ne.s32.totalorder %s48, %s51
      %p60 = scmp.eq.s32.totalorder %s31, 1
      %p61 = por %p59, %p60
      %p62 = scmp.ne.s32.totalorder %s51, %s52
      %p63 = scmp.eq.s32.totalorder %s31, 0
      %p64 = por %p62, %p63
      %p65 = scmp.ne.s32.totalorder %s51, %s52
      %p66 = scmp.eq.s32.totalorder %s32, 1
      %p67 = por %p65, %p66
      %p69 = scmp.ne.s32.totalorder %s52, %s68
      %p70 = scmp.eq.s32.totalorder %s32, 0
      %p71 = por %p69, %p70
      %s72 = ssub.s32 %s33, %s45
      %s73 = ssub.s32 %s34, %s41
      %s74 = sor.u32 %s72, %s73
      %p75 = scmp.eq.s32.totalorder %s74, 0
      %s77 = sadd.s32 %s76, 1
      %s78 = scalar_select %p75, %s76, %s77
      %p81 = pneg %p75
      %p82 = scmp.eq.s32.totalorder %s26, 1
      %p83 = por %p81, %p82
      %p84 = scmp.ne.s32.totalorder %s76, %s79
      %p85 = scmp.eq.s32.totalorder %s26, 0
      %p86 = por %p84, %p85
      %p87 = scmp.ne.s32.totalorder %s76, %s79
      %p88 = scmp.eq.s32.totalorder %s31, 1
      %p89 = por %p87, %p88
      %p90 = scmp.ne.s32.totalorder %s79, %s80
      %p91 = scmp.eq.s32.totalorder %s31, 0
      %p92 = por %p90, %p91
      %p93 = scmp.ne.s32.totalorder %s79, %s80
      %p94 = scmp.eq.s32.totalorder %s32, 1
      %p95 = por %p93, %p94
      %p97 = scmp.ne.s32.totalorder %s80, %s96
      %p98 = scmp.eq.s32.totalorder %s32, 0
      %p99 = por %p97, %p98
      %s100 = ssub.s32 %s33, %s45
      %s101 = ssub.s32 %s34, %s41
      %s102 = sor.u32 %s100, %s101
      %p103 = scmp.eq.s32.totalorder %s102, 0
      %s105 = sadd.s32 %s104, 1
      %s106 = scalar_select %p103, %s104, %s105
      %p109 = pneg %p103
      %p110 = scmp.eq.s32.totalorder %s26, 1
      %p111 = por %p109, %p110
      %p112 = scmp.ne.s32.totalorder %s104, %s107
      %p113 = scmp.eq.s32.totalorder %s26, 0
      %p114 = por %p112, %p113
      %p115 = scmp.ne.s32.totalorder %s104, %s107
      %p116 = scmp.eq.s32.totalorder %s31, 1
      %p117 = por %p115, %p116
      %p118 = scmp.ne.s32.totalorder %s107, %s108
      %p119 = scmp.eq.s32.totalorder %s31, 0
      %p120 = por %p118, %p119
      %p121 = scmp.ne.s32.totalorder %s107, %s108
      %p122 = scmp.eq.s32.totalorder %s32, 1
      %p123 = por %p121, %p122
      %p125 = scmp.ne.s32.totalorder %s108, %s124
      %p126 = scmp.eq.s32.totalorder %s32, 0
      %p127 = por %p125, %p126
      %s128 = ssub.s32 %s33, %s45
      %s129 = ssub.s32 %s34, %s41
      %s130 = sor.u32 %s128, %s129
      %p131 = scmp.eq.s32.totalorder %s130, 0
      %s133 = sadd.s32 %s132, 1
      %s134 = scalar_select %p131, %s132, %s133
      %p137 = pneg %p131
      %p138 = scmp.eq.s32.totalorder %s26, 1
      %p139 = por %p137, %p138
      %p140 = scmp.ne.s32.totalorder %s132, %s135
      %p141 = scmp.eq.s32.totalorder %s26, 0
      %p142 = por %p140, %p141
      %p143 = scmp.ne.s32.totalorder %s132, %s135
      %p144 = scmp.eq.s32.totalorder %s31, 1
      %p145 = por %p143, %p144
      %p146 = scmp.ne.s32.totalorder %s135, %s136
      %p147 = scmp.eq.s32.totalorder %s31, 0
      %p148 = por %p146, %p147
      %p149 = scmp.ne.s32.totalorder %s135, %s136
      %p150 = scmp.eq.s32.totalorder %s32, 1
      %p151 = por %p149, %p150
      %p153 = scmp.ne.s32.totalorder %s136, %s152
      %p154 = scmp.eq.s32.totalorder %s32, 0
      %p155 = por %p153, %p154
      %s157 = sadd.s32 %s156, 1
      %p160 = scmp.eq.s32.totalorder %s26, 1
      %p161 = scmp.ne.s32.totalorder %s156, %s158
      %p162 = scmp.eq.s32.totalorder %s26, 0
      %p163 = por %p161, %p162
      %p164 = scmp.ne.s32.totalorder %s156, %s158
      %p165 = scmp.eq.s32.totalorder %s31, 1
      %p166 = por %p164, %p165
      %p167 = scmp.ne.s32.totalorder %s158, %s159
      %p168 = scmp.eq.s32.totalorder %s31, 0
      %p169 = por %p167, %p168
      %p170 = scmp.ne.s32.totalorder %s158, %s159
      %p171 = scmp.eq.s32.totalorder %s32, 1
      %p172 = por %p170, %p171
      %p174 = scmp.ne.s32.totalorder %s159, %s173
      %p175 = scmp.eq.s32.totalorder %s32, 0
      %p176 = por %p174, %p175
      %s178 = sadd.s32 %s177, 1
      %p181 = scmp.eq.s32.totalorder %s26, 1
      %p182 = scmp.ne.s32.totalorder %s177, %s179
      %p183 = scmp.eq.s32.totalorder %s26, 0
      %p184 = por %p182, %p183
      %p185 = scmp.ne.s32.totalorder %s177, %s179
      %p186 = scmp.eq.s32.totalorder %s31, 1
      %p187 = por %p185, %p186
      %p188 = scmp.ne.s32.totalorder %s179, %s180
      %p189 = scmp.eq.s32.totalorder %s31, 0
      %p190 = por %p188, %p189
      %p191 = scmp.ne.s32.totalorder %s179, %s180
      %p192 = scmp.eq.s32.totalorder %s32, 1
      %p193 = por %p191, %p192
      %p195 = scmp.ne.s32.totalorder %s180, %s194
      %p196 = scmp.eq.s32.totalorder %s32, 0
      %p197 = por %p195, %p196
      %s199 = sadd.s32 %s198, 1
      %p202 = scmp.eq.s32.totalorder %s26, 1
      %p203 = scmp.ne.s32.totalorder %s198, %s200
      %p204 = scmp.eq.s32.totalorder %s26, 0
      %p205 = por %p203, %p204
      %p206 = scmp.ne.s32.totalorder %s198, %s200
      %p207 = scmp.eq.s32.totalorder %s31, 1
      %p208 = por %p206, %p207
      %p209 = scmp.ne.s32.totalorder %s200, %s201
      %p210 = scmp.eq.s32.totalorder %s31, 0
      %p211 = por %p209, %p210
      %p212 = scmp.ne.s32.totalorder %s200, %s201
      %p213 = scmp.eq.s32.totalorder %s32, 1
      %p214 = por %p212, %p213
      %p216 = scmp.ne.s32.totalorder %s201, %s215
      %p217 = scmp.eq.s32.totalorder %s32, 0
      %p218 = por %p216, %p217
      %s220 = sadd.s32 %s219, 1
      %p223 = scmp.eq.s32.totalorder %s26, 1
      %p224 = scmp.ne.s32.totalorder %s219, %s221
      %p225 = scmp.eq.s32.totalorder %s26, 0
      %p226 = por %p224, %p225
      %p227 = scmp.ne.s32.totalorder %s219, %s221
      %p228 = scmp.eq.s32.totalorder %s31, 1
      %p229 = por %p227, %p228
      %p230 = scmp.ne.s32.totalorder %s221, %s222
      %p231 = scmp.eq.s32.totalorder %s31, 0
      %p232 = por %p230, %p231
      %p233 = scmp.ne.s32.totalorder %s221, %s222
      %p234 = scmp.eq.s32.totalorder %s32, 1
      %p235 = por %p233, %p234
      %p237 = scmp.ne.s32.totalorder %s222, %s236
      %p238 = scmp.eq.s32.totalorder %s32, 0
      %p239 = por %p237, %p238
      %s241 = sadd.s32 %s240, 1
      %p244 = scmp.eq.s32.totalorder %s26, 1
      %p245 = scmp.ne.s32.totalorder %s240, %s242
      %p246 = scmp.eq.s32.totalorder %s26, 0
      %p247 = por %p245, %p246
      %p248 = scmp.ne.s32.totalorder %s240, %s242
      %p249 = scmp.eq.s32.totalorder %s31, 1
      %p250 = por %p248, %p249
      %p251 = scmp.ne.s32.totalorder %s242, %s243
      %p252 = scmp.eq.s32.totalorder %s31, 0
      %p253 = por %p251, %p252
      %p254 = scmp.ne.s32.totalorder %s242, %s243
      %p255 = scmp.eq.s32.totalorder %s32, 1
      %p256 = por %p254, %p255
      %p258 = scmp.ne.s32.totalorder %s243, %s257
      %p259 = scmp.eq.s32.totalorder %s32, 0
      %p260 = por %p258, %p259
      %s261 = ssub.s32 %s33, %s45
      %p262 = scmp.eq.s32.totalorder %s261, 0
      %s264 = sadd.s32 %s263, 1
      %s265 = scalar_select %p262, %s263, %s264
      %p268 = pneg %p262
      %p269 = scmp.eq.s32.totalorder %s26, 1
      %p270 = por %p268, %p269
      %p271 = scmp.ne.s32.totalorder %s263, %s266
      %p272 = scmp.eq.s32.totalorder %s26, 0
      %p273 = por %p271, %p272
      %p274 = scmp.ne.s32.totalorder %s263, %s266
      %p275 = scmp.eq.s32.totalorder %s31, 1
      %p276 = por %p274, %p275
      %p277 = scmp.ne.s32.totalorder %s266, %s267
      %p278 = scmp.eq.s32.totalorder %s31, 0
      %p279 = por %p277, %p278
      %p280 = scmp.ne.s32.totalorder %s266, %s267
      %p281 = scmp.eq.s32.totalorder %s32, 1
      %p282 = por %p280, %p281
      %p284 = scmp.ne.s32.totalorder %s267, %s283
      %p285 = scmp.eq.s32.totalorder %s32, 0
      %p286 = por %p284, %p285
      %p287 = scmp.le.s32.totalorder 1, %s26
      %p288 = scmp.lt.s32.totalorder %s26, 3
      %p289 = pnand %p287, %p288
      %p290 = pneg %p289
      // Predicated region
      $region9: #{tpu_custom_call.1} parent=5 // pred_check
        _
      $region10: #{tpu_custom_call.1} parent=5 // pred_check_branch
        %292 = sbr.rel (%p289) target = $region12
      $region11: #{tpu_custom_call.1} parent=5 // pred_region
        %s293 = ssub.s32 %s26, 1
        // Predicated region
        $region13: #{tpu_custom_call.1} parent=11 // pred_check
          %p294 = pneg %p169
        $region14: #{tpu_custom_call.1} parent=11 // pred_check_branch
          %296 = sbr.rel (%p294) target = $region16
        $region15: #{tpu_custom_call.1} parent=11 // pred_region
          %s298 = ssub.s32 1024, 1024
          %299 = vsyncadd [#allocation13], %s298
          %s300 = sshll.u32 [#allocation12], 4
          %s301 = int_to_ptr.vmem [resolvable:$true] %s300
          %306 = dma.hbm_to_vmem [thread:$0]  %s4, 1024, %s301, [#allocation13], 64, 64, 4
        $region16: #{tpu_custom_call.1} parent=11 // pred_fallthru
          _
        // Predicated region
        $region17: #{tpu_custom_call.1} parent=11 // pred_check
          %p307 = pneg %p190
        $region18: #{tpu_custom_call.1} parent=11 // pred_check_branch
          %309 = sbr.rel (%p307) target = $region20
        $region19: #{tpu_custom_call.1} parent=11 // pred_region
          %s311 = ssub.s32 1024, 1024
          %312 = vsyncadd [#allocation13], %s311
          %s313 = sshll.u32 [#allocation14], 4
          %s314 = int_to_ptr.vmem [resolvable:$true] %s313
          %319 = dma.hbm_to_vmem [thread:$0]  %s5, 1024, %s314, [#allocation13], 64, 64, 4
        $region20: #{tpu_custom_call.1} parent=11 // pred_fallthru
          _
        // Predicated region
        $region21: #{tpu_custom_call.1} parent=11 // pred_check
          %p320 = pneg %p211
        $region22: #{tpu_custom_call.1} parent=11 // pred_check_branch
          %322 = sbr.rel (%p320) target = $region24
        $region23: #{tpu_custom_call.1} parent=11 // pred_region
          %s324 = ssub.s32 1024, 1024
          %325 = vsyncadd [#allocation16], %s324
          %s326 = sshll.u32 [#allocation15], 4
          %s327 = int_to_ptr.vmem [resolvable:$true] %s326
          %332 = dma.hbm_to_vmem [thread:$0]  %s6, 1024, %s327, [#allocation16], 64, 64, 4
        $region24: #{tpu_custom_call.1} parent=11 // pred_fallthru
          _
        // Predicated region
        $region25: #{tpu_custom_call.1} parent=11 // pred_check
          %p333 = pneg %p232
        $region26: #{tpu_custom_call.1} parent=11 // pred_check_branch
          %335 = sbr.rel (%p333) target = $region28
        $region27: #{tpu_custom_call.1} parent=11 // pred_region
          %s337 = ssub.s32 1024, 1024
          %338 = vsyncadd [#allocation16], %s337
          %s339 = sshll.u32 [#allocation17], 4
          %s340 = int_to_ptr.vmem [resolvable:$true] %s339
          %345 = dma.hbm_to_vmem [thread:$0]  %s7, 1024, %s340, [#allocation16], 64, 64, 4
        $region28: #{tpu_custom_call.1} parent=11 // pred_fallthru
          _
        // Predicated region
        $region29: #{tpu_custom_call.1} parent=11 // pred_check
          %p346 = pneg %p253
        $region30: #{tpu_custom_call.1} parent=11 // pred_check_branch
          %348 = sbr.rel (%p346) target = $region32
        $region31: #{tpu_custom_call.1} parent=11 // pred_region
          _
        $region32: #{tpu_custom_call.1} parent=11 // pred_fallthru
          _
      $region12: #{tpu_custom_call.1} parent=5 // pred_fallthru
        _
      %p349 = scmp.lt.s32.totalorder %s26, 2
      // Predicated region
      $region33: #{tpu_custom_call.1} parent=5 // pred_check
        %p350 = pneg %p349
      $region34: #{tpu_custom_call.1} parent=5 // pred_check_branch
        %352 = sbr.rel (%p350) target = $region36
      $region35: #{tpu_custom_call.1} parent=5 // pred_region
        // Predicated region
        $region37: #{tpu_custom_call.1} parent=35 // pred_check
          %p353 = pneg %p58
        $region38: #{tpu_custom_call.1} parent=35 // pred_check_branch
          %355 = sbr.rel (%p353) target = $region40
        $region39: #{tpu_custom_call.1} parent=35 // pred_region
          %s356 = sand.u32 %s48, 1
          %s357 = scalar_lea.sflag [#allocation7], %s356
          %s358 = sand.u32 %s48, 1
          %s359 = smul.addr %s358, 4
          %s360 = scalar_lea.vmem [#allocation6], %s359
          %s362 = ssub.s32 64, 64
          %363 = vsyncadd %s357, %s362
          %s364 = smul.addr %s33, 64
          %s365 = scalar_lea.hbm %s0, %s364
          %s367 = sshll.u32 %s360, 4
          %s368 = int_to_ptr.vmem [resolvable:$true] %s367
          %370 = dma.hbm_to_vmem [thread:$0]  %s365, 64, %s368, %s357
        $region40: #{tpu_custom_call.1} parent=35 // pred_fallthru
          _
        // Predicated region
        $region41: #{tpu_custom_call.1} parent=35 // pred_check
          %p371 = pneg %p86
        $region42: #{tpu_custom_call.1} parent=35 // pred_check_branch
          %373 = sbr.rel (%p371) target = $region44
        $region43: #{tpu_custom_call.1} parent=35 // pred_region
          %s374 = sand.u32 %s26, 1
          %s375 = scalar_lea.sflag [#allocation10], %s374
          %s376 = sand.u32 %s76, 1
          %s377 = smul.addr %s376, 8
          %s378 = scalar_lea.vmem [#allocation9], %s377
          %s379 = smul.u32 2, %s34
          %s381 = ssub.s32 128, 128
          %382 = vsyncadd %s375, %s381
          %s383 = smul.addr %s33, 2
          %s384 = sadd.s32 %s379, %s383
          %s385 = smul.addr %s384, 64
          %s386 = scalar_lea.hbm %s1, %s385
          %s387 = sshll.u32 %s378, 4
          %s388 = int_to_ptr.vmem [resolvable:$true] %s387
          %393 = dma.hbm_to_vmem [thread:$0]  %s386, 128, %s388, %s375, 64, 64, 4
        $region44: #{tpu_custom_call.1} parent=35 // pred_fallthru
          _
        // Predicated region
        $region45: #{tpu_custom_call.1} parent=35 // pred_check
          %p394 = pneg %p114
        $region46: #{tpu_custom_call.1} parent=35 // pred_check_branch
          %396 = sbr.rel (%p394) target = $region48
        $region47: #{tpu_custom_call.1} parent=35 // pred_region
          %s397 = sand.u32 %s26, 1
          %s398 = scalar_lea.sflag [#allocation10], %s397
          %s399 = sand.u32 %s104, 1
          %s400 = smul.addr %s399, 8
          %s401 = scalar_lea.vmem [#allocation11], %s400
          %s402 = smul.u32 2, %s34
          %s404 = ssub.s32 128, 128
          %405 = vsyncadd %s398, %s404
          %s406 = smul.addr %s33, 2
          %s407 = sadd.s32 %s402, %s406
          %s408 = smul.addr %s407, 64
          %s409 = scalar_lea.hbm %s2, %s408
          %s410 = sshll.u32 %s401, 4
          %s411 = int_to_ptr.vmem [resolvable:$true] %s410
          %416 = dma.hbm_to_vmem [thread:$0]  %s409, 128, %s411, %s398, 64, 64, 4
        $region48: #{tpu_custom_call.1} parent=35 // pred_fallthru
          _
        // Predicated region
        $region49: #{tpu_custom_call.1} parent=35 // pred_check
          %p417 = pneg %p142
        $region50: #{tpu_custom_call.1} parent=35 // pred_check_branch
          %419 = sbr.rel (%p417) target = $region52
        $region51: #{tpu_custom_call.1} parent=35 // pred_region
          %p420 = scmp.lt.s32.totalorder %s33, 1
          %s421 = scalar_select %p420, %s33, 1
          %p422 = scmp.lt.s32.totalorder %s34, 0
          %s423 = scalar_select %p422, %s34, 0
          %s424 = sadd.s32 %s423, %s421
          %s425 = smul.addr %s424, 4
          %s426 = scalar_lea.vmem %s3, %s425
        $region52: #{tpu_custom_call.1} parent=35 // pred_fallthru
          _
      $region36: #{tpu_custom_call.1} parent=5 // pred_fallthru
        _
      %p427 = scmp.le.s32.totalorder 1, %s26
      %p428 = scmp.lt.s32.totalorder %s26, 3
      %p429 = pnand %p427, %p428
      %p430 = pneg %p429
      // Predicated region
      $region53: #{tpu_custom_call.1} parent=5 // pred_check
        _
      $region54: #{tpu_custom_call.1} parent=5 // pred_check_branch
        %432 = sbr.rel (%p429) target = $region56
      $region55: #{tpu_custom_call.1} parent=5 // pred_region
        %s433 = ssub.s32 %s26, 1
        %s434 = sand.u32 %s51, 1
        %s435 = scalar_lea.sflag [#allocation7], %s434
        %s436 = sand.u32 %s51, 1
        %s437 = smul.addr %s436, 4
        %s438 = scalar_lea.vmem [#allocation6], %s437
        // Predicated region
        $region57: #{tpu_custom_call.1} parent=55 // pred_check
          %p439 = pneg %p64
        $region58: #{tpu_custom_call.1} parent=55 // pred_check_branch
          %441 = sbr.rel (%p439) target = $region60
        $region59: #{tpu_custom_call.1} parent=55 // pred_region
          %442 = dma.done %s435, 64
        $region60: #{tpu_custom_call.1} parent=55 // pred_fallthru
          _
        %s443 = sand.u32 %s31, 1
        %s444 = scalar_lea.sflag [#allocation10], %s443
        %s445 = sand.u32 %s79, 1
        %s446 = smul.addr %s445, 8
        %s447 = scalar_lea.vmem [#allocation9], %s446
        // Predicated region
        $region61: #{tpu_custom_call.1} parent=55 // pred_check
          %p448 = pneg %p92
        $region62: #{tpu_custom_call.1} parent=55 // pred_check_branch
          %450 = sbr.rel (%p448) target = $region64
        $region63: #{tpu_custom_call.1} parent=55 // pred_region
          %451 = dma.done %s444, 128
        $region64: #{tpu_custom_call.1} parent=55 // pred_fallthru
          _
        %s452 = sand.u32 %s31, 1
        %s453 = scalar_lea.sflag [#allocation10], %s452
        %s454 = sand.u32 %s107, 1
        %s455 = smul.addr %s454, 8
        %s456 = scalar_lea.vmem [#allocation11], %s455
        // Predicated region
        $region65: #{tpu_custom_call.1} parent=55 // pred_check
          %p457 = pneg %p120
        $region66: #{tpu_custom_call.1} parent=55 // pred_check_branch
          %459 = sbr.rel (%p457) target = $region68
        $region67: #{tpu_custom_call.1} parent=55 // pred_region
          %460 = dma.done %s453, 128
        $region68: #{tpu_custom_call.1} parent=55 // pred_fallthru
          _
        // Predicated region
        $region69: #{tpu_custom_call.1} parent=55 // pred_check
          %p461 = pneg %p169
        $region70: #{tpu_custom_call.1} parent=55 // pred_check_branch
          %463 = sbr.rel (%p461) target = $region72
        $region71: #{tpu_custom_call.1} parent=55 // pred_region
          %464 = dma.done [#allocation13], 1024
        $region72: #{tpu_custom_call.1} parent=55 // pred_fallthru
          _
        // Predicated region
        $region73: #{tpu_custom_call.1} parent=55 // pred_check
          %p465 = pneg %p190
        $region74: #{tpu_custom_call.1} parent=55 // pred_check_branch
          %467 = sbr.rel (%p465) target = $region76
        $region75: #{tpu_custom_call.1} parent=55 // pred_region
          %468 = dma.done [#allocation13], 1024
        $region76: #{tpu_custom_call.1} parent=55 // pred_fallthru
          _
        // Predicated region
        $region77: #{tpu_custom_call.1} parent=55 // pred_check
          %p469 = pneg %p211
        $region78: #{tpu_custom_call.1} parent=55 // pred_check_branch
          %471 = sbr.rel (%p469) target = $region80
        $region79: #{tpu_custom_call.1} parent=55 // pred_region
          %472 = dma.done [#allocation16], 1024
        $region80: #{tpu_custom_call.1} parent=55 // pred_fallthru
          _
        // Predicated region
        $region81: #{tpu_custom_call.1} parent=55 // pred_check
          %p473 = pneg %p232
        $region82: #{tpu_custom_call.1} parent=55 // pred_check_branch
          %475 = sbr.rel (%p473) target = $region84
        $region83: #{tpu_custom_call.1} parent=55 // pred_region
          %476 = dma.done [#allocation16], 1024
        $region84: #{tpu_custom_call.1} parent=55 // pred_fallthru
          _
        %s477 = sand.u32 %s51, 1
        %s478 = scalar_lea.sflag [#allocation7], %s477
        %s479 = sand.u32 %s51, 1
        %s480 = smul.addr %s479, 4
        %s481 = scalar_lea.vmem [#allocation6], %s480
        %p482 = pneg %p64
        %p483 = pneg %p61
        %s484 = sand.u32 %s31, 1
        %s485 = scalar_lea.sflag [#allocation10], %s484
        %s486 = sand.u32 %s79, 1
        %s487 = smul.addr %s486, 8
        %s488 = scalar_lea.vmem [#allocation9], %s487
        %p489 = pneg %p92
        %p490 = pneg %p89
        %s491 = sand.u32 %s31, 1
        %s492 = scalar_lea.sflag [#allocation10], %s491
        %s493 = sand.u32 %s107, 1
        %s494 = smul.addr %s493, 8
        %s495 = scalar_lea.vmem [#allocation11], %s494
        %p496 = pneg %p120
        %p497 = pneg %p117
        %p498 = scmp.lt.s32.totalorder %s35, 1
        %s499 = scalar_select %p498, %s35, 1
        %p500 = scmp.lt.s32.totalorder %s36, 0
        %s501 = scalar_select %p500, %s36, 0
        %s502 = sadd.s32 %s501, %s499
        %s503 = smul.addr %s502, 4
        %s504 = scalar_lea.vmem %s3, %s503
        %p505 = pneg %p148
        %p506 = pneg %p145
        %p507 = pneg %p169
        %p508 = pneg %p166
        %p509 = pneg %p190
        %p510 = pneg %p187
        %p511 = pneg %p211
        %p512 = pneg %p208
        %p513 = pneg %p232
        %p514 = pneg %p229
        %p515 = pneg %p253
        %p516 = pneg %p250
        %p517 = pneg %p279
        %p518 = pneg %p276
        %s519 = sand.u32 %s266, 1
        %s520 = scalar_lea.sflag [#allocation8], %s519
        %s521 = sand.u32 %s266, 1
        %s522 = smul.addr %s521, 8
        %s523 = scalar_lea.vmem [#allocation18], %s522
        %s524 = smul.u32 2, %s36
        %s525 = smul.u32 2, %s36
        %p526 = scmp.lt.s32.totalorder %s35, 1
        %s527 = scalar_select %p526, %s35, 1
        %p528 = scmp.lt.s32.totalorder %s36, 0
        %s529 = scalar_select %p528, %s36, 0
        %s530 = sadd.s32 %s529, %s527
        %s531 = smul.addr %s530, 4
        %s532 = scalar_lea.vmem %s3, %s531
        %p534 = scmp.eq.s32.totalorder %s36, 0
        // Predicated region
        $region85: #{tpu_custom_call.1} parent=55 // pred_check
          %p535 = pneg %p534
        $region86: #{tpu_custom_call.1} parent=55 // pred_check_branch
          %537 = sbr.rel (%p535) target = $region88
        $region87: #{tpu_custom_call.1} parent=55 // pred_region
          %v538 = vld [vmem:[%s438] sm:$0xf]
          %v539 = vld [vmem:[#allocation12] sm:$0xf]
          %v540 = vld [vmem:[#allocation12 + $0x4] sm:$0xf]
          %v541 = vld [vmem:[#allocation12 + $0x8] sm:$0xf]
          %v542 = vld [vmem:[#allocation12 + $0xc] sm:$0xf]
          %v543 = vld [vmem:[#allocation12 + $0x10] sm:$0xf]
          %v544 = vld [vmem:[#allocation12 + $0x14] sm:$0xf]
          %v545 = vld [vmem:[#allocation12 + $0x18] sm:$0xf]
          %v546 = vld [vmem:[#allocation12 + $0x1c] sm:$0xf]
          %v547 = vld [vmem:[#allocation12 + $0x20] sm:$0xf]
          %v548 = vld [vmem:[#allocation12 + $0x24] sm:$0xf]
          %v549 = vld [vmem:[#allocation12 + $0x28] sm:$0xf]
          %v550 = vld [vmem:[#allocation12 + $0x2c] sm:$0xf]
          %v551 = vld [vmem:[#allocation12 + $0x30] sm:$0xf]
          %v552 = vld [vmem:[#allocation12 + $0x34] sm:$0xf]
          %v553 = vld [vmem:[#allocation12 + $0x38] sm:$0xf]
          %v554 = vld [vmem:[#allocation12 + $0x3c] sm:$0xf]
          %v571 = vunpack.c.l.b16 %v539
          %v572 = vunpack.c.l.b16 %v540
          %v573 = vunpack.c.l.b16 %v541
          %v574 = vunpack.c.l.b16 %v542
          %v575 = vunpack.c.l.b16 %v543
          %v576 = vunpack.c.l.b16 %v544
          %v577 = vunpack.c.l.b16 %v545
          %v578 = vunpack.c.l.b16 %v546
          %v579 = vunpack.c.l.b16 %v547
          %v580 = vunpack.c.l.b16 %v548
          %v581 = vunpack.c.l.b16 %v549
          %v582 = vunpack.c.l.b16 %v550
          %v583 = vunpack.c.l.b16 %v551
          %v584 = vunpack.c.l.b16 %v552
          %v585 = vunpack.c.l.b16 %v553
          %v586 = vunpack.c.l.b16 %v554
          %v587 = vpack.c.b16 %v572, %v571
          %v588 = vpack.c.b16 %v574, %v573
          %v589 = vpack.c.b16 %v576, %v575
          %v590 = vpack.c.b16 %v578, %v577
          %v591 = vpack.c.b16 %v580, %v579
          %v592 = vpack.c.b16 %v582, %v581
          %v593 = vpack.c.b16 %v584, %v583
          %v594 = vpack.c.b16 %v586, %v585
          %603 = vmatprep.subr.bf16.mxu0 0
          %604 = vmatpush1.bf16.xpose.msra.mxu0 %v538
          %605 = vmatprep.subr.bf16.mxu0 0
          %606 = vmatpush1.bf16.xpose.msra.mxu0 0
          %607 = vmatprep.subr.bf16.mxu0 0
          %608 = vmatpush1.bf16.xpose.msra.mxu0 0
          %609 = vmatprep.subr.bf16.mxu0 0
          %610 = vmatpush1.bf16.xpose.msra.mxu0 0
          %611 = vmatprep.subr.bf16.mxu0 0
          %612 = vmatpush1.bf16.xpose.msra.mxu0 0
          %613 = vmatprep.subr.bf16.mxu0 0
          %614 = vmatpush1.bf16.xpose.msra.mxu0 0
          %615 = vmatprep.subr.bf16.mxu0 0
          %616 = vmatpush1.bf16.xpose.msra.mxu0 0
          %617 = vmatprep.subr.bf16.mxu0 0
          %618 = vmatpush1.bf16.xpose.msra.mxu0 0
          %619 = vmatprep.subr.bf16.mxu0 0
          %620 = vmatpush1.bf16.xpose.msra.mxu0 0
          %621 = vmatprep.subr.bf16.mxu0 0
          %622 = vmatpush1.bf16.xpose.msra.mxu0 0
          %623 = vmatprep.subr.bf16.mxu0 0
          %624 = vmatpush1.bf16.xpose.msra.mxu0 0
          %625 = vmatprep.subr.bf16.mxu0 0
          %626 = vmatpush1.bf16.xpose.msra.mxu0 0
          %627 = vmatprep.subr.bf16.mxu0 0
          %628 = vmatpush1.bf16.xpose.msra.mxu0 0
          %629 = vmatprep.subr.bf16.mxu0 0
          %630 = vmatpush1.bf16.xpose.msra.mxu0 0
          %631 = vmatprep.subr.bf16.mxu0 0
          %632 = vmatpush1.bf16.xpose.msra.mxu0 0
          %633 = vmatprep.subr.bf16.mxu0 0
          %634 = vmatpush1.bf16.xpose.msra.mxu0 0
          %635 = vmatprep.mubr.bf16.mxu0 0
          %636 = vmatmul.mubr.bf16.gmra.mrb[0].mxu0 %v587
          %v637 = vpop.f32.mrb[0].mxu0
          %v638 = vadd.f32 0.0, %v637
          %v639 = vpop.f32.mrb[0].mxu0
          %v640 = vpop.f32.mrb[0].mxu0
          %v641 = vadd.f32 0.0, %v640
          %v642 = vpop.f32.mrb[0].mxu0
          %643 = vmatprep.mubr.bf16.mxu0 0
          %644 = vmatmul.mubr.bf16.gmra.mrb[0].mxu0 %v588
          %v645 = vpop.f32.mrb[0].mxu0
          %v646 = vadd.f32 0.0, %v645
          %v647 = vpop.f32.mrb[0].mxu0
          %v648 = vpop.f32.mrb[0].mxu0
          %v649 = vadd.f32 0.0, %v648
          %v650 = vpop.f32.mrb[0].mxu0
          %651 = vmatprep.mubr.bf16.mxu0 0
          %652 = vmatmul.mubr.bf16.gmra.mrb[0].mxu0 %v589
          %v653 = vpop.f32.mrb[0].mxu0
          %v654 = vadd.f32 0.0, %v653
          %v655 = vpop.f32.mrb[0].mxu0
          %v656 = vpop.f32.mrb[0].mxu0
          %v657 = vadd.f32 0.0, %v656
          %v658 = vpop.f32.mrb[0].mxu0
          %659 = vmatprep.mubr.bf16.mxu0 0
          %660 = vmatmul.mubr.bf16.gmra.mrb[0].mxu0 %v590
          %v661 = vpop.f32.mrb[0].mxu0
          %v662 = vadd.f32 0.0, %v661
          %v663 = vpop.f32.mrb[0].mxu0
          %v664 = vpop.f32.mrb[0].mxu0
          %v665 = vadd.f32 0.0, %v664
          %v666 = vpop.f32.mrb[0].mxu0
          %667 = vmatprep.mubr.bf16.mxu0 0
          %668 = vmatmul.mubr.bf16.gmra.mrb[0].mxu0 %v591
          %v669 = vpop.f32.mrb[0].mxu0
          %v670 = vadd.f32 0.0, %v669
          %v671 = vpop.f32.mrb[0].mxu0
          %v672 = vpop.f32.mrb[0].mxu0
          %v673 = vadd.f32 0.0, %v672
          %v674 = vpop.f32.mrb[0].mxu0
          %675 = vmatprep.mubr.bf16.mxu0 0
          %676 = vmatmul.mubr.bf16.gmra.mrb[0].mxu0 %v592
          %v677 = vpop.f32.mrb[0].mxu0
          %v678 = vadd.f32 0.0, %v677
          %v679 = vpop.f32.mrb[0].mxu0
          %v680 = vpop.f32.mrb[0].mxu0
          %v681 = vadd.f32 0.0, %v680
          %v682 = vpop.f32.mrb[0].mxu0
          %683 = vmatprep.mubr.bf16.mxu0 0
          %684 = vmatmul.mubr.bf16.gmra.mrb[0].mxu0 %v593
          %v685 = vpop.f32.mrb[0].mxu0
          %v686 = vadd.f32 0.0, %v685
          %v687 = vpop.f32.mrb[0].mxu0
          %v688 = vpop.f32.mrb[0].mxu0
          %v689 = vadd.f32 0.0, %v688
          %v690 = vpop.f32.mrb[0].mxu0
          %691 = vmatprep.mubr.bf16.mxu0 0
          %692 = vmatmul.mubr.bf16.gmra.mrb[0].mxu0 %v594
          %v693 = vpop.f32.mrb[0].mxu0
          %v694 = vadd.f32 0.0, %v693
          %v695 = vpop.f32.mrb[0].mxu0
          %v696 = vpop.f32.mrb[0].mxu0
          %v697 = vadd.f32 0.0, %v696
          %v698 = vpop.f32.mrb[0].mxu0
          %699 = vdwg.mxu0
          %v700 = vpack.c.bf16 %v641, %v638
          %v701 = vpack.c.bf16 %v649, %v646
          %v702 = vpack.c.bf16 %v657, %v654
          %v703 = vpack.c.bf16 %v665, %v662
          %v704 = vpack.c.bf16 %v673, %v670
          %v705 = vpack.c.bf16 %v681, %v678
          %v706 = vpack.c.bf16 %v689, %v686
          %v707 = vpack.c.bf16 %v697, %v694
          %vm708 = vcmask 64512
          %709 = vst.msk [vmem:[#allocation2] sm:$0xff] %vm708, %v700
          %710 = vst.msk [vmem:[#allocation2 + $0x8] sm:$0xff] %vm708, %v701
          %711 = vst.msk [vmem:[#allocation2 + $0x10] sm:$0xff] %vm708, %v702
          %712 = vst.msk [vmem:[#allocation2 + $0x18] sm:$0xff] %vm708, %v703
          %713 = vst.msk [vmem:[#allocation2 + $0x20] sm:$0xff] %vm708, %v704
          %714 = vst.msk [vmem:[#allocation2 + $0x28] sm:$0xff] %vm708, %v705
          %715 = vst.msk [vmem:[#allocation2 + $0x30] sm:$0xff] %vm708, %v706
          %716 = vst.msk [vmem:[#allocation2 + $0x38] sm:$0xff] %vm708, %v707
          %717 = vst.msk [vmem:[#allocation3] sm:$0xff] %vm708, -inf
          %718 = vst.msk [vmem:[#allocation4] sm:$0xff] %vm708, 0.0
          %719 = vst.msk [vmem:[#allocation5] sm:$0xff] %vm708, 0.0
          %720 = vst.msk [vmem:[#allocation5 + $0x8] sm:$0xff] %vm708, 0.0
          %721 = vst.msk [vmem:[#allocation5 + $0x10] sm:$0xff] %vm708, 0.0
          %722 = vst.msk [vmem:[#allocation5 + $0x18] sm:$0xff] %vm708, 0.0
          %723 = vst.msk [vmem:[#allocation5 + $0x20] sm:$0xff] %vm708, 0.0
          %724 = vst.msk [vmem:[#allocation5 + $0x28] sm:$0xff] %vm708, 0.0
          %725 = vst.msk [vmem:[#allocation5 + $0x30] sm:$0xff] %vm708, 0.0
          %726 = vst.msk [vmem:[#allocation5 + $0x38] sm:$0xff] %vm708, 0.0
          %727 = vst.msk [vmem:[#allocation5 + $0x40] sm:$0xff] %vm708, 0.0
          %728 = vst.msk [vmem:[#allocation5 + $0x48] sm:$0xff] %vm708, 0.0
          %729 = vst.msk [vmem:[#allocation5 + $0x50] sm:$0xff] %vm708, 0.0
          %730 = vst.msk [vmem:[#allocation5 + $0x58] sm:$0xff] %vm708, 0.0
          %731 = vst.msk [vmem:[#allocation5 + $0x60] sm:$0xff] %vm708, 0.0
          %732 = vst.msk [vmem:[#allocation5 + $0x68] sm:$0xff] %vm708, 0.0
          %733 = vst.msk [vmem:[#allocation5 + $0x70] sm:$0xff] %vm708, 0.0
          %734 = vst.msk [vmem:[#allocation5 + $0x78] sm:$0xff] %vm708, 0.0
        $region88: #{tpu_custom_call.1} parent=55 // pred_fallthru
          _
        %v735 = vld [vmem:[%s447] sm:$0xf]
        %v736 = vld [vmem:[%s447 + $0x4] sm:$0xf]
        %v737 = vld [vmem:[%s456] sm:$0xf]
        %v738 = vld [vmem:[%s456 + $0x4] sm:$0xf]
        %v739 = vld [vmem:[#allocation14] sm:$0xf]
        %v740 = vld [vmem:[#allocation14 + $0x4] sm:$0xf]
        %v741 = vld [vmem:[#allocation14 + $0x8] sm:$0xf]
        %v742 = vld [vmem:[#allocation14 + $0xc] sm:$0xf]
        %v743 = vld [vmem:[#allocation14 + $0x10] sm:$0xf]
        %v744 = vld [vmem:[#allocation14 + $0x14] sm:$0xf]
        %v745 = vld [vmem:[#allocation14 + $0x18] sm:$0xf]
        %v746 = vld [vmem:[#allocation14 + $0x1c] sm:$0xf]
        %v747 = vld [vmem:[#allocation14 + $0x20] sm:$0xf]
        %v748 = vld [vmem:[#allocation14 + $0x24] sm:$0xf]
        %v749 = vld [vmem:[#allocation14 + $0x28] sm:$0xf]
        %v750 = vld [vmem:[#allocation14 + $0x2c] sm:$0xf]
        %v751 = vld [vmem:[#allocation14 + $0x30] sm:$0xf]
        %v752 = vld [vmem:[#allocation14 + $0x34] sm:$0xf]
        %v753 = vld [vmem:[#allocation14 + $0x38] sm:$0xf]
        %v754 = vld [vmem:[#allocation14 + $0x3c] sm:$0xf]
        %v771 = vunpack.c.l.b16 %v739
        %v772 = vunpack.c.l.b16 %v740
        %v773 = vunpack.c.l.b16 %v741
        %v774 = vunpack.c.l.b16 %v742
        %v775 = vunpack.c.l.b16 %v743
        %v776 = vunpack.c.l.b16 %v744
        %v777 = vunpack.c.l.b16 %v745
        %v778 = vunpack.c.l.b16 %v746
        %v779 = vunpack.c.l.b16 %v747
        %v780 = vunpack.c.l.b16 %v748
        %v781 = vunpack.c.l.b16 %v749
        %v782 = vunpack.c.l.b16 %v750
        %v783 = vunpack.c.l.b16 %v751
        %v784 = vunpack.c.l.b16 %v752
        %v785 = vunpack.c.l.b16 %v753
        %v786 = vunpack.c.l.b16 %v754
        %v787 = vpack.c.b16 %v772, %v771
        %v788 = vpack.c.b16 %v774, %v773
        %v789 = vpack.c.b16 %v776, %v775
        %v790 = vpack.c.b16 %v778, %v777
        %v791 = vpack.c.b16 %v780, %v779
        %v792 = vpack.c.b16 %v782, %v781
        %v793 = vpack.c.b16 %v784, %v783
        %v794 = vpack.c.b16 %v786, %v785
        %v805 = vunpack.c.l.b16 %v735
        %v806 = vunpack.c.l.b16 %v736
        %v807 = vpack.c.b16 %v806, %v805
        %809 = vmatprep.subr.bf16.mxu0 0
        %810 = vmatpush1.bf16.xpose.msra.mxu0 %v807
        %811 = vmatprep.subr.bf16.mxu0 0
        %812 = vmatpush1.bf16.xpose.msra.mxu0 0
        %813 = vmatprep.subr.bf16.mxu0 0
        %814 = vmatpush1.bf16.xpose.msra.mxu0 0
        %815 = vmatprep.subr.bf16.mxu0 0
        %816 = vmatpush1.bf16.xpose.msra.mxu0 0
        %817 = vmatprep.subr.bf16.mxu0 0
        %818 = vmatpush1.bf16.xpose.msra.mxu0 0
        %819 = vmatprep.subr.bf16.mxu0 0
        %820 = vmatpush1.bf16.xpose.msra.mxu0 0
        %821 = vmatprep.subr.bf16.mxu0 0
        %822 = vmatpush1.bf16.xpose.msra.mxu0 0
        %823 = vmatprep.subr.bf16.mxu0 0
        %824 = vmatpush1.bf16.xpose.msra.mxu0 0
        %825 = vmatprep.subr.bf16.mxu0 0
        %826 = vmatpush1.bf16.xpose.msra.mxu0 0
        %827 = vmatprep.subr.bf16.mxu0 0
        %828 = vmatpush1.bf16.xpose.msra.mxu0 0
        %829 = vmatprep.subr.bf16.mxu0 0
        %830 = vmatpush1.bf16.xpose.msra.mxu0 0
        %831 = vmatprep.subr.bf16.mxu0 0
        %832 = vmatpush1.bf16.xpose.msra.mxu0 0
        %833 = vmatprep.subr.bf16.mxu0 0
        %834 = vmatpush1.bf16.xpose.msra.mxu0 0
        %835 = vmatprep.subr.bf16.mxu0 0
        %836 = vmatpush1.bf16.xpose.msra.mxu0 0
        %837 = vmatprep.subr.bf16.mxu0 0
        %838 = vmatpush1.bf16.xpose.msra.mxu0 0
        %839 = vmatprep.subr.bf16.mxu0 0
        %840 = vmatpush1.bf16.xpose.msra.mxu0 0
        %841 = vmatprep.mubr.bf16.mxu0 0
        %842 = vmatmul.mubr.bf16.gmra.mrb[0].mxu0 %v787
        %v843 = vpop.f32.mrb[0].mxu0
        %v844 = vadd.f32 0.0, %v843
        %v845 = vpop.f32.mrb[0].mxu0
        %v846 = vpop.f32.mrb[0].mxu0
        %v847 = vadd.f32 0.0, %v846
        %v848 = vpop.f32.mrb[0].mxu0
        %849 = vmatprep.mubr.bf16.mxu0 0
        %850 = vmatmul.mubr.bf16.gmra.mrb[0].mxu0 %v788
        %v851 = vpop.f32.mrb[0].mxu0
        %v852 = vadd.f32 0.0, %v851
        %v853 = vpop.f32.mrb[0].mxu0
        %v854 = vpop.f32.mrb[0].mxu0
        %v855 = vadd.f32 0.0, %v854
        %v856 = vpop.f32.mrb[0].mxu0
        %857 = vmatprep.mubr.bf16.mxu0 0
        %858 = vmatmul.mubr.bf16.gmra.mrb[0].mxu0 %v789
        %v859 = vpop.f32.mrb[0].mxu0
        %v860 = vadd.f32 0.0, %v859
        %v861 = vpop.f32.mrb[0].mxu0
        %v862 = vpop.f32.mrb[0].mxu0
        %v863 = vadd.f32 0.0, %v862
        %v864 = vpop.f32.mrb[0].mxu0
        %865 = vmatprep.mubr.bf16.mxu0 0
        %866 = vmatmul.mubr.bf16.gmra.mrb[0].mxu0 %v790
        %v867 = vpop.f32.mrb[0].mxu0
        %v868 = vadd.f32 0.0, %v867
        %v869 = vpop.f32.mrb[0].mxu0
        %v870 = vpop.f32.mrb[0].mxu0
        %v871 = vadd.f32 0.0, %v870
        %v872 = vpop.f32.mrb[0].mxu0
        %873 = vmatprep.mubr.bf16.mxu0 0
        %874 = vmatmul.mubr.bf16.gmra.mrb[0].mxu0 %v791
        %v875 = vpop.f32.mrb[0].mxu0
        %v876 = vadd.f32 0.0, %v875
        %v877 = vpop.f32.mrb[0].mxu0
        %v878 = vpop.f32.mrb[0].mxu0
        %v879 = vadd.f32 0.0, %v878
        %v880 = vpop.f32.mrb[0].mxu0
        %881 = vmatprep.mubr.bf16.mxu0 0
        %882 = vmatmul.mubr.bf16.gmra.mrb[0].mxu0 %v792
        %v883 = vpop.f32.mrb[0].mxu0
        %v884 = vadd.f32 0.0, %v883
        %v885 = vpop.f32.mrb[0].mxu0
        %v886 = vpop.f32.mrb[0].mxu0
        %v887 = vadd.f32 0.0, %v886
        %v888 = vpop.f32.mrb[0].mxu0
        %889 = vmatprep.mubr.bf16.mxu0 0
        %890 = vmatmul.mubr.bf16.gmra.mrb[0].mxu0 %v793
        %v891 = vpop.f32.mrb[0].mxu0
        %v892 = vadd.f32 0.0, %v891
        %v893 = vpop.f32.mrb[0].mxu0
        %v894 = vpop.f32.mrb[0].mxu0
        %v895 = vadd.f32 0.0, %v894
        %v896 = vpop.f32.mrb[0].mxu0
        %897 = vmatprep.mubr.bf16.mxu0 0
        %898 = vmatmul.mubr.bf16.gmra.mrb[0].mxu0 %v794
        %v899 = vpop.f32.mrb[0].mxu0
        %v900 = vadd.f32 0.0, %v899
        %v901 = vpop.f32.mrb[0].mxu0
        %v902 = vpop.f32.mrb[0].mxu0
        %v903 = vadd.f32 0.0, %v902
        %v904 = vpop.f32.mrb[0].mxu0
        %905 = vdwg.mxu0
        %v906 = vld [vmem:[#allocation15] sm:$0xf]
        %v907 = vld [vmem:[#allocation15 + $0x4] sm:$0xf]
        %v908 = vld [vmem:[#allocation15 + $0x8] sm:$0xf]
        %v909 = vld [vmem:[#allocation15 + $0xc] sm:$0xf]
        %v910 = vld [vmem:[#allocation15 + $0x10] sm:$0xf]
        %v911 = vld [vmem:[#allocation15 + $0x14] sm:$0xf]
        %v912 = vld [vmem:[#allocation15 + $0x18] sm:$0xf]
        %v913 = vld [vmem:[#allocation15 + $0x1c] sm:$0xf]
        %v914 = vld [vmem:[#allocation15 + $0x20] sm:$0xf]
        %v915 = vld [vmem:[#allocation15 + $0x24] sm:$0xf]
        %v916 = vld [vmem:[#allocation15 + $0x28] sm:$0xf]
        %v917 = vld [vmem:[#allocation15 + $0x2c] sm:$0xf]
        %v918 = vld [vmem:[#allocation15 + $0x30] sm:$0xf]
        %v919 = vld [vmem:[#allocation15 + $0x34] sm:$0xf]
        %v920 = vld [vmem:[#allocation15 + $0x38] sm:$0xf]
        %v921 = vld [vmem:[#allocation15 + $0x3c] sm:$0xf]
        %v938 = vunpack.c.l.b16 %v906
        %v939 = vunpack.c.l.b16 %v907
        %v940 = vunpack.c.l.b16 %v908
        %v941 = vunpack.c.l.b16 %v909
        %v942 = vunpack.c.l.b16 %v910
        %v943 = vunpack.c.l.b16 %v911
        %v944 = vunpack.c.l.b16 %v912
        %v945 = vunpack.c.l.b16 %v913
        %v946 = vunpack.c.l.b16 %v914
        %v947 = vunpack.c.l.b16 %v915
        %v948 = vunpack.c.l.b16 %v916
        %v949 = vunpack.c.l.b16 %v917
        %v950 = vunpack.c.l.b16 %v918
        %v951 = vunpack.c.l.b16 %v919
        %v952 = vunpack.c.l.b16 %v920
        %v953 = vunpack.c.l.b16 %v921
        %v954 = vpack.c.b16 %v939, %v938
        %v955 = vpack.c.b16 %v941, %v940
        %v956 = vpack.c.b16 %v943, %v942
        %v957 = vpack.c.b16 %v945, %v944
        %v958 = vpack.c.b16 %v947, %v946
        %v959 = vpack.c.b16 %v949, %v948
        %v960 = vpack.c.b16 %v951, %v950
        %v961 = vpack.c.b16 %v953, %v952
        %v972 = vunpack.c.l.b16 %v737
        %v973 = vunpack.c.l.b16 %v738
        %v974 = vpack.c.b16 %v973, %v972
        %976 = vmatprep.subr.bf16.mxu0 0
        %977 = vmatpush1.bf16.xpose.msra.mxu0 %v974
        %978 = vmatprep.subr.bf16.mxu0 0
        %979 = vmatpush1.bf16.xpose.msra.mxu0 0
        %980 = vmatprep.subr.bf16.mxu0 0
        %981 = vmatpush1.bf16.xpose.msra.mxu0 0
        %982 = vmatprep.subr.bf16.mxu0 0
        %983 = vmatpush1.bf16.xpose.msra.mxu0 0
        %984 = vmatprep.subr.bf16.mxu0 0
        %985 = vmatpush1.bf16.xpose.msra.mxu0 0
        %986 = vmatprep.subr.bf16.mxu0 0
        %987 = vmatpush1.bf16.xpose.msra.mxu0 0
        %988 = vmatprep.subr.bf16.mxu0 0
        %989 = vmatpush1.bf16.xpose.msra.mxu0 0
        %990 = vmatprep.subr.bf16.mxu0 0
        %991 = vmatpush1.bf16.xpose.msra.mxu0 0
        %992 = vmatprep.subr.bf16.mxu0 0
        %993 = vmatpush1.bf16.xpose.msra.mxu0 0
        %994 = vmatprep.subr.bf16.mxu0 0
        %995 = vmatpush1.bf16.xpose.msra.mxu0 0
        %996 = vmatprep.subr.bf16.mxu0 0
        %997 = vmatpush1.bf16.xpose.msra.mxu0 0
        %998 = vmatprep.subr.bf16.mxu0 0
        %999 = vmatpush1.bf16.xpose.msra.mxu0 0
        %1000 = vmatprep.subr.bf16.mxu0 0
        %1001 = vmatpush1.bf16.xpose.msra.mxu0 0
        %1002 = vmatprep.subr.bf16.mxu0 0
        %1003 = vmatpush1.bf16.xpose.msra.mxu0 0
        %1004 = vmatprep.subr.bf16.mxu0 0
        %1005 = vmatpush1.bf16.xpose.msra.mxu0 0
        %1006 = vmatprep.subr.bf16.mxu0 0
        %1007 = vmatpush1.bf16.xpose.msra.mxu0 0
        %1008 = vmatprep.mubr.bf16.mxu0 0
        %1009 = vmatmul.mubr.bf16.gmra.mrb[0].mxu0 %v954
        %v1010 = vpop.f32.mrb[0].mxu0
        %v1011 = vadd.f32 0.0, %v1010
        %v1012 = vpop.f32.mrb[0].mxu0
        %v1013 = vpop.f32.mrb[0].mxu0
        %v1014 = vadd.f32 0.0, %v1013
        %v1015 = vpop.f32.mrb[0].mxu0
        %1016 = vmatprep.mubr.bf16.mxu0 0
        %1017 = vmatmul.mubr.bf16.gmra.mrb[0].mxu0 %v955
        %v1018 = vpop.f32.mrb[0].mxu0
        %v1019 = vadd.f32 0.0, %v1018
        %v1020 = vpop.f32.mrb[0].mxu0
        %v1021 = vpop.f32.mrb[0].mxu0
        %v1022 = vadd.f32 0.0, %v1021
        %v1023 = vpop.f32.mrb[0].mxu0
        %1024 = vmatprep.mubr.bf16.mxu0 0
        %1025 = vmatmul.mubr.bf16.gmra.mrb[0].mxu0 %v956
        %v1026 = vpop.f32.mrb[0].mxu0
        %v1027 = vadd.f32 0.0, %v1026
        %v1028 = vpop.f32.mrb[0].mxu0
        %v1029 = vpop.f32.mrb[0].mxu0
        %v1030 = vadd.f32 0.0, %v1029
        %v1031 = vpop.f32.mrb[0].mxu0
        %1032 = vmatprep.mubr.bf16.mxu0 0
        %1033 = vmatmul.mubr.bf16.gmra.mrb[0].mxu0 %v957
        %v1034 = vpop.f32.mrb[0].mxu0
        %v1035 = vadd.f32 0.0, %v1034
        %v1036 = vpop.f32.mrb[0].mxu0
        %v1037 = vpop.f32.mrb[0].mxu0
        %v1038 = vadd.f32 0.0, %v1037
        %v1039 = vpop.f32.mrb[0].mxu0
        %1040 = vmatprep.mubr.bf16.mxu0 0
        %1041 = vmatmul.mubr.bf16.gmra.mrb[0].mxu0 %v958
        %v1042 = vpop.f32.mrb[0].mxu0
        %v1043 = vadd.f32 0.0, %v1042
        %v1044 = vpop.f32.mrb[0].mxu0
        %v1045 = vpop.f32.mrb[0].mxu0
        %v1046 = vadd.f32 0.0, %v1045
        %v1047 = vpop.f32.mrb[0].mxu0
        %1048 = vmatprep.mubr.bf16.mxu0 0
        %1049 = vmatmul.mubr.bf16.gmra.mrb[0].mxu0 %v959
        %v1050 = vpop.f32.mrb[0].mxu0
        %v1051 = vadd.f32 0.0, %v1050
        %v1052 = vpop.f32.mrb[0].mxu0
        %v1053 = vpop.f32.mrb[0].mxu0
        %v1054 = vadd.f32 0.0, %v1053
        %v1055 = vpop.f32.mrb[0].mxu0
        %1056 = vmatprep.mubr.bf16.mxu0 0
        %1057 = vmatmul.mubr.bf16.gmra.mrb[0].mxu0 %v960
        %v1058 = vpop.f32.mrb[0].mxu0
        %v1059 = vadd.f32 0.0, %v1058
        %v1060 = vpop.f32.mrb[0].mxu0
        %v1061 = vpop.f32.mrb[0].mxu0
        %v1062 = vadd.f32 0.0, %v1061
        %v1063 = vpop.f32.mrb[0].mxu0
        %1064 = vmatprep.mubr.bf16.mxu0 0
        %1065 = vmatmul.mubr.bf16.gmra.mrb[0].mxu0 %v961
        %v1066 = vpop.f32.mrb[0].mxu0
        %v1067 = vadd.f32 0.0, %v1066
        %v1068 = vpop.f32.mrb[0].mxu0
        %v1069 = vpop.f32.mrb[0].mxu0
        %v1070 = vadd.f32 0.0, %v1069
        %v1071 = vpop.f32.mrb[0].mxu0
        %1072 = vdwg.mxu0
        %v1073 = vpack.c.bf16 %v847, %v844
        %v1074 = vpack.c.bf16 %v855, %v852
        %v1075 = vpack.c.bf16 %v863, %v860
        %v1076 = vpack.c.bf16 %v871, %v868
        %v1077 = vpack.c.bf16 %v879, %v876
        %v1078 = vpack.c.bf16 %v887, %v884
        %v1079 = vpack.c.bf16 %v895, %v892
        %v1080 = vpack.c.bf16 %v903, %v900
        %v1081 = vpack.c.bf16 %v1014, %v1011
        %v1082 = vpack.c.bf16 %v1022, %v1019
        %v1083 = vpack.c.bf16 %v1030, %v1027
        %v1084 = vpack.c.bf16 %v1038, %v1035
        %v1085 = vpack.c.bf16 %v1046, %v1043
        %v1086 = vpack.c.bf16 %v1054, %v1051
        %v1087 = vpack.c.bf16 %v1062, %v1059
        %v1088 = vpack.c.bf16 %v1070, %v1067
        %v1089 = vld [vmem:[#allocation2] sm:$0xff]
        %v1090 = vld [vmem:[#allocation2 + $0x8] sm:$0xff]
        %v1091 = vld [vmem:[#allocation2 + $0x10] sm:$0xff]
        %v1092 = vld [vmem:[#allocation2 + $0x18] sm:$0xff]
        %v1093 = vld [vmem:[#allocation2 + $0x20] sm:$0xff]
        %v1094 = vld [vmem:[#allocation2 + $0x28] sm:$0xff]
        %v1095 = vld [vmem:[#allocation2 + $0x30] sm:$0xff]
        %v1096 = vld [vmem:[#allocation2 + $0x38] sm:$0xff]
        %v1097 = vld [vmem:[%s532] sm:$0xf]
        %v1098 = vunpack.c.l.bf16 %v1097
        %1099 = vxpose.xlu0.c.b16.start [1/8] %v1089, 128
        %1100 = vxpose.xlu0.c.b16.cont [2/8] 0, 128
        %1101 = vxpose.xlu0.c.b16.cont [3/8] 0, 128
        %1102 = vxpose.xlu0.c.b16.cont [4/8] 0, 128
        %1103 = vxpose.xlu0.c.b16.cont [5/8] 0, 128
        %1104 = vxpose.xlu0.c.b16.cont [6/8] 0, 128
        %1105 = vxpose.xlu0.c.b16.cont [7/8] 0, 128
        %1106 = vxpose.xlu0.c.b16.end [8/8] 0, 128
        %v1107 = vpop.trf.xlu0
        %v1108 = vpop.trf.xlu0
        %v1109 = vpop.trf.xlu0
        %v1110 = vpop.trf.xlu0
        %v1111 = vpop.trf.xlu0
        %v1112 = vpop.trf.xlu0
        %v1113 = vpop.trf.xlu0
        %v1114 = vpop.trf.xlu0
        %vm1115 = vcmask 130048
        %v1117 = vsel %vm1115, %v1107, 0
        %1119 = vmatprep.subr.bf16.mxu0 0
        %1120 = vmatpush1.bf16.msra.mxu0 %v1073
        %1121 = vmatprep.subr.bf16.mxu0 0
        %1122 = vmatpush1.bf16.msra.mxu0 0
        %1123 = vmatprep.subr.bf16.mxu0 0
        %1124 = vmatpush1.bf16.msra.mxu0 0
        %1125 = vmatprep.subr.bf16.mxu0 0
        %1126 = vmatpush1.bf16.msra.mxu0 0
        %1127 = vmatprep.subr.bf16.mxu0 0
        %1128 = vmatpush1.bf16.msra.mxu0 0
        %1129 = vmatprep.subr.bf16.mxu0 0
        %1130 = vmatpush1.bf16.msra.mxu0 0
        %1131 = vmatprep.subr.bf16.mxu0 0
        %1132 = vmatpush1.bf16.msra.mxu0 0
        %1133 = vmatprep.subr.bf16.mxu0 0
        %1134 = vmatpush1.bf16.msra.mxu0 0
        %1135 = vmatprep.subr.bf16.mxu0 0
        %1136 = vmatpush1.bf16.msra.mxu0 0
        %1137 = vmatprep.subr.bf16.mxu0 0
        %1138 = vmatpush1.bf16.msra.mxu0 0
        %1139 = vmatprep.subr.bf16.mxu0 0
        %1140 = vmatpush1.bf16.msra.mxu0 0
        %1141 = vmatprep.subr.bf16.mxu0 0
        %1142 = vmatpush1.bf16.msra.mxu0 0
        %1143 = vmatprep.subr.bf16.mxu0 0
        %1144 = vmatpush1.bf16.msra.mxu0 0
        %1145 = vmatprep.subr.bf16.mxu0 0
        %1146 = vmatpush1.bf16.msra.mxu0 0
        %1147 = vmatprep.subr.bf16.mxu0 0
        %1148 = vmatpush1.bf16.msra.mxu0 0
        %1149 = vmatprep.subr.bf16.mxu0 0
        %1150 = vmatpush1.bf16.msra.mxu0 0
        %1151 = vmatprep.mubr.bf16.mxu0 0
        %1152 = vmatmul.mubr.bf16.gmra.mrb[0].mxu0 %v1117
        %v1153 = vpop.f32.mrb[0].mxu0
        %v1154 = vadd.f32 %v1098, %v1153
        %v1155 = vpop.f32.mrb[0].mxu0
        %v1156 = vpop.f32.mrb[0].mxu0
        %v1157 = vpop.f32.mrb[0].mxu0
        %1158 = vdwg.mxu0
        %1159 = vxpose.xlu0.c.b16.start [1/8] %v1090, 128
        %1160 = vxpose.xlu0.c.b16.cont [2/8] 0, 128
        %1161 = vxpose.xlu0.c.b16.cont [3/8] 0, 128
        %1162 = vxpose.xlu0.c.b16.cont [4/8] 0, 128
        %1163 = vxpose.xlu0.c.b16.cont [5/8] 0, 128
        %1164 = vxpose.xlu0.c.b16.cont [6/8] 0, 128
        %1165 = vxpose.xlu0.c.b16.cont [7/8] 0, 128
        %1166 = vxpose.xlu0.c.b16.end [8/8] 0, 128
        %v1167 = vpop.trf.xlu0
        %v1168 = vpop.trf.xlu0
        %v1169 = vpop.trf.xlu0
        %v1170 = vpop.trf.xlu0
        %v1171 = vpop.trf.xlu0
        %v1172 = vpop.trf.xlu0
        %v1173 = vpop.trf.xlu0
        %v1174 = vpop.trf.xlu0
        %v1176 = vsel %vm1115, %v1167, 0
        %1178 = vmatprep.subr.bf16.mxu0 0
        %1179 = vmatpush1.bf16.msra.mxu0 %v1074
        %1180 = vmatprep.subr.bf16.mxu0 0
        %1181 = vmatpush1.bf16.msra.mxu0 0
        %1182 = vmatprep.subr.bf16.mxu0 0
        %1183 = vmatpush1.bf16.msra.mxu0 0
        %1184 = vmatprep.subr.bf16.mxu0 0
        %1185 = vmatpush1.bf16.msra.mxu0 0
        %1186 = vmatprep.subr.bf16.mxu0 0
        %1187 = vmatpush1.bf16.msra.mxu0 0
        %1188 = vmatprep.subr.bf16.mxu0 0
        %1189 = vmatpush1.bf16.msra.mxu0 0
        %1190 = vmatprep.subr.bf16.mxu0 0
        %1191 = vmatpush1.bf16.msra.mxu0 0
        %1192 = vmatprep.subr.bf16.mxu0 0
        %1193 = vmatpush1.bf16.msra.mxu0 0
        %1194 = vmatprep.subr.bf16.mxu0 0
        %1195 = vmatpush1.bf16.msra.mxu0 0
        %1196 = vmatprep.subr.bf16.mxu0 0
        %1197 = vmatpush1.bf16.msra.mxu0 0
        %1198 = vmatprep.subr.bf16.mxu0 0
        %1199 = vmatpush1.bf16.msra.mxu0 0
        %1200 = vmatprep.subr.bf16.mxu0 0
        %1201 = vmatpush1.bf16.msra.mxu0 0
        %1202 = vmatprep.subr.bf16.mxu0 0
        %1203 = vmatpush1.bf16.msra.mxu0 0
        %1204 = vmatprep.subr.bf16.mxu0 0
        %1205 = vmatpush1.bf16.msra.mxu0 0
        %1206 = vmatprep.subr.bf16.mxu0 0
        %1207 = vmatpush1.bf16.msra.mxu0 0
        %1208 = vmatprep.subr.bf16.mxu0 0
        %1209 = vmatpush1.bf16.msra.mxu0 0
        %1210 = vmatprep.mubr.bf16.mxu0 0
        %1211 = vmatmul.mubr.bf16.gmra.mrb[0].mxu0 %v1176
        %v1212 = vpop.f32.mrb[0].mxu0
        %v1213 = vadd.f32 %v1098, %v1212
        %v1214 = vpop.f32.mrb[0].mxu0
        %v1215 = vpop.f32.mrb[0].mxu0
        %v1216 = vpop.f32.mrb[0].mxu0
        %1217 = vdwg.mxu0
        %1218 = vxpose.xlu0.c.b16.start [1/8] %v1091, 128
        %1219 = vxpose.xlu0.c.b16.cont [2/8] 0, 128
        %1220 = vxpose.xlu0.c.b16.cont [3/8] 0, 128
        %1221 = vxpose.xlu0.c.b16.cont [4/8] 0, 128
        %1222 = vxpose.xlu0.c.b16.cont [5/8] 0, 128
        %1223 = vxpose.xlu0.c.b16.cont [6/8] 0, 128
        %1224 = vxpose.xlu0.c.b16.cont [7/8] 0, 128
        %1225 = vxpose.xlu0.c.b16.end [8/8] 0, 128
        %v1226 = vpop.trf.xlu0
        %v1227 = vpop.trf.xlu0
        %v1228 = vpop.trf.xlu0
        %v1229 = vpop.trf.xlu0
        %v1230 = vpop.trf.xlu0
        %v1231 = vpop.trf.xlu0
        %v1232 = vpop.trf.xlu0
        %v1233 = vpop.trf.xlu0
        %v1235 = vsel %vm1115, %v1226, 0
        %1237 = vmatprep.subr.bf16.mxu0 0
        %1238 = vmatpush1.bf16.msra.mxu0 %v1075
        %1239 = vmatprep.subr.bf16.mxu0 0
        %1240 = vmatpush1.bf16.msra.mxu0 0
        %1241 = vmatprep.subr.bf16.mxu0 0
        %1242 = vmatpush1.bf16.msra.mxu0 0
        %1243 = vmatprep.subr.bf16.mxu0 0
        %1244 = vmatpush1.bf16.msra.mxu0 0
        %1245 = vmatprep.subr.bf16.mxu0 0
        %1246 = vmatpush1.bf16.msra.mxu0 0
        %1247 = vmatprep.subr.bf16.mxu0 0
        %1248 = vmatpush1.bf16.msra.mxu0 0
        %1249 = vmatprep.subr.bf16.mxu0 0
        %1250 = vmatpush1.bf16.msra.mxu0 0
        %1251 = vmatprep.subr.bf16.mxu0 0
        %1252 = vmatpush1.bf16.msra.mxu0 0
        %1253 = vmatprep.subr.bf16.mxu0 0
        %1254 = vmatpush1.bf16.msra.mxu0 0
        %1255 = vmatprep.subr.bf16.mxu0 0
        %1256 = vmatpush1.bf16.msra.mxu0 0
        %1257 = vmatprep.subr.bf16.mxu0 0
        %1258 = vmatpush1.bf16.msra.mxu0 0
        %1259 = vmatprep.subr.bf16.mxu0 0
        %1260 = vmatpush1.bf16.msra.mxu0 0
        %1261 = vmatprep.subr.bf16.mxu0 0
        %1262 = vmatpush1.bf16.msra.mxu0 0
        %1263 = vmatprep.subr.bf16.mxu0 0
        %1264 = vmatpush1.bf16.msra.mxu0 0
        %1265 = vmatprep.subr.bf16.mxu0 0
        %1266 = vmatpush1.bf16.msra.mxu0 0
        %1267 = vmatprep.subr.bf16.mxu0 0
        %1268 = vmatpush1.bf16.msra.mxu0 0
        %1269 = vmatprep.mubr.bf16.mxu0 0
        %1270 = vmatmul.mubr.bf16.gmra.mrb[0].mxu0 %v1235
        %v1271 = vpop.f32.mrb[0].mxu0
        %v1272 = vadd.f32 %v1098, %v1271
        %v1273 = vpop.f32.mrb[0].mxu0
        %v1274 = vpop.f32.mrb[0].mxu0
        %v1275 = vpop.f32.mrb[0].mxu0
        %1276 = vdwg.mxu0
        %1277 = vxpose.xlu0.c.b16.start [1/8] %v1092, 128
        %1278 = vxpose.xlu0.c.b16.cont [2/8] 0, 128
        %1279 = vxpose.xlu0.c.b16.cont [3/8] 0, 128
        %1280 = vxpose.xlu0.c.b16.cont [4/8] 0, 128
        %1281 = vxpose.xlu0.c.b16.cont [5/8] 0, 128
        %1282 = vxpose.xlu0.c.b16.cont [6/8] 0, 128
        %1283 = vxpose.xlu0.c.b16.cont [7/8] 0, 128
        %1284 = vxpose.xlu0.c.b16.end [8/8] 0, 128
        %v1285 = vpop.trf.xlu0
        %v1286 = vpop.trf.xlu0
        %v1287 = vpop.trf.xlu0
        %v1288 = vpop.trf.xlu0
        %v1289 = vpop.trf.xlu0
        %v1290 = vpop.trf.xlu0
        %v1291 = vpop.trf.xlu0
        %v1292 = vpop.trf.xlu0
        %v1294 = vsel %vm1115, %v1285, 0
        %1296 = vmatprep.subr.bf16.mxu0 0
        %1297 = vmatpush1.bf16.msra.mxu0 %v1076
        %1298 = vmatprep.subr.bf16.mxu0 0
        %1299 = vmatpush1.bf16.msra.mxu0 0
        %1300 = vmatprep.subr.bf16.mxu0 0
        %1301 = vmatpush1.bf16.msra.mxu0 0
        %1302 = vmatprep.subr.bf16.mxu0 0
        %1303 = vmatpush1.bf16.msra.mxu0 0
        %1304 = vmatprep.subr.bf16.mxu0 0
        %1305 = vmatpush1.bf16.msra.mxu0 0
        %1306 = vmatprep.subr.bf16.mxu0 0
        %1307 = vmatpush1.bf16.msra.mxu0 0
        %1308 = vmatprep.subr.bf16.mxu0 0
        %1309 = vmatpush1.bf16.msra.mxu0 0
        %1310 = vmatprep.subr.bf16.mxu0 0
        %1311 = vmatpush1.bf16.msra.mxu0 0
        %1312 = vmatprep.subr.bf16.mxu0 0
        %1313 = vmatpush1.bf16.msra.mxu0 0
        %1314 = vmatprep.subr.bf16.mxu0 0
        %1315 = vmatpush1.bf16.msra.mxu0 0
        %1316 = vmatprep.subr.bf16.mxu0 0
        %1317 = vmatpush1.bf16.msra.mxu0 0
        %1318 = vmatprep.subr.bf16.mxu0 0
        %1319 = vmatpush1.bf16.msra.mxu0 0
        %1320 = vmatprep.subr.bf16.mxu0 0
        %1321 = vmatpush1.bf16.msra.mxu0 0
        %1322 = vmatprep.subr.bf16.mxu0 0
        %1323 = vmatpush1.bf16.msra.mxu0 0
        %1324 = vmatprep.subr.bf16.mxu0 0
        %1325 = vmatpush1.bf16.msra.mxu0 0
        %1326 = vmatprep.subr.bf16.mxu0 0
        %1327 = vmatpush1.bf16.msra.mxu0 0
        %1328 = vmatprep.mubr.bf16.mxu0 0
        %1329 = vmatmul.mubr.bf16.gmra.mrb[0].mxu0 %v1294
        %v1330 = vpop.f32.mrb[0].mxu0
        %v1331 = vadd.f32 %v1098, %v1330
        %v1332 = vpop.f32.mrb[0].mxu0
        %v1333 = vpop.f32.mrb[0].mxu0
        %v1334 = vpop.f32.mrb[0].mxu0
        %1335 = vdwg.mxu0
        %1336 = vxpose.xlu0.c.b16.start [1/8] %v1093, 128
        %1337 = vxpose.xlu0.c.b16.cont [2/8] 0, 128
        %1338 = vxpose.xlu0.c.b16.cont [3/8] 0, 128
        %1339 = vxpose.xlu0.c.b16.cont [4/8] 0, 128
        %1340 = vxpose.xlu0.c.b16.cont [5/8] 0, 128
        %1341 = vxpose.xlu0.c.b16.cont [6/8] 0, 128
        %1342 = vxpose.xlu0.c.b16.cont [7/8] 0, 128
        %1343 = vxpose.xlu0.c.b16.end [8/8] 0, 128
        %v1344 = vpop.trf.xlu0
        %v1345 = vpop.trf.xlu0
        %v1346 = vpop.trf.xlu0
        %v1347 = vpop.trf.xlu0
        %v1348 = vpop.trf.xlu0
        %v1349 = vpop.trf.xlu0
        %v1350 = vpop.trf.xlu0
        %v1351 = vpop.trf.xlu0
        %v1353 = vsel %vm1115, %v1344, 0
        %1355 = vmatprep.subr.bf16.mxu0 0
        %1356 = vmatpush1.bf16.msra.mxu0 %v1077
        %1357 = vmatprep.subr.bf16.mxu0 0
        %1358 = vmatpush1.bf16.msra.mxu0 0
        %1359 = vmatprep.subr.bf16.mxu0 0
        %1360 = vmatpush1.bf16.msra.mxu0 0
        %1361 = vmatprep.subr.bf16.mxu0 0
        %1362 = vmatpush1.bf16.msra.mxu0 0
        %1363 = vmatprep.subr.bf16.mxu0 0
        %1364 = vmatpush1.bf16.msra.mxu0 0
        %1365 = vmatprep.subr.bf16.mxu0 0
        %1366 = vmatpush1.bf16.msra.mxu0 0
        %1367 = vmatprep.subr.bf16.mxu0 0
        %1368 = vmatpush1.bf16.msra.mxu0 0
        %1369 = vmatprep.subr.bf16.mxu0 0
        %1370 = vmatpush1.bf16.msra.mxu0 0
        %1371 = vmatprep.subr.bf16.mxu0 0
        %1372 = vmatpush1.bf16.msra.mxu0 0
        %1373 = vmatprep.subr.bf16.mxu0 0
        %1374 = vmatpush1.bf16.msra.mxu0 0
        %1375 = vmatprep.subr.bf16.mxu0 0
        %1376 = vmatpush1.bf16.msra.mxu0 0
        %1377 = vmatprep.subr.bf16.mxu0 0
        %1378 = vmatpush1.bf16.msra.mxu0 0
        %1379 = vmatprep.subr.bf16.mxu0 0
        %1380 = vmatpush1.bf16.msra.mxu0 0
        %1381 = vmatprep.subr.bf16.mxu0 0
        %1382 = vmatpush1.bf16.msra.mxu0 0
        %1383 = vmatprep.subr.bf16.mxu0 0
        %1384 = vmatpush1.bf16.msra.mxu0 0
        %1385 = vmatprep.subr.bf16.mxu0 0
        %1386 = vmatpush1.bf16.msra.mxu0 0
        %1387 = vmatprep.mubr.bf16.mxu0 0
        %1388 = vmatmul.mubr.bf16.gmra.mrb[0].mxu0 %v1353
        %v1389 = vpop.f32.mrb[0].mxu0
        %v1390 = vadd.f32 %v1098, %v1389
        %v1391 = vpop.f32.mrb[0].mxu0
        %v1392 = vpop.f32.mrb[0].mxu0
        %v1393 = vpop.f32.mrb[0].mxu0
        %1394 = vdwg.mxu0
        %1395 = vxpose.xlu0.c.b16.start [1/8] %v1094, 128
        %1396 = vxpose.xlu0.c.b16.cont [2/8] 0, 128
        %1397 = vxpose.xlu0.c.b16.cont [3/8] 0, 128
        %1398 = vxpose.xlu0.c.b16.cont [4/8] 0, 128
        %1399 = vxpose.xlu0.c.b16.cont [5/8] 0, 128
        %1400 = vxpose.xlu0.c.b16.cont [6/8] 0, 128
        %1401 = vxpose.xlu0.c.b16.cont [7/8] 0, 128
        %1402 = vxpose.xlu0.c.b16.end [8/8] 0, 128
        %v1403 = vpop.trf.xlu0
        %v1404 = vpop.trf.xlu0
        %v1405 = vpop.trf.xlu0
        %v1406 = vpop.trf.xlu0
        %v1407 = vpop.trf.xlu0
        %v1408 = vpop.trf.xlu0
        %v1409 = vpop.trf.xlu0
        %v1410 = vpop.trf.xlu0
        %v1412 = vsel %vm1115, %v1403, 0
        %1414 = vmatprep.subr.bf16.mxu0 0
        %1415 = vmatpush1.bf16.msra.mxu0 %v1078
        %1416 = vmatprep.subr.bf16.mxu0 0
        %1417 = vmatpush1.bf16.msra.mxu0 0
        %1418 = vmatprep.subr.bf16.mxu0 0
        %1419 = vmatpush1.bf16.msra.mxu0 0
        %1420 = vmatprep.subr.bf16.mxu0 0
        %1421 = vmatpush1.bf16.msra.mxu0 0
        %1422 = vmatprep.subr.bf16.mxu0 0
        %1423 = vmatpush1.bf16.msra.mxu0 0
        %1424 = vmatprep.subr.bf16.mxu0 0
        %1425 = vmatpush1.bf16.msra.mxu0 0
        %1426 = vmatprep.subr.bf16.mxu0 0
        %1427 = vmatpush1.bf16.msra.mxu0 0
        %1428 = vmatprep.subr.bf16.mxu0 0
        %1429 = vmatpush1.bf16.msra.mxu0 0
        %1430 = vmatprep.subr.bf16.mxu0 0
        %1431 = vmatpush1.bf16.msra.mxu0 0
        %1432 = vmatprep.subr.bf16.mxu0 0
        %1433 = vmatpush1.bf16.msra.mxu0 0
        %1434 = vmatprep.subr.bf16.mxu0 0
        %1435 = vmatpush1.bf16.msra.mxu0 0
        %1436 = vmatprep.subr.bf16.mxu0 0
        %1437 = vmatpush1.bf16.msra.mxu0 0
        %1438 = vmatprep.subr.bf16.mxu0 0
        %1439 = vmatpush1.bf16.msra.mxu0 0
        %1440 = vmatprep.subr.bf16.mxu0 0
        %1441 = vmatpush1.bf16.msra.mxu0 0
        %1442 = vmatprep.subr.bf16.mxu0 0
        %1443 = vmatpush1.bf16.msra.mxu0 0
        %1444 = vmatprep.subr.bf16.mxu0 0
        %1445 = vmatpush1.bf16.msra.mxu0 0
        %1446 = vmatprep.mubr.bf16.mxu0 0
        %1447 = vmatmul.mubr.bf16.gmra.mrb[0].mxu0 %v1412
        %v1448 = vpop.f32.mrb[0].mxu0
        %v1449 = vadd.f32 %v1098, %v1448
        %v1450 = vpop.f32.mrb[0].mxu0
        %v1451 = vpop.f32.mrb[0].mxu0
        %v1452 = vpop.f32.mrb[0].mxu0
        %1453 = vdwg.mxu0
        %1454 = vxpose.xlu0.c.b16.start [1/8] %v1095, 128
        %1455 = vxpose.xlu0.c.b16.cont [2/8] 0, 128
        %1456 = vxpose.xlu0.c.b16.cont [3/8] 0, 128
        %1457 = vxpose.xlu0.c.b16.cont [4/8] 0, 128
        %1458 = vxpose.xlu0.c.b16.cont [5/8] 0, 128
        %1459 = vxpose.xlu0.c.b16.cont [6/8] 0, 128
        %1460 = vxpose.xlu0.c.b16.cont [7/8] 0, 128
        %1461 = vxpose.xlu0.c.b16.end [8/8] 0, 128
        %v1462 = vpop.trf.xlu0
        %v1463 = vpop.trf.xlu0
        %v1464 = vpop.trf.xlu0
        %v1465 = vpop.trf.xlu0
        %v1466 = vpop.trf.xlu0
        %v1467 = vpop.trf.xlu0
        %v1468 = vpop.trf.xlu0
        %v1469 = vpop.trf.xlu0
        %v1471 = vsel %vm1115, %v1462, 0
        %1473 = vmatprep.subr.bf16.mxu0 0
        %1474 = vmatpush1.bf16.msra.mxu0 %v1079
        %1475 = vmatprep.subr.bf16.mxu0 0
        %1476 = vmatpush1.bf16.msra.mxu0 0
        %1477 = vmatprep.subr.bf16.mxu0 0
        %1478 = vmatpush1.bf16.msra.mxu0 0
        %1479 = vmatprep.subr.bf16.mxu0 0
        %1480 = vmatpush1.bf16.msra.mxu0 0
        %1481 = vmatprep.subr.bf16.mxu0 0
        %1482 = vmatpush1.bf16.msra.mxu0 0
        %1483 = vmatprep.subr.bf16.mxu0 0
        %1484 = vmatpush1.bf16.msra.mxu0 0
        %1485 = vmatprep.subr.bf16.mxu0 0
        %1486 = vmatpush1.bf16.msra.mxu0 0
        %1487 = vmatprep.subr.bf16.mxu0 0
        %1488 = vmatpush1.bf16.msra.mxu0 0
        %1489 = vmatprep.subr.bf16.mxu0 0
        %1490 = vmatpush1.bf16.msra.mxu0 0
        %1491 = vmatprep.subr.bf16.mxu0 0
        %1492 = vmatpush1.bf16.msra.mxu0 0
        %1493 = vmatprep.subr.bf16.mxu0 0
        %1494 = vmatpush1.bf16.msra.mxu0 0
        %1495 = vmatprep.subr.bf16.mxu0 0
        %1496 = vmatpush1.bf16.msra.mxu0 0
        %1497 = vmatprep.subr.bf16.mxu0 0
        %1498 = vmatpush1.bf16.msra.mxu0 0
        %1499 = vmatprep.subr.bf16.mxu0 0
        %1500 = vmatpush1.bf16.msra.mxu0 0
        %1501 = vmatprep.subr.bf16.mxu0 0
        %1502 = vmatpush1.bf16.msra.mxu0 0
        %1503 = vmatprep.subr.bf16.mxu0 0
        %1504 = vmatpush1.bf16.msra.mxu0 0
        %1505 = vmatprep.mubr.bf16.mxu0 0
        %1506 = vmatmul.mubr.bf16.gmra.mrb[0].mxu0 %v1471
        %v1507 = vpop.f32.mrb[0].mxu0
        %v1508 = vadd.f32 %v1098, %v1507
        %v1509 = vpop.f32.mrb[0].mxu0
        %v1510 = vpop.f32.mrb[0].mxu0
        %v1511 = vpop.f32.mrb[0].mxu0
        %1512 = vdwg.mxu0
        %1513 = vxpose.xlu0.c.b16.start [1/8] %v1096, 128
        %1514 = vxpose.xlu0.c.b16.cont [2/8] 0, 128
        %1515 = vxpose.xlu0.c.b16.cont [3/8] 0, 128
        %1516 = vxpose.xlu0.c.b16.cont [4/8] 0, 128
        %1517 = vxpose.xlu0.c.b16.cont [5/8] 0, 128
        %1518 = vxpose.xlu0.c.b16.cont [6/8] 0, 128
        %1519 = vxpose.xlu0.c.b16.cont [7/8] 0, 128
        %1520 = vxpose.xlu0.c.b16.end [8/8] 0, 128
        %v1521 = vpop.trf.xlu0
        %v1522 = vpop.trf.xlu0
        %v1523 = vpop.trf.xlu0
        %v1524 = vpop.trf.xlu0
        %v1525 = vpop.trf.xlu0
        %v1526 = vpop.trf.xlu0
        %v1527 = vpop.trf.xlu0
        %v1528 = vpop.trf.xlu0
        %v1530 = vsel %vm1115, %v1521, 0
        %1532 = vmatprep.subr.bf16.mxu0 0
        %1533 = vmatpush1.bf16.msra.mxu0 %v1080
        %1534 = vmatprep.subr.bf16.mxu0 0
        %1535 = vmatpush1.bf16.msra.mxu0 0
        %1536 = vmatprep.subr.bf16.mxu0 0
        %1537 = vmatpush1.bf16.msra.mxu0 0
        %1538 = vmatprep.subr.bf16.mxu0 0
        %1539 = vmatpush1.bf16.msra.mxu0 0
        %1540 = vmatprep.subr.bf16.mxu0 0
        %1541 = vmatpush1.bf16.msra.mxu0 0
        %1542 = vmatprep.subr.bf16.mxu0 0
        %1543 = vmatpush1.bf16.msra.mxu0 0
        %1544 = vmatprep.subr.bf16.mxu0 0
        %1545 = vmatpush1.bf16.msra.mxu0 0
        %1546 = vmatprep.subr.bf16.mxu0 0
        %1547 = vmatpush1.bf16.msra.mxu0 0
        %1548 = vmatprep.subr.bf16.mxu0 0
        %1549 = vmatpush1.bf16.msra.mxu0 0
        %1550 = vmatprep.subr.bf16.mxu0 0
        %1551 = vmatpush1.bf16.msra.mxu0 0
        %1552 = vmatprep.subr.bf16.mxu0 0
        %1553 = vmatpush1.bf16.msra.mxu0 0
        %1554 = vmatprep.subr.bf16.mxu0 0
        %1555 = vmatpush1.bf16.msra.mxu0 0
        %1556 = vmatprep.subr.bf16.mxu0 0
        %1557 = vmatpush1.bf16.msra.mxu0 0
        %1558 = vmatprep.subr.bf16.mxu0 0
        %1559 = vmatpush1.bf16.msra.mxu0 0
        %1560 = vmatprep.subr.bf16.mxu0 0
        %1561 = vmatpush1.bf16.msra.mxu0 0
        %1562 = vmatprep.subr.bf16.mxu0 0
        %1563 = vmatpush1.bf16.msra.mxu0 0
        %1564 = vmatprep.mubr.bf16.mxu0 0
        %1565 = vmatmul.mubr.bf16.gmra.mrb[0].mxu0 %v1530
        %v1566 = vpop.f32.mrb[0].mxu0
        %v1567 = vadd.f32 %v1098, %v1566
        %v1568 = vpop.f32.mrb[0].mxu0
        %v1569 = vpop.f32.mrb[0].mxu0
        %v1570 = vpop.f32.mrb[0].mxu0
        %1571 = vdwg.mxu0
        %v1572 = vld [vmem:[#allocation3] sm:$0xff]
        %v1573 = vsel %vm1115, %v1154, -inf
        %1574 = vmax.xlane.f32.xlu0 %v1573
        %v1575 = vpop.xlane.xlu0 %1574
        %v1576 = vsel %vm1115, %v1213, -inf
        %1577 = vmax.xlane.f32.xlu0 %v1576
        %v1578 = vpop.xlane.xlu0 %1577
        %v1579 = vsel %vm1115, %v1272, -inf
        %1580 = vmax.xlane.f32.xlu0 %v1579
        %v1581 = vpop.xlane.xlu0 %1580
        %v1582 = vsel %vm1115, %v1331, -inf
        %1583 = vmax.xlane.f32.xlu0 %v1582
        %v1584 = vpop.xlane.xlu0 %1583
        %v1585 = vsel %vm1115, %v1390, -inf
        %1586 = vmax.xlane.f32.xlu0 %v1585
        %v1587 = vpop.xlane.xlu0 %1586
        %v1588 = vsel %vm1115, %v1449, -inf
        %1589 = vmax.xlane.f32.xlu0 %v1588
        %v1590 = vpop.xlane.xlu0 %1589
        %v1591 = vsel %vm1115, %v1508, -inf
        %1592 = vmax.xlane.f32.xlu0 %v1591
        %v1593 = vpop.xlane.xlu0 %1592
        %v1594 = vsel %vm1115, %v1567, -inf
        %1595 = vmax.xlane.f32.xlu0 %v1594
        %v1596 = vpop.xlane.xlu0 %1595
        %v1605 = vlaneseq
        %v1606 = vand.u32 %v1605, 127
        %v1607 = vlaneseq
        %v1608 = vshrl.u32 %v1607, 7
        %v1609 = vsub.s32 %v1606, %v1608
        %v1610 = vrot.slane %v1575, %v1609
        %v1611 = vlaneseq
        %v1612 = vshrl.u32 %v1611, 7
        %v1613 = vsub.s32 %v1606, %v1612
        %v1614 = vrot.slane %v1578, %v1613
        %v1615 = vlaneseq
        %v1616 = vshrl.u32 %v1615, 7
        %v1617 = vsub.s32 %v1606, %v1616
        %v1618 = vrot.slane %v1581, %v1617
        %v1619 = vlaneseq
        %v1620 = vshrl.u32 %v1619, 7
        %v1621 = vsub.s32 %v1606, %v1620
        %v1622 = vrot.slane %v1584, %v1621
        %v1623 = vlaneseq
        %v1624 = vshrl.u32 %v1623, 7
        %v1625 = vsub.s32 %v1606, %v1624
        %v1626 = vrot.slane %v1587, %v1625
        %v1627 = vlaneseq
        %v1628 = vshrl.u32 %v1627, 7
        %v1629 = vsub.s32 %v1606, %v1628
        %v1630 = vrot.slane %v1590, %v1629
        %v1631 = vlaneseq
        %v1632 = vshrl.u32 %v1631, 7
        %v1633 = vsub.s32 %v1606, %v1632
        %v1634 = vrot.slane %v1593, %v1633
        %v1635 = vlaneseq
        %v1636 = vshrl.u32 %v1635, 7
        %v1637 = vsub.s32 %v1606, %v1636
        %v1638 = vrot.slane %v1596, %v1637
        %vm1639 = vcmask 1041409
        %v1640 = vsel %vm1639, %v1614, %v1610
        %vm1641 = vcmask 1042434
        %v1642 = vsel %vm1641, %v1618, %v1640
        %vm1643 = vcmask 1043459
        %v1644 = vsel %vm1643, %v1622, %v1642
        %vm1645 = vcmask 1044484
        %v1646 = vsel %vm1645, %v1626, %v1644
        %vm1647 = vcmask 1045509
        %v1648 = vsel %vm1647, %v1630, %v1646
        %vm1649 = vcmask 1046534
        %v1650 = vsel %vm1649, %v1634, %v1648
        %vm1651 = vcmask 1047559
        %v1652 = vsel %vm1651, %v1638, %v1650
        %v1654 = vmax.f32 %v1572, %v1652
        %v1655 = vsub.f32 %v1572, %v1654
        %v1656 = vmul.f32 %v1655, 1.442695
        %v1657 = vpow.pop %v1656
        %v1658 = vlaneseq
        %v1659 = vshrl.u32 %v1658, 7
        %v1660 = vsub.s32 0, %v1659
        %v1661 = vrot.slane %v1654, %v1660
        %1663 = vbcast.lane.b32.xlu0 %v1661, 256
        %v1664 = vpop.permute.xlu0 %1663
        %v1665 = vlaneseq
        %v1666 = vshrl.u32 %v1665, 7
        %v1667 = vsub.s32 1, %v1666
        %v1668 = vrot.slane %v1654, %v1667
        %1670 = vbcast.lane.b32.xlu0 %v1668, 256
        %v1671 = vpop.permute.xlu0 %1670
        %v1672 = vlaneseq
        %v1673 = vshrl.u32 %v1672, 7
        %v1674 = vsub.s32 2, %v1673
        %v1675 = vrot.slane %v1654, %v1674
        %1677 = vbcast.lane.b32.xlu0 %v1675, 256
        %v1678 = vpop.permute.xlu0 %1677
        %v1679 = vlaneseq
        %v1680 = vshrl.u32 %v1679, 7
        %v1681 = vsub.s32 3, %v1680
        %v1682 = vrot.slane %v1654, %v1681
        %1684 = vbcast.lane.b32.xlu0 %v1682, 256
        %v1685 = vpop.permute.xlu0 %1684
        %v1686 = vlaneseq
        %v1687 = vshrl.u32 %v1686, 7
        %v1688 = vsub.s32 4, %v1687
        %v1689 = vrot.slane %v1654, %v1688
        %1691 = vbcast.lane.b32.xlu0 %v1689, 256
        %v1692 = vpop.permute.xlu0 %1691
        %v1693 = vlaneseq
        %v1694 = vshrl.u32 %v1693, 7
        %v1695 = vsub.s32 5, %v1694
        %v1696 = vrot.slane %v1654, %v1695
        %1698 = vbcast.lane.b32.xlu0 %v1696, 256
        %v1699 = vpop.permute.xlu0 %1698
        %v1700 = vlaneseq
        %v1701 = vshrl.u32 %v1700, 7
        %v1702 = vsub.s32 6, %v1701
        %v1703 = vrot.slane %v1654, %v1702
        %1705 = vbcast.lane.b32.xlu0 %v1703, 256
        %v1706 = vpop.permute.xlu0 %1705
        %v1707 = vlaneseq
        %v1708 = vshrl.u32 %v1707, 7
        %v1709 = vsub.s32 7, %v1708
        %v1710 = vrot.slane %v1654, %v1709
        %1712 = vbcast.lane.b32.xlu0 %v1710, 256
        %v1713 = vpop.permute.xlu0 %1712
        %v1714 = vsub.f32 %v1154, %v1664
        %v1715 = vsub.f32 %v1213, %v1671
        %v1716 = vsub.f32 %v1272, %v1678
        %v1717 = vsub.f32 %v1331, %v1685
        %v1718 = vsub.f32 %v1390, %v1692
        %v1719 = vsub.f32 %v1449, %v1699
        %v1720 = vsub.f32 %v1508, %v1706
        %v1721 = vsub.f32 %v1567, %v1713
        %v1722 = vmul.f32 %v1714, 1.442695
        %v1723 = vpow.pop %v1722
        %v1724 = vmul.f32 %v1715, 1.442695
        %v1725 = vpow.pop %v1724
        %v1726 = vmul.f32 %v1716, 1.442695
        %v1727 = vpow.pop %v1726
        %v1728 = vmul.f32 %v1717, 1.442695
        %v1729 = vpow.pop %v1728
        %v1730 = vmul.f32 %v1718, 1.442695
        %v1731 = vpow.pop %v1730
        %v1732 = vmul.f32 %v1719, 1.442695
        %v1733 = vpow.pop %v1732
        %v1734 = vmul.f32 %v1720, 1.442695
        %v1735 = vpow.pop %v1734
        %v1736 = vmul.f32 %v1721, 1.442695
        %v1737 = vpow.pop %v1736
        %v1738 = vld [vmem:[#allocation4] sm:$0xff]
        %v1739 = vmul.f32 %v1657, %v1738
        %v1740 = vsel %vm1115, %v1723, 0.0
        %1741 = vadd.xlane.f32.xlu0 %v1740
        %v1742 = vpop.xlane.xlu0 %1741
        %v1743 = vsel %vm1115, %v1725, 0.0
        %1744 = vadd.xlane.f32.xlu0 %v1743
        %v1745 = vpop.xlane.xlu0 %1744
        %v1746 = vsel %vm1115, %v1727, 0.0
        %1747 = vadd.xlane.f32.xlu0 %v1746
        %v1748 = vpop.xlane.xlu0 %1747
        %v1749 = vsel %vm1115, %v1729, 0.0
        %1750 = vadd.xlane.f32.xlu0 %v1749
        %v1751 = vpop.xlane.xlu0 %1750
        %v1752 = vsel %vm1115, %v1731, 0.0
        %1753 = vadd.xlane.f32.xlu0 %v1752
        %v1754 = vpop.xlane.xlu0 %1753
        %v1755 = vsel %vm1115, %v1733, 0.0
        %1756 = vadd.xlane.f32.xlu0 %v1755
        %v1757 = vpop.xlane.xlu0 %1756
        %v1758 = vsel %vm1115, %v1735, 0.0
        %1759 = vadd.xlane.f32.xlu0 %v1758
        %v1760 = vpop.xlane.xlu0 %1759
        %v1761 = vsel %vm1115, %v1737, 0.0
        %1762 = vadd.xlane.f32.xlu0 %v1761
        %v1763 = vpop.xlane.xlu0 %1762
        %v1772 = vlaneseq
        %v1773 = vshrl.u32 %v1772, 7
        %v1774 = vsub.s32 %v1606, %v1773
        %v1775 = vrot.slane %v1742, %v1774
        %v1776 = vlaneseq
        %v1777 = vshrl.u32 %v1776, 7
        %v1778 = vsub.s32 %v1606, %v1777
        %v1779 = vrot.slane %v1745, %v1778
        %v1780 = vlaneseq
        %v1781 = vshrl.u32 %v1780, 7
        %v1782 = vsub.s32 %v1606, %v1781
        %v1783 = vrot.slane %v1748, %v1782
        %v1784 = vlaneseq
        %v1785 = vshrl.u32 %v1784, 7
        %v1786 = vsub.s32 %v1606, %v1785
        %v1787 = vrot.slane %v1751, %v1786
        %v1788 = vlaneseq
        %v1789 = vshrl.u32 %v1788, 7
        %v1790 = vsub.s32 %v1606, %v1789
        %v1791 = vrot.slane %v1754, %v1790
        %v1792 = vlaneseq
        %v1793 = vshrl.u32 %v1792, 7
        %v1794 = vsub.s32 %v1606, %v1793
        %v1795 = vrot.slane %v1757, %v1794
        %v1796 = vlaneseq
        %v1797 = vshrl.u32 %v1796, 7
        %v1798 = vsub.s32 %v1606, %v1797
        %v1799 = vrot.slane %v1760, %v1798
        %v1800 = vlaneseq
        %v1801 = vshrl.u32 %v1800, 7
        %v1802 = vsub.s32 %v1606, %v1801
        %v1803 = vrot.slane %v1763, %v1802
        %v1804 = vsel %vm1639, %v1779, %v1775
        %v1805 = vsel %vm1641, %v1783, %v1804
        %v1806 = vsel %vm1643, %v1787, %v1805
        %v1807 = vsel %vm1645, %v1791, %v1806
        %v1808 = vsel %vm1647, %v1795, %v1807
        %v1809 = vsel %vm1649, %v1799, %v1808
        %v1810 = vsel %vm1651, %v1803, %v1809
        %v1812 = vadd.f32 %v1739, %v1810
        %vm1813 = vcmask 64512
        %1814 = vst.msk [vmem:[#allocation4] sm:$0xff] %vm1813, %v1812
        %1815 = vst.msk [vmem:[#allocation3] sm:$0xff] %vm1813, %v1654
        %v1816 = vpack.c.bf16 %v1723, %v1723
        %v1817 = vpack.c.bf16 %v1725, %v1725
        %v1818 = vpack.c.bf16 %v1727, %v1727
        %v1819 = vpack.c.bf16 %v1729, %v1729
        %v1820 = vpack.c.bf16 %v1731, %v1731
        %v1821 = vpack.c.bf16 %v1733, %v1733
        %v1822 = vpack.c.bf16 %v1735, %v1735
        %v1823 = vpack.c.bf16 %v1737, %v1737
        %v1825 = vsel %vm1115, %v1081, 0
        %v1828 = vsel %vm1115, %v1816, 0
        %1830 = vmatprep.subr.bf16.mxu0 0
        %1831 = vmatpush1.bf16.xpose.msra.mxu0 %v1828
        %1832 = vmatprep.subr.bf16.mxu0 0
        %1833 = vmatpush1.bf16.xpose.msra.mxu0 0
        %1834 = vmatprep.subr.bf16.mxu0 0
        %1835 = vmatpush1.bf16.xpose.msra.mxu0 0
        %1836 = vmatprep.subr.bf16.mxu0 0
        %1837 = vmatpush1.bf16.xpose.msra.mxu0 0
        %1838 = vmatprep.subr.bf16.mxu0 0
        %1839 = vmatpush1.bf16.xpose.msra.mxu0 0
        %1840 = vmatprep.subr.bf16.mxu0 0
        %1841 = vmatpush1.bf16.xpose.msra.mxu0 0
        %1842 = vmatprep.subr.bf16.mxu0 0
        %1843 = vmatpush1.bf16.xpose.msra.mxu0 0
        %1844 = vmatprep.subr.bf16.mxu0 0
        %1845 = vmatpush1.bf16.xpose.msra.mxu0 0
        %1846 = vmatprep.subr.bf16.mxu0 0
        %1847 = vmatpush1.bf16.xpose.msra.mxu0 0
        %1848 = vmatprep.subr.bf16.mxu0 0
        %1849 = vmatpush1.bf16.xpose.msra.mxu0 0
        %1850 = vmatprep.subr.bf16.mxu0 0
        %1851 = vmatpush1.bf16.xpose.msra.mxu0 0
        %1852 = vmatprep.subr.bf16.mxu0 0
        %1853 = vmatpush1.bf16.xpose.msra.mxu0 0
        %1854 = vmatprep.subr.bf16.mxu0 0
        %1855 = vmatpush1.bf16.xpose.msra.mxu0 0
        %1856 = vmatprep.subr.bf16.mxu0 0
        %1857 = vmatpush1.bf16.xpose.msra.mxu0 0
        %1858 = vmatprep.subr.bf16.mxu0 0
        %1859 = vmatpush1.bf16.xpose.msra.mxu0 0
        %1860 = vmatprep.subr.bf16.mxu0 0
        %1861 = vmatpush1.bf16.xpose.msra.mxu0 0
        %1862 = vmatprep.mubr.bf16.mxu0 0
        %1863 = vmatmul.mubr.bf16.gmra.mrb[0].mxu0 %v1825
        %v1864 = vpop.f32.mrb[0].mxu0
        %v1865 = vadd.f32 0.0, %v1864
        %v1866 = vpop.f32.mrb[0].mxu0
        %v1867 = vpop.f32.mrb[0].mxu0
        %v1868 = vadd.f32 0.0, %v1867
        %v1869 = vpop.f32.mrb[0].mxu0
        %1870 = vdwg.mxu0
        %v1872 = vsel %vm1115, %v1082, 0
        %v1875 = vsel %vm1115, %v1817, 0
        %1877 = vmatprep.subr.bf16.mxu0 0
        %1878 = vmatpush1.bf16.xpose.msra.mxu0 %v1875
        %1879 = vmatprep.subr.bf16.mxu0 0
        %1880 = vmatpush1.bf16.xpose.msra.mxu0 0
        %1881 = vmatprep.subr.bf16.mxu0 0
        %1882 = vmatpush1.bf16.xpose.msra.mxu0 0
        %1883 = vmatprep.subr.bf16.mxu0 0
        %1884 = vmatpush1.bf16.xpose.msra.mxu0 0
        %1885 = vmatprep.subr.bf16.mxu0 0
        %1886 = vmatpush1.bf16.xpose.msra.mxu0 0
        %1887 = vmatprep.subr.bf16.mxu0 0
        %1888 = vmatpush1.bf16.xpose.msra.mxu0 0
        %1889 = vmatprep.subr.bf16.mxu0 0
        %1890 = vmatpush1.bf16.xpose.msra.mxu0 0
        %1891 = vmatprep.subr.bf16.mxu0 0
        %1892 = vmatpush1.bf16.xpose.msra.mxu0 0
        %1893 = vmatprep.subr.bf16.mxu0 0
        %1894 = vmatpush1.bf16.xpose.msra.mxu0 0
        %1895 = vmatprep.subr.bf16.mxu0 0
        %1896 = vmatpush1.bf16.xpose.msra.mxu0 0
        %1897 = vmatprep.subr.bf16.mxu0 0
        %1898 = vmatpush1.bf16.xpose.msra.mxu0 0
        %1899 = vmatprep.subr.bf16.mxu0 0
        %1900 = vmatpush1.bf16.xpose.msra.mxu0 0
        %1901 = vmatprep.subr.bf16.mxu0 0
        %1902 = vmatpush1.bf16.xpose.msra.mxu0 0
        %1903 = vmatprep.subr.bf16.mxu0 0
        %1904 = vmatpush1.bf16.xpose.msra.mxu0 0
        %1905 = vmatprep.subr.bf16.mxu0 0
        %1906 = vmatpush1.bf16.xpose.msra.mxu0 0
        %1907 = vmatprep.subr.bf16.mxu0 0
        %1908 = vmatpush1.bf16.xpose.msra.mxu0 0
        %1909 = vmatprep.mubr.bf16.mxu0 0
        %1910 = vmatmul.mubr.bf16.gmra.mrb[0].mxu0 %v1872
        %v1911 = vpop.f32.mrb[0].mxu0
        %v1912 = vadd.f32 0.0, %v1911
        %v1913 = vpop.f32.mrb[0].mxu0
        %v1914 = vpop.f32.mrb[0].mxu0
        %v1915 = vadd.f32 0.0, %v1914
        %v1916 = vpop.f32.mrb[0].mxu0
        %1917 = vdwg.mxu0
        %v1919 = vsel %vm1115, %v1083, 0
        %v1922 = vsel %vm1115, %v1818, 0
        %1924 = vmatprep.subr.bf16.mxu0 0
        %1925 = vmatpush1.bf16.xpose.msra.mxu0 %v1922
        %1926 = vmatprep.subr.bf16.mxu0 0
        %1927 = vmatpush1.bf16.xpose.msra.mxu0 0
        %1928 = vmatprep.subr.bf16.mxu0 0
        %1929 = vmatpush1.bf16.xpose.msra.mxu0 0
        %1930 = vmatprep.subr.bf16.mxu0 0
        %1931 = vmatpush1.bf16.xpose.msra.mxu0 0
        %1932 = vmatprep.subr.bf16.mxu0 0
        %1933 = vmatpush1.bf16.xpose.msra.mxu0 0
        %1934 = vmatprep.subr.bf16.mxu0 0
        %1935 = vmatpush1.bf16.xpose.msra.mxu0 0
        %1936 = vmatprep.subr.bf16.mxu0 0
        %1937 = vmatpush1.bf16.xpose.msra.mxu0 0
        %1938 = vmatprep.subr.bf16.mxu0 0
        %1939 = vmatpush1.bf16.xpose.msra.mxu0 0
        %1940 = vmatprep.subr.bf16.mxu0 0
        %1941 = vmatpush1.bf16.xpose.msra.mxu0 0
        %1942 = vmatprep.subr.bf16.mxu0 0
        %1943 = vmatpush1.bf16.xpose.msra.mxu0 0
        %1944 = vmatprep.subr.bf16.mxu0 0
        %1945 = vmatpush1.bf16.xpose.msra.mxu0 0
        %1946 = vmatprep.subr.bf16.mxu0 0
        %1947 = vmatpush1.bf16.xpose.msra.mxu0 0
        %1948 = vmatprep.subr.bf16.mxu0 0
        %1949 = vmatpush1.bf16.xpose.msra.mxu0 0
        %1950 = vmatprep.subr.bf16.mxu0 0
        %1951 = vmatpush1.bf16.xpose.msra.mxu0 0
        %1952 = vmatprep.subr.bf16.mxu0 0
        %1953 = vmatpush1.bf16.xpose.msra.mxu0 0
        %1954 = vmatprep.subr.bf16.mxu0 0
        %1955 = vmatpush1.bf16.xpose.msra.mxu0 0
        %1956 = vmatprep.mubr.bf16.mxu0 0
        %1957 = vmatmul.mubr.bf16.gmra.mrb[0].mxu0 %v1919
        %v1958 = vpop.f32.mrb[0].mxu0
        %v1959 = vadd.f32 0.0, %v1958
        %v1960 = vpop.f32.mrb[0].mxu0
        %v1961 = vpop.f32.mrb[0].mxu0
        %v1962 = vadd.f32 0.0, %v1961
        %v1963 = vpop.f32.mrb[0].mxu0
        %1964 = vdwg.mxu0
        %v1966 = vsel %vm1115, %v1084, 0
        %v1969 = vsel %vm1115, %v1819, 0
        %1971 = vmatprep.subr.bf16.mxu0 0
        %1972 = vmatpush1.bf16.xpose.msra.mxu0 %v1969
        %1973 = vmatprep.subr.bf16.mxu0 0
        %1974 = vmatpush1.bf16.xpose.msra.mxu0 0
        %1975 = vmatprep.subr.bf16.mxu0 0
        %1976 = vmatpush1.bf16.xpose.msra.mxu0 0
        %1977 = vmatprep.subr.bf16.mxu0 0
        %1978 = vmatpush1.bf16.xpose.msra.mxu0 0
        %1979 = vmatprep.subr.bf16.mxu0 0
        %1980 = vmatpush1.bf16.xpose.msra.mxu0 0
        %1981 = vmatprep.subr.bf16.mxu0 0
        %1982 = vmatpush1.bf16.xpose.msra.mxu0 0
        %1983 = vmatprep.subr.bf16.mxu0 0
        %1984 = vmatpush1.bf16.xpose.msra.mxu0 0
        %1985 = vmatprep.subr.bf16.mxu0 0
        %1986 = vmatpush1.bf16.xpose.msra.mxu0 0
        %1987 = vmatprep.subr.bf16.mxu0 0
        %1988 = vmatpush1.bf16.xpose.msra.mxu0 0
        %1989 = vmatprep.subr.bf16.mxu0 0
        %1990 = vmatpush1.bf16.xpose.msra.mxu0 0
        %1991 = vmatprep.subr.bf16.mxu0 0
        %1992 = vmatpush1.bf16.xpose.msra.mxu0 0
        %1993 = vmatprep.subr.bf16.mxu0 0
        %1994 = vmatpush1.bf16.xpose.msra.mxu0 0
        %1995 = vmatprep.subr.bf16.mxu0 0
        %1996 = vmatpush1.bf16.xpose.msra.mxu0 0
        %1997 = vmatprep.subr.bf16.mxu0 0
        %1998 = vmatpush1.bf16.xpose.msra.mxu0 0
        %1999 = vmatprep.subr.bf16.mxu0 0
        %2000 = vmatpush1.bf16.xpose.msra.mxu0 0
        %2001 = vmatprep.subr.bf16.mxu0 0
        %2002 = vmatpush1.bf16.xpose.msra.mxu0 0
        %2003 = vmatprep.mubr.bf16.mxu0 0
        %2004 = vmatmul.mubr.bf16.gmra.mrb[0].mxu0 %v1966
        %v2005 = vpop.f32.mrb[0].mxu0
        %v2006 = vadd.f32 0.0, %v2005
        %v2007 = vpop.f32.mrb[0].mxu0
        %v2008 = vpop.f32.mrb[0].mxu0
        %v2009 = vadd.f32 0.0, %v2008
        %v2010 = vpop.f32.mrb[0].mxu0
        %2011 = vdwg.mxu0
        %v2013 = vsel %vm1115, %v1085, 0
        %v2016 = vsel %vm1115, %v1820, 0
        %2018 = vmatprep.subr.bf16.mxu0 0
        %2019 = vmatpush1.bf16.xpose.msra.mxu0 %v2016
        %2020 = vmatprep.subr.bf16.mxu0 0
        %2021 = vmatpush1.bf16.xpose.msra.mxu0 0
        %2022 = vmatprep.subr.bf16.mxu0 0
        %2023 = vmatpush1.bf16.xpose.msra.mxu0 0
        %2024 = vmatprep.subr.bf16.mxu0 0
        %2025 = vmatpush1.bf16.xpose.msra.mxu0 0
        %2026 = vmatprep.subr.bf16.mxu0 0
        %2027 = vmatpush1.bf16.xpose.msra.mxu0 0
        %2028 = vmatprep.subr.bf16.mxu0 0
        %2029 = vmatpush1.bf16.xpose.msra.mxu0 0
        %2030 = vmatprep.subr.bf16.mxu0 0
        %2031 = vmatpush1.bf16.xpose.msra.mxu0 0
        %2032 = vmatprep.subr.bf16.mxu0 0
        %2033 = vmatpush1.bf16.xpose.msra.mxu0 0
        %2034 = vmatprep.subr.bf16.mxu0 0
        %2035 = vmatpush1.bf16.xpose.msra.mxu0 0
        %2036 = vmatprep.subr.bf16.mxu0 0
        %2037 = vmatpush1.bf16.xpose.msra.mxu0 0
        %2038 = vmatprep.subr.bf16.mxu0 0
        %2039 = vmatpush1.bf16.xpose.msra.mxu0 0
        %2040 = vmatprep.subr.bf16.mxu0 0
        %2041 = vmatpush1.bf16.xpose.msra.mxu0 0
        %2042 = vmatprep.subr.bf16.mxu0 0
        %2043 = vmatpush1.bf16.xpose.msra.mxu0 0
        %2044 = vmatprep.subr.bf16.mxu0 0
        %2045 = vmatpush1.bf16.xpose.msra.mxu0 0
        %2046 = vmatprep.subr.bf16.mxu0 0
        %2047 = vmatpush1.bf16.xpose.msra.mxu0 0
        %2048 = vmatprep.subr.bf16.mxu0 0
        %2049 = vmatpush1.bf16.xpose.msra.mxu0 0
        %2050 = vmatprep.mubr.bf16.mxu0 0
        %2051 = vmatmul.mubr.bf16.gmra.mrb[0].mxu0 %v2013
        %v2052 = vpop.f32.mrb[0].mxu0
        %v2053 = vadd.f32 0.0, %v2052
        %v2054 = vpop.f32.mrb[0].mxu0
        %v2055 = vpop.f32.mrb[0].mxu0
        %v2056 = vadd.f32 0.0, %v2055
        %v2057 = vpop.f32.mrb[0].mxu0
        %2058 = vdwg.mxu0
        %v2060 = vsel %vm1115, %v1086, 0
        %v2063 = vsel %vm1115, %v1821, 0
        %2065 = vmatprep.subr.bf16.mxu0 0
        %2066 = vmatpush1.bf16.xpose.msra.mxu0 %v2063
        %2067 = vmatprep.subr.bf16.mxu0 0
        %2068 = vmatpush1.bf16.xpose.msra.mxu0 0
        %2069 = vmatprep.subr.bf16.mxu0 0
        %2070 = vmatpush1.bf16.xpose.msra.mxu0 0
        %2071 = vmatprep.subr.bf16.mxu0 0
        %2072 = vmatpush1.bf16.xpose.msra.mxu0 0
        %2073 = vmatprep.subr.bf16.mxu0 0
        %2074 = vmatpush1.bf16.xpose.msra.mxu0 0
        %2075 = vmatprep.subr.bf16.mxu0 0
        %2076 = vmatpush1.bf16.xpose.msra.mxu0 0
        %2077 = vmatprep.subr.bf16.mxu0 0
        %2078 = vmatpush1.bf16.xpose.msra.mxu0 0
        %2079 = vmatprep.subr.bf16.mxu0 0
        %2080 = vmatpush1.bf16.xpose.msra.mxu0 0
        %2081 = vmatprep.subr.bf16.mxu0 0
        %2082 = vmatpush1.bf16.xpose.msra.mxu0 0
        %2083 = vmatprep.subr.bf16.mxu0 0
        %2084 = vmatpush1.bf16.xpose.msra.mxu0 0
        %2085 = vmatprep.subr.bf16.mxu0 0
        %2086 = vmatpush1.bf16.xpose.msra.mxu0 0
        %2087 = vmatprep.subr.bf16.mxu0 0
        %2088 = vmatpush1.bf16.xpose.msra.mxu0 0
        %2089 = vmatprep.subr.bf16.mxu0 0
        %2090 = vmatpush1.bf16.xpose.msra.mxu0 0
        %2091 = vmatprep.subr.bf16.mxu0 0
        %2092 = vmatpush1.bf16.xpose.msra.mxu0 0
        %2093 = vmatprep.subr.bf16.mxu0 0
        %2094 = vmatpush1.bf16.xpose.msra.mxu0 0
        %2095 = vmatprep.subr.bf16.mxu0 0
        %2096 = vmatpush1.bf16.xpose.msra.mxu0 0
        %2097 = vmatprep.mubr.bf16.mxu0 0
        %2098 = vmatmul.mubr.bf16.gmra.mrb[0].mxu0 %v2060
        %v2099 = vpop.f32.mrb[0].mxu0
        %v2100 = vadd.f32 0.0, %v2099
        %v2101 = vpop.f32.mrb[0].mxu0
        %v2102 = vpop.f32.mrb[0].mxu0
        %v2103 = vadd.f32 0.0, %v2102
        %v2104 = vpop.f32.mrb[0].mxu0
        %2105 = vdwg.mxu0
        %v2107 = vsel %vm1115, %v1087, 0
        %v2110 = vsel %vm1115, %v1822, 0
        %2112 = vmatprep.subr.bf16.mxu0 0
        %2113 = vmatpush1.bf16.xpose.msra.mxu0 %v2110
        %2114 = vmatprep.subr.bf16.mxu0 0
        %2115 = vmatpush1.bf16.xpose.msra.mxu0 0
        %2116 = vmatprep.subr.bf16.mxu0 0
        %2117 = vmatpush1.bf16.xpose.msra.mxu0 0
        %2118 = vmatprep.subr.bf16.mxu0 0
        %2119 = vmatpush1.bf16.xpose.msra.mxu0 0
        %2120 = vmatprep.subr.bf16.mxu0 0
        %2121 = vmatpush1.bf16.xpose.msra.mxu0 0
        %2122 = vmatprep.subr.bf16.mxu0 0
        %2123 = vmatpush1.bf16.xpose.msra.mxu0 0
        %2124 = vmatprep.subr.bf16.mxu0 0
        %2125 = vmatpush1.bf16.xpose.msra.mxu0 0
        %2126 = vmatprep.subr.bf16.mxu0 0
        %2127 = vmatpush1.bf16.xpose.msra.mxu0 0
        %2128 = vmatprep.subr.bf16.mxu0 0
        %2129 = vmatpush1.bf16.xpose.msra.mxu0 0
        %2130 = vmatprep.subr.bf16.mxu0 0
        %2131 = vmatpush1.bf16.xpose.msra.mxu0 0
        %2132 = vmatprep.subr.bf16.mxu0 0
        %2133 = vmatpush1.bf16.xpose.msra.mxu0 0
        %2134 = vmatprep.subr.bf16.mxu0 0
        %2135 = vmatpush1.bf16.xpose.msra.mxu0 0
        %2136 = vmatprep.subr.bf16.mxu0 0
        %2137 = vmatpush1.bf16.xpose.msra.mxu0 0
        %2138 = vmatprep.subr.bf16.mxu0 0
        %2139 = vmatpush1.bf16.xpose.msra.mxu0 0
        %2140 = vmatprep.subr.bf16.mxu0 0
        %2141 = vmatpush1.bf16.xpose.msra.mxu0 0
        %2142 = vmatprep.subr.bf16.mxu0 0
        %2143 = vmatpush1.bf16.xpose.msra.mxu0 0
        %2144 = vmatprep.mubr.bf16.mxu0 0
        %2145 = vmatmul.mubr.bf16.gmra.mrb[0].mxu0 %v2107
        %v2146 = vpop.f32.mrb[0].mxu0
        %v2147 = vadd.f32 0.0, %v2146
        %v2148 = vpop.f32.mrb[0].mxu0
        %v2149 = vpop.f32.mrb[0].mxu0
        %v2150 = vadd.f32 0.0, %v2149
        %v2151 = vpop.f32.mrb[0].mxu0
        %2152 = vdwg.mxu0
        %v2154 = vsel %vm1115, %v1088, 0
        %v2157 = vsel %vm1115, %v1823, 0
        %2159 = vmatprep.subr.bf16.mxu0 0
        %2160 = vmatpush1.bf16.xpose.msra.mxu0 %v2157
        %2161 = vmatprep.subr.bf16.mxu0 0
        %2162 = vmatpush1.bf16.xpose.msra.mxu0 0
        %2163 = vmatprep.subr.bf16.mxu0 0
        %2164 = vmatpush1.bf16.xpose.msra.mxu0 0
        %2165 = vmatprep.subr.bf16.mxu0 0
        %2166 = vmatpush1.bf16.xpose.msra.mxu0 0
        %2167 = vmatprep.subr.bf16.mxu0 0
        %2168 = vmatpush1.bf16.xpose.msra.mxu0 0
        %2169 = vmatprep.subr.bf16.mxu0 0
        %2170 = vmatpush1.bf16.xpose.msra.mxu0 0
        %2171 = vmatprep.subr.bf16.mxu0 0
        %2172 = vmatpush1.bf16.xpose.msra.mxu0 0
        %2173 = vmatprep.subr.bf16.mxu0 0
        %2174 = vmatpush1.bf16.xpose.msra.mxu0 0
        %2175 = vmatprep.subr.bf16.mxu0 0
        %2176 = vmatpush1.bf16.xpose.msra.mxu0 0
        %2177 = vmatprep.subr.bf16.mxu0 0
        %2178 = vmatpush1.bf16.xpose.msra.mxu0 0
        %2179 = vmatprep.subr.bf16.mxu0 0
        %2180 = vmatpush1.bf16.xpose.msra.mxu0 0
        %2181 = vmatprep.subr.bf16.mxu0 0
        %2182 = vmatpush1.bf16.xpose.msra.mxu0 0
        %2183 = vmatprep.subr.bf16.mxu0 0
        %2184 = vmatpush1.bf16.xpose.msra.mxu0 0
        %2185 = vmatprep.subr.bf16.mxu0 0
        %2186 = vmatpush1.bf16.xpose.msra.mxu0 0
        %2187 = vmatprep.subr.bf16.mxu0 0
        %2188 = vmatpush1.bf16.xpose.msra.mxu0 0
        %2189 = vmatprep.subr.bf16.mxu0 0
        %2190 = vmatpush1.bf16.xpose.msra.mxu0 0
        %2191 = vmatprep.mubr.bf16.mxu0 0
        %2192 = vmatmul.mubr.bf16.gmra.mrb[0].mxu0 %v2154
        %v2193 = vpop.f32.mrb[0].mxu0
        %v2194 = vadd.f32 0.0, %v2193
        %v2195 = vpop.f32.mrb[0].mxu0
        %v2196 = vpop.f32.mrb[0].mxu0
        %v2197 = vadd.f32 0.0, %v2196
        %v2198 = vpop.f32.mrb[0].mxu0
        %2199 = vdwg.mxu0
        %v2201 = vcombine.high %v1657, %v1657
        %v2203 = vunpack.c.l.s4 1966171168
        %v2204 = vunpack.c.0.s8 %v2203
        %v2205 = vlaneseq
        %v2206 = vshrl.u32 %v2205, 7
        %v2207 = vsub.s32 %v2204, %v2206
        %v2208 = vrot.slane %v1657, %v2207
        %v2210 = vunpack.c.l.s4 1966171168
        %v2211 = vunpack.c.0.s8 %v2210
        %v2212 = vlaneseq
        %v2213 = vshrl.u32 %v2212, 7
        %v2214 = vsub.s32 %v2211, %v2213
        %v2215 = vrot.slane %v2201, %v2214
        %v2216 = vcombine.high %v2208, %v2208
        %v2217 = vcombine.high %v2215, %v2215
        %v2219 = vunpack.c.l.s4 1966171168
        %v2220 = vunpack.c.0.s8 %v2219
        %v2221 = vlaneseq
        %v2222 = vshrl.u32 %v2221, 7
        %v2223 = vsub.s32 %v2220, %v2222
        %v2224 = vrot.slane %v2208, %v2223
        %v2226 = vunpack.c.l.s4 1966171168
        %v2227 = vunpack.c.0.s8 %v2226
        %v2228 = vlaneseq
        %v2229 = vshrl.u32 %v2228, 7
        %v2230 = vsub.s32 %v2227, %v2229
        %v2231 = vrot.slane %v2215, %v2230
        %v2233 = vunpack.c.l.s4 1966171168
        %v2234 = vunpack.c.0.s8 %v2233
        %v2235 = vlaneseq
        %v2236 = vshrl.u32 %v2235, 7
        %v2237 = vsub.s32 %v2234, %v2236
        %v2238 = vrot.slane %v2216, %v2237
        %v2240 = vunpack.c.l.s4 1966171168
        %v2241 = vunpack.c.0.s8 %v2240
        %v2242 = vlaneseq
        %v2243 = vshrl.u32 %v2242, 7
        %v2244 = vsub.s32 %v2241, %v2243
        %v2245 = vrot.slane %v2217, %v2244
        %v2246 = vcombine.high %v2224, %v2224
        %v2247 = vcombine.high %v2231, %v2231
        %v2248 = vcombine.high %v2238, %v2238
        %v2249 = vcombine.high %v2245, %v2245
        %v2250 = vld [vmem:[#allocation5] sm:$0xff]
        %v2251 = vld [vmem:[#allocation5 + $0x8] sm:$0xff]
        %v2252 = vld [vmem:[#allocation5 + $0x10] sm:$0xff]
        %v2253 = vld [vmem:[#allocation5 + $0x18] sm:$0xff]
        %v2254 = vld [vmem:[#allocation5 + $0x20] sm:$0xff]
        %v2255 = vld [vmem:[#allocation5 + $0x28] sm:$0xff]
        %v2256 = vld [vmem:[#allocation5 + $0x30] sm:$0xff]
        %v2257 = vld [vmem:[#allocation5 + $0x38] sm:$0xff]
        %v2258 = vld [vmem:[#allocation5 + $0x40] sm:$0xff]
        %v2259 = vld [vmem:[#allocation5 + $0x48] sm:$0xff]
        %v2260 = vld [vmem:[#allocation5 + $0x50] sm:$0xff]
        %v2261 = vld [vmem:[#allocation5 + $0x58] sm:$0xff]
        %v2262 = vld [vmem:[#allocation5 + $0x60] sm:$0xff]
        %v2263 = vld [vmem:[#allocation5 + $0x68] sm:$0xff]
        %v2264 = vld [vmem:[#allocation5 + $0x70] sm:$0xff]
        %v2265 = vld [vmem:[#allocation5 + $0x78] sm:$0xff]
        %v2266 = vlaneseq
        %v2267 = vshrl.u32 %v2266, 7
        %v2268 = vsub.s32 0, %v2267
        %v2269 = vrot.slane %v2224, %v2268
        %v2270 = vlaneseq
        %v2271 = vshrl.u32 %v2270, 7
        %v2272 = vsub.s32 0, %v2271
        %v2273 = vrot.slane %v2238, %v2272
        %v2274 = vlaneseq
        %v2275 = vshrl.u32 %v2274, 7
        %v2276 = vsub.s32 0, %v2275
        %v2277 = vrot.slane %v2246, %v2276
        %v2278 = vlaneseq
        %v2279 = vshrl.u32 %v2278, 7
        %v2280 = vsub.s32 0, %v2279
        %v2281 = vrot.slane %v2248, %v2280
        %v2282 = vlaneseq
        %v2283 = vshrl.u32 %v2282, 7
        %v2284 = vsub.s32 0, %v2283
        %v2285 = vrot.slane %v2231, %v2284
        %v2286 = vlaneseq
        %v2287 = vshrl.u32 %v2286, 7
        %v2288 = vsub.s32 0, %v2287
        %v2289 = vrot.slane %v2245, %v2288
        %v2290 = vlaneseq
        %v2291 = vshrl.u32 %v2290, 7
        %v2292 = vsub.s32 0, %v2291
        %v2293 = vrot.slane %v2247, %v2292
        %v2294 = vlaneseq
        %v2295 = vshrl.u32 %v2294, 7
        %v2296 = vsub.s32 0, %v2295
        %v2297 = vrot.slane %v2249, %v2296
        %v2306 = vmul.f32 %v2269, %v2250
        %v2307 = vmul.f32 %v2269, %v2251
        %v2308 = vmul.f32 %v2273, %v2252
        %v2309 = vmul.f32 %v2273, %v2253
        %v2310 = vmul.f32 %v2277, %v2254
        %v2311 = vmul.f32 %v2277, %v2255
        %v2312 = vmul.f32 %v2281, %v2256
        %v2313 = vmul.f32 %v2281, %v2257
        %v2314 = vmul.f32 %v2285, %v2258
        %v2315 = vmul.f32 %v2285, %v2259
        %v2316 = vmul.f32 %v2289, %v2260
        %v2317 = vmul.f32 %v2289, %v2261
        %v2318 = vmul.f32 %v2293, %v2262
        %v2319 = vmul.f32 %v2293, %v2263
        %v2320 = vmul.f32 %v2297, %v2264
        %v2321 = vmul.f32 %v2297, %v2265
        %v2322 = vadd.f32 %v2306, %v1865
        %v2323 = vadd.f32 %v2307, %v1868
        %v2324 = vadd.f32 %v2308, %v1912
        %v2325 = vadd.f32 %v2309, %v1915
        %v2326 = vadd.f32 %v2310, %v1959
        %v2327 = vadd.f32 %v2311, %v1962
        %v2328 = vadd.f32 %v2312, %v2006
        %v2329 = vadd.f32 %v2313, %v2009
        %v2330 = vadd.f32 %v2314, %v2053
        %v2331 = vadd.f32 %v2315, %v2056
        %v2332 = vadd.f32 %v2316, %v2100
        %v2333 = vadd.f32 %v2317, %v2103
        %v2334 = vadd.f32 %v2318, %v2147
        %v2335 = vadd.f32 %v2319, %v2150
        %v2336 = vadd.f32 %v2320, %v2194
        %v2337 = vadd.f32 %v2321, %v2197
        %2338 = vst.msk [vmem:[#allocation5] sm:$0xff] %vm1813, %v2322
        %2339 = vst.msk [vmem:[#allocation5 + $0x8] sm:$0xff] %vm1813, %v2323
        %2340 = vst.msk [vmem:[#allocation5 + $0x10] sm:$0xff] %vm1813, %v2324
        %2341 = vst.msk [vmem:[#allocation5 + $0x18] sm:$0xff] %vm1813, %v2325
        %2342 = vst.msk [vmem:[#allocation5 + $0x20] sm:$0xff] %vm1813, %v2326
        %2343 = vst.msk [vmem:[#allocation5 + $0x28] sm:$0xff] %vm1813, %v2327
        %2344 = vst.msk [vmem:[#allocation5 + $0x30] sm:$0xff] %vm1813, %v2328
        %2345 = vst.msk [vmem:[#allocation5 + $0x38] sm:$0xff] %vm1813, %v2329
        %2346 = vst.msk [vmem:[#allocation5 + $0x40] sm:$0xff] %vm1813, %v2330
        %2347 = vst.msk [vmem:[#allocation5 + $0x48] sm:$0xff] %vm1813, %v2331
        %2348 = vst.msk [vmem:[#allocation5 + $0x50] sm:$0xff] %vm1813, %v2332
        %2349 = vst.msk [vmem:[#allocation5 + $0x58] sm:$0xff] %vm1813, %v2333
        %2350 = vst.msk [vmem:[#allocation5 + $0x60] sm:$0xff] %vm1813, %v2334
        %2351 = vst.msk [vmem:[#allocation5 + $0x68] sm:$0xff] %vm1813, %v2335
        %2352 = vst.msk [vmem:[#allocation5 + $0x70] sm:$0xff] %vm1813, %v2336
        %2353 = vst.msk [vmem:[#allocation5 + $0x78] sm:$0xff] %vm1813, %v2337
        // Predicated region
        $region89: #{tpu_custom_call.1} parent=55 // pred_check
          %p2354 = pneg %p534
        $region90: #{tpu_custom_call.1} parent=55 // pred_check_branch
          %2356 = sbr.rel (%p2354) target = $region92
        $region91: #{tpu_custom_call.1} parent=55 // pred_region
          %v2357 = vld [vmem:[#allocation4] sm:$0xff]
          %v2358 = vrcp.pop %v2357
          %v2359 = vld [vmem:[#allocation5] sm:$0xff]
          %v2360 = vld [vmem:[#allocation5 + $0x8] sm:$0xff]
          %v2361 = vld [vmem:[#allocation5 + $0x10] sm:$0xff]
          %v2362 = vld [vmem:[#allocation5 + $0x18] sm:$0xff]
          %v2363 = vld [vmem:[#allocation5 + $0x20] sm:$0xff]
          %v2364 = vld [vmem:[#allocation5 + $0x28] sm:$0xff]
          %v2365 = vld [vmem:[#allocation5 + $0x30] sm:$0xff]
          %v2366 = vld [vmem:[#allocation5 + $0x38] sm:$0xff]
          %v2367 = vld [vmem:[#allocation5 + $0x40] sm:$0xff]
          %v2368 = vld [vmem:[#allocation5 + $0x48] sm:$0xff]
          %v2369 = vld [vmem:[#allocation5 + $0x50] sm:$0xff]
          %v2370 = vld [vmem:[#allocation5 + $0x58] sm:$0xff]
          %v2371 = vld [vmem:[#allocation5 + $0x60] sm:$0xff]
          %v2372 = vld [vmem:[#allocation5 + $0x68] sm:$0xff]
          %v2373 = vld [vmem:[#allocation5 + $0x70] sm:$0xff]
          %v2374 = vld [vmem:[#allocation5 + $0x78] sm:$0xff]
          %v2376 = vcombine.high %v2358, %v2358
          %v2378 = vunpack.c.l.s4 1966171168
          %v2379 = vunpack.c.0.s8 %v2378
          %v2380 = vlaneseq
          %v2381 = vshrl.u32 %v2380, 7
          %v2382 = vsub.s32 %v2379, %v2381
          %v2383 = vrot.slane %v2358, %v2382
          %v2385 = vunpack.c.l.s4 1966171168
          %v2386 = vunpack.c.0.s8 %v2385
          %v2387 = vlaneseq
          %v2388 = vshrl.u32 %v2387, 7
          %v2389 = vsub.s32 %v2386, %v2388
          %v2390 = vrot.slane %v2376, %v2389
          %v2391 = vcombine.high %v2383, %v2383
          %v2392 = vcombine.high %v2390, %v2390
          %v2394 = vunpack.c.l.s4 1966171168
          %v2395 = vunpack.c.0.s8 %v2394
          %v2396 = vlaneseq
          %v2397 = vshrl.u32 %v2396, 7
          %v2398 = vsub.s32 %v2395, %v2397
          %v2399 = vrot.slane %v2383, %v2398
          %v2401 = vunpack.c.l.s4 1966171168
          %v2402 = vunpack.c.0.s8 %v2401
          %v2403 = vlaneseq
          %v2404 = vshrl.u32 %v2403, 7
          %v2405 = vsub.s32 %v2402, %v2404
          %v2406 = vrot.slane %v2390, %v2405
          %v2408 = vunpack.c.l.s4 1966171168
          %v2409 = vunpack.c.0.s8 %v2408
          %v2410 = vlaneseq
          %v2411 = vshrl.u32 %v2410, 7
          %v2412 = vsub.s32 %v2409, %v2411
          %v2413 = vrot.slane %v2391, %v2412
          %v2415 = vunpack.c.l.s4 1966171168
          %v2416 = vunpack.c.0.s8 %v2415
          %v2417 = vlaneseq
          %v2418 = vshrl.u32 %v2417, 7
          %v2419 = vsub.s32 %v2416, %v2418
          %v2420 = vrot.slane %v2392, %v2419
          %v2421 = vcombine.high %v2399, %v2399
          %v2422 = vcombine.high %v2406, %v2406
          %v2423 = vcombine.high %v2413, %v2413
          %v2424 = vcombine.high %v2420, %v2420
          %v2425 = vlaneseq
          %v2426 = vshrl.u32 %v2425, 7
          %v2427 = vsub.s32 0, %v2426
          %v2428 = vrot.slane %v2399, %v2427
          %v2429 = vlaneseq
          %v2430 = vshrl.u32 %v2429, 7
          %v2431 = vsub.s32 0, %v2430
          %v2432 = vrot.slane %v2413, %v2431
          %v2433 = vlaneseq
          %v2434 = vshrl.u32 %v2433, 7
          %v2435 = vsub.s32 0, %v2434
          %v2436 = vrot.slane %v2421, %v2435
          %v2437 = vlaneseq
          %v2438 = vshrl.u32 %v2437, 7
          %v2439 = vsub.s32 0, %v2438
          %v2440 = vrot.slane %v2423, %v2439
          %v2441 = vlaneseq
          %v2442 = vshrl.u32 %v2441, 7
          %v2443 = vsub.s32 0, %v2442
          %v2444 = vrot.slane %v2406, %v2443
          %v2445 = vlaneseq
          %v2446 = vshrl.u32 %v2445, 7
          %v2447 = vsub.s32 0, %v2446
          %v2448 = vrot.slane %v2420, %v2447
          %v2449 = vlaneseq
          %v2450 = vshrl.u32 %v2449, 7
          %v2451 = vsub.s32 0, %v2450
          %v2452 = vrot.slane %v2422, %v2451
          %v2453 = vlaneseq
          %v2454 = vshrl.u32 %v2453, 7
          %v2455 = vsub.s32 0, %v2454
          %v2456 = vrot.slane %v2424, %v2455
          %v2465 = vmul.f32 %v2359, %v2428
          %v2466 = vmul.f32 %v2360, %v2428
          %v2467 = vmul.f32 %v2361, %v2432
          %v2468 = vmul.f32 %v2362, %v2432
          %v2469 = vmul.f32 %v2363, %v2436
          %v2470 = vmul.f32 %v2364, %v2436
          %v2471 = vmul.f32 %v2365, %v2440
          %v2472 = vmul.f32 %v2366, %v2440
          %v2473 = vmul.f32 %v2367, %v2444
          %v2474 = vmul.f32 %v2368, %v2444
          %v2475 = vmul.f32 %v2369, %v2448
          %v2476 = vmul.f32 %v2370, %v2448
          %v2477 = vmul.f32 %v2371, %v2452
          %v2478 = vmul.f32 %v2372, %v2452
          %v2479 = vmul.f32 %v2373, %v2456
          %v2480 = vmul.f32 %v2374, %v2456
          %v2481 = vpack.c.bf16 %v2466, %v2465
          %v2482 = vpack.c.bf16 %v2468, %v2467
          %v2483 = vpack.c.bf16 %v2470, %v2469
          %v2484 = vpack.c.bf16 %v2472, %v2471
          %v2485 = vpack.c.bf16 %v2474, %v2473
          %v2486 = vpack.c.bf16 %v2476, %v2475
          %v2487 = vpack.c.bf16 %v2478, %v2477
          %v2488 = vpack.c.bf16 %v2480, %v2479
          %v2489 = vld [vmem:[#allocation17] sm:$0xf]
          %v2490 = vld [vmem:[#allocation17 + $0x4] sm:$0xf]
          %v2491 = vld [vmem:[#allocation17 + $0x8] sm:$0xf]
          %v2492 = vld [vmem:[#allocation17 + $0xc] sm:$0xf]
          %v2493 = vld [vmem:[#allocation17 + $0x10] sm:$0xf]
          %v2494 = vld [vmem:[#allocation17 + $0x14] sm:$0xf]
          %v2495 = vld [vmem:[#allocation17 + $0x18] sm:$0xf]
          %v2496 = vld [vmem:[#allocation17 + $0x1c] sm:$0xf]
          %v2497 = vld [vmem:[#allocation17 + $0x20] sm:$0xf]
          %v2498 = vld [vmem:[#allocation17 + $0x24] sm:$0xf]
          %v2499 = vld [vmem:[#allocation17 + $0x28] sm:$0xf]
          %v2500 = vld [vmem:[#allocation17 + $0x2c] sm:$0xf]
          %v2501 = vld [vmem:[#allocation17 + $0x30] sm:$0xf]
          %v2502 = vld [vmem:[#allocation17 + $0x34] sm:$0xf]
          %v2503 = vld [vmem:[#allocation17 + $0x38] sm:$0xf]
          %v2504 = vld [vmem:[#allocation17 + $0x3c] sm:$0xf]
          %v2505 = vld [vmem:[%s8] sm:$0x1]
          %v2507 = vlaneseq
          %v2508 = vshrl.u32 %v2507, 7
          %v2509 = vsub.s32 0, %v2508
          %v2510 = vrot.slane %v2505, %v2509
          %2512 = vxpose.xlu0.c.b16.start [1/8] %v2481, 128
          %2513 = vxpose.xlu0.c.b16.cont [2/8] %v2482, 128
          %2514 = vxpose.xlu0.c.b16.cont [3/8] %v2483, 128
          %2515 = vxpose.xlu0.c.b16.cont [4/8] %v2484, 128
          %2516 = vxpose.xlu0.c.b16.cont [5/8] %v2485, 128
          %2517 = vxpose.xlu0.c.b16.cont [6/8] %v2486, 128
          %2518 = vxpose.xlu0.c.b16.cont [7/8] %v2487, 128
          %2519 = vxpose.xlu0.c.b16.end [8/8] %v2488, 128
          %v2520 = vpop.trf.xlu0
          %v2521 = vpop.trf.xlu0
          %v2522 = vpop.trf.xlu0
          %v2523 = vpop.trf.xlu0
          %v2524 = vpop.trf.xlu0
          %v2525 = vpop.trf.xlu0
          %v2526 = vpop.trf.xlu0
          %v2527 = vpop.trf.xlu0
          %v2544 = vunpack.c.l.b16 %v2489
          %v2545 = vunpack.c.l.b16 %v2490
          %v2546 = vunpack.c.l.b16 %v2491
          %v2547 = vunpack.c.l.b16 %v2492
          %v2548 = vunpack.c.l.b16 %v2493
          %v2549 = vunpack.c.l.b16 %v2494
          %v2550 = vunpack.c.l.b16 %v2495
          %v2551 = vunpack.c.l.b16 %v2496
          %v2552 = vunpack.c.l.b16 %v2497
          %v2553 = vunpack.c.l.b16 %v2498
          %v2554 = vunpack.c.l.b16 %v2499
          %v2555 = vunpack.c.l.b16 %v2500
          %v2556 = vunpack.c.l.b16 %v2501
          %v2557 = vunpack.c.l.b16 %v2502
          %v2558 = vunpack.c.l.b16 %v2503
          %v2559 = vunpack.c.l.b16 %v2504
          %v2560 = vpack.c.b16 %v2545, %v2544
          %v2561 = vpack.c.b16 %v2547, %v2546
          %v2562 = vpack.c.b16 %v2549, %v2548
          %v2563 = vpack.c.b16 %v2551, %v2550
          %v2564 = vpack.c.b16 %v2553, %v2552
          %v2565 = vpack.c.b16 %v2555, %v2554
          %v2566 = vpack.c.b16 %v2557, %v2556
          %v2567 = vpack.c.b16 %v2559, %v2558
          %2576 = vmatprep.subr.bf16.mxu0 0
          %2577 = vmatpush1.bf16.msra.mxu0 %v2560
          %2578 = vmatprep.subr.bf16.mxu0 0
          %2579 = vmatpush1.bf16.msra.mxu0 %v2561
          %2580 = vmatprep.subr.bf16.mxu0 0
          %2581 = vmatpush1.bf16.msra.mxu0 %v2562
          %2582 = vmatprep.subr.bf16.mxu0 0
          %2583 = vmatpush1.bf16.msra.mxu0 %v2563
          %2584 = vmatprep.subr.bf16.mxu0 0
          %2585 = vmatpush1.bf16.msra.mxu0 %v2564
          %2586 = vmatprep.subr.bf16.mxu0 0
          %2587 = vmatpush1.bf16.msra.mxu0 %v2565
          %2588 = vmatprep.subr.bf16.mxu0 0
          %2589 = vmatpush1.bf16.msra.mxu0 %v2566
          %2590 = vmatprep.subr.bf16.mxu0 0
          %2591 = vmatpush1.bf16.msra.mxu0 %v2567
          %2592 = vmatprep.subr.bf16.mxu0 0
          %2593 = vmatpush1.bf16.msra.mxu0 0
          %2594 = vmatprep.subr.bf16.mxu0 0
          %2595 = vmatpush1.bf16.msra.mxu0 0
          %2596 = vmatprep.subr.bf16.mxu0 0
          %2597 = vmatpush1.bf16.msra.mxu0 0
          %2598 = vmatprep.subr.bf16.mxu0 0
          %2599 = vmatpush1.bf16.msra.mxu0 0
          %2600 = vmatprep.subr.bf16.mxu0 0
          %2601 = vmatpush1.bf16.msra.mxu0 0
          %2602 = vmatprep.subr.bf16.mxu0 0
          %2603 = vmatpush1.bf16.msra.mxu0 0
          %2604 = vmatprep.subr.bf16.mxu0 0
          %2605 = vmatpush1.bf16.msra.mxu0 0
          %2606 = vmatprep.subr.bf16.mxu0 0
          %2607 = vmatpush1.bf16.msra.mxu0 0
          %2608 = vmatprep.mubr.bf16.mxu0 0
          %2609 = vmatmul.mubr.bf16.gmra.mrb[0].mxu0 %v2520
          %v2610 = vpop.f32.mrb[0].mxu0
          %v2611 = vadd.f32 %v2510, %v2610
          %v2612 = vpop.f32.mrb[0].mxu0
          %v2613 = vpop.f32.mrb[0].mxu0
          %v2614 = vpop.f32.mrb[0].mxu0
          %2615 = vdwg.mxu0
          %2616 = vst [vmem:[%s523] sm:$0xff] %v2611
        $region92: #{tpu_custom_call.1} parent=55 // pred_fallthru
          _
        %s2617 = sand.u32 %s266, 1
        %s2618 = scalar_lea.sflag [#allocation8], %s2617
        %s2619 = sand.u32 %s266, 1
        %s2620 = smul.addr %s2619, 8
        %s2621 = scalar_lea.vmem [#allocation18], %s2620
        // Predicated region
        $region93: #{tpu_custom_call.1} parent=55 // pred_check
          %p2622 = pneg %p276
        $region94: #{tpu_custom_call.1} parent=55 // pred_check_branch
          %2624 = sbr.rel (%p2622) target = $region96
        $region95: #{tpu_custom_call.1} parent=55 // pred_region
          %s2626 = ssub.s32 128, 128
          %2627 = vsyncadd %s2618, %s2626
          %s2628 = smul.addr %s35, 128
          %s2629 = scalar_lea.hbm %s9, %s2628
          %s2631 = sshll.u32 %s2621, 4
          %s2632 = int_to_ptr.vmem [resolvable:$true] %s2631
          %2634 = dma.vmem_to_hbm [thread:$0]  %s2632, 128, %s2629, %s2618
        $region96: #{tpu_custom_call.1} parent=55 // pred_fallthru
          _
      $region56: #{tpu_custom_call.1} parent=5 // pred_fallthru
        _
      %p2635 = scmp.le.s32.totalorder 2, %s26
      // Predicated region
      $region97: #{tpu_custom_call.1} parent=5 // pred_check
        %p2636 = pneg %p2635
      $region98: #{tpu_custom_call.1} parent=5 // pred_check_branch
        %2638 = sbr.rel (%p2636) target = $region100
      $region99: #{tpu_custom_call.1} parent=5 // pred_region
        %s2639 = ssub.s32 %s26, 2
        // Predicated region
        $region101: #{tpu_custom_call.1} parent=99 // pred_check
          %p2640 = pneg %p282
        $region102: #{tpu_custom_call.1} parent=99 // pred_check_branch
          %2642 = sbr.rel (%p2640) target = $region104
        $region103: #{tpu_custom_call.1} parent=99 // pred_region
          %s2643 = sand.u32 %s267, 1
          %s2644 = scalar_lea.sflag [#allocation8], %s2643
          %s2645 = sand.u32 %s267, 1
          %s2646 = smul.addr %s2645, 8
          %s2647 = scalar_lea.vmem [#allocation18], %s2646
          %2648 = dma.done %s2644, 128
        $region104: #{tpu_custom_call.1} parent=99 // pred_fallthru
          _
      $region100: #{tpu_custom_call.1} parent=5 // pred_fallthru
        _
    $region6: #{tpu_custom_call.1} parent=1 // loop_footer
      %s30 = sadd.s32 1, %s26
    $region7: #{tpu_custom_call.1} parent=1 // loop_footer_branch
      %25 = sbr.rel target = $region3
    $region8: #{tpu_custom_call.1} parent=1 // loop_exit
      _
    %2649 = vsyncpa [#allocation7], 1
    %s2650 = scalar_lea.sflag [#allocation7], 1
    %2651 = vsyncpa %s2650, 1
    %2652 = vsyncpa [#allocation10], 1
    %s2653 = scalar_lea.sflag [#allocation10], 1
    %2654 = vsyncpa %s2653, 1
    %2655 = vsyncpa [#allocation13], 1
    %2656 = vsyncpa [#allocation16], 1
    %2657 = vsyncpa [#allocation8], 1
    %s2658 = scalar_lea.sflag [#allocation8], 1
    %2659 = vsyncpa %s2658, 1

</llo_original>
